<compile_context>
chip_gen: v6e
topology: v6e:2x2x1
jax: 0.10.0
libtpu: 0.0.40
codegen_flags: <defaults>
</compile_context>

<pallas_src>
import jax
import jax.numpy as jnp
from jax import lax
from jax.experimental import pallas as pl
from jax.experimental.pallas import tpu as pltpu


def _round_up(n: int, m: int) -> int:
    return ((n + m - 1) // m) * m


def _mlp_kernel(x_ref, w1_ref, b1_ref, w2_ref, b2_ref, w3_ref, b3_ref, o_ref):
    # Layer 1: bf16 x bf16 -> f32 accumulate on the MXU (dominant HBM stream is x).
    h = jnp.dot(x_ref[...], w1_ref[...], preferred_element_type=jnp.float32)
    h = jnp.tanh(h + b1_ref[...])

    # Layer 2: tiny (tile_m,16)@(16,8) matmul kept at full f32 precision.
    h = jnp.dot(h, w2_ref[...], preferred_element_type=jnp.float32,
                precision=lax.Precision.HIGHEST)
    h = jnp.tanh(h + b2_ref[...])

    # Layer 3 in transposed form: contract the feature axis of w3 [1,h2] against the feature
    # axis of h [tile_m,h2] -> [1, tile_m] with the batch on the lane axis.  This keeps the
    # output lane-dense (full-lane stores) instead of a masked [tile_m, 1] column store.
    y = lax.dot_general(
        w3_ref[...], h,
        dimension_numbers=(((1,), (1,)), ((), ())),
        preferred_element_type=jnp.float32,
        precision=lax.Precision.HIGHEST,
    ) + b3_ref[0]                                  # (1, tile_m)

    o_ref[...] = y[None].astype(o_ref.dtype)       # (1, 1, tile_m)


def pure_mlp_forward(x, params, *, tile_m=512):
    """x: [B, in_dim] -> [B, 1] float32."""
    w1, b1, w2, b2, w3, b3 = params
    B, in_dim = x.shape
    d1 = w1.shape[1]
    d2 = w2.shape[1]

    # bf16 on the dominant HBM stream (no-op if the caller already passes bf16).
    x = x.astype(jnp.bfloat16)

    # Tile choice: multiple of 256 (MXU / lane alignment), shrink toward the batch size so a
    # tiny batch runs as a single grid step, and split into >=2 tiles for batches >= 512 so
    # v7x's two TensorCores both get work under dimension_semantics=("parallel",).
    tile_m = max(256, (int(tile_m) // 256) * 256)
    tile_m = min(tile_m, _round_up(B, 256))
    if B >= 512:
        tile_m = min(tile_m, _round_up(_round_up(B, 256) // 2, 256))

    B_pad = _round_up(B, tile_m)
    num_tiles = B_pad // tile_m
    if B_pad != B:
        x = jnp.pad(x, ((0, B_pad - B), (0, 0)))

    def resident(shape):
        # Full-tensor block with a constant index_map -> stays resident in VMEM across steps.
        return pl.BlockSpec(shape, lambda i, _n=len(shape): (0,) * _n)

    out = pl.pallas_call(
        _mlp_kernel,
        out_shape=jax.ShapeDtypeStruct((num_tiles, 1, tile_m), jnp.float32),
        grid_spec=pltpu.PrefetchScalarGridSpec(
            num_scalar_prefetch=0,
            grid=(num_tiles,),
            in_specs=[
                pl.BlockSpec((tile_m, in_dim), lambda i: (i, 0)),   # x tile (bf16)
                resident((in_dim, d1)),                             # w1 (bf16, [fan_in, fan_out])
                resident((1, d1)),                                  # b1
                resident((d1, d2)),                                 # w2
                resident((1, d2)),                                  # b2
                resident((1, d2)),                                  # w3 row ([1, fan_in])
                pl.BlockSpec(memory_space=pltpu.MemorySpace.SMEM),  # b3 scalar in SMEM
            ],
            out_specs=pl.BlockSpec((1, 1, tile_m), lambda i: (i, 0, 0)),
        ),
        compiler_params=pltpu.CompilerParams(
            dimension_semantics=("parallel",),
        ),
    )(x, w1, b1, w2, b2, w3, b3)

    return out.reshape(B_pad, 1)[:B]


def init_pure_mlp_params(key, in_dim):
    """nn.Linear-style init U(-1/sqrt(fan_in), 1/sqrt(fan_in)).

    Kernel layout: w1/w2 pre-transposed to [fan_in, fan_out]; w1 stored in bf16 (it feeds the
    bf16 MXU pass against bf16 x); w3 kept as PyTorch's natural [1, fan_in] row; b3 is a
    length-1 vector consumed via SMEM.
    """
    d1, d2 = in_dim // 2, in_dim // 4
    ks = jax.random.split(key, 6)

    def uni(k, shape, fan_in):
        bound = 1.0 / float(fan_in) ** 0.5
        return jax.random.uniform(k, shape, jnp.float32, -bound, bound)

    w1 = uni(ks[0], (in_dim, d1), in_dim).astype(jnp.bfloat16)
    b1 = uni(ks[1], (1, d1), in_dim)
    w2 = uni(ks[2], (d1, d2), d1)
    b2 = uni(ks[3], (1, d2), d1)
    w3 = uni(ks[4], (1, d2), d2)
    b3 = uni(ks[5], (1,), d2)
    return (w1, b1, w2, b2, w3, b3)


def pure_mlp_reference(x, params):
    """Pure-JAX reference on exactly the values the kernel sees (bf16-rounded x / w1)."""
    w1, b1, w2, b2, w3, b3 = params
    xf = x.astype(jnp.bfloat16).astype(jnp.float32)
    h = jnp.tanh(xf @ w1.astype(jnp.float32) + b1)
    h = jnp.tanh(h @ w2 + b2)
    return h @ w3.T + b3


if __name__ == "__main__":
    key = jax.random.PRNGKey(0)
    k_x, k_p = jax.random.split(key)

    B, in_dim = 600, 32   # in_dim divisible by 4; batch pads to 2 parallel tiles of 512 rows
    x = jax.random.normal(k_x, (B, in_dim), dtype=jnp.float32).astype(jnp.bfloat16)
    params = init_pure_mlp_params(k_p, in_dim)

    out = pure_mlp_forward(x, params)
    out = jax.block_until_ready(out)

    ref = pure_mlp_reference(x, params)
    assert out.shape == (B, 1), out.shape
    err = float(jnp.max(jnp.abs(out - ref)))
    assert jnp.allclose(out, ref, atol=5e-4, rtol=5e-4), f"mismatch vs reference, max abs err={err}"

    print("KERNEL_OK")
</pallas_src>

<mosaic_0001>
module attributes {stable_mosaic.version = 11 : i64} {
  func.func @_mlp_kernel(%arg0: i32, %arg1: memref<512x32xbf16, #tpu.memory_space<vmem>>, %arg2: memref<32x16xbf16, #tpu.memory_space<vmem>>, %arg3: memref<1x16xf32, #tpu.memory_space<vmem>>, %arg4: memref<16x8xf32, #tpu.memory_space<vmem>>, %arg5: memref<1x8xf32, #tpu.memory_space<vmem>>, %arg6: memref<1x8xf32, #tpu.memory_space<vmem>>, %arg7: memref<1xf32, #tpu.memory_space<smem>>, %arg8: memref<1x1x512xf32, #tpu.memory_space<vmem>>) attributes {dimension_semantics = [#tpu.dimension_semantics<parallel>], iteration_bounds = array<i64: 2>, scalar_prefetch = 0 : i64, scratch_operands = 0 : i64, tpu.core_type = #tpu.core_type<tc>, window_params = [{transform_indices = @transform_0, window_bounds = array<i64: 512, 32>}, {pipeline_mode = #tpu.pipeline_mode<synchronous>, transform_indices = @transform_1, window_bounds = array<i64: 32, 16>}, {pipeline_mode = #tpu.pipeline_mode<synchronous>, transform_indices = @transform_2, window_bounds = array<i64: 1, 16>}, {pipeline_mode = #tpu.pipeline_mode<synchronous>, transform_indices = @transform_3, window_bounds = array<i64: 16, 8>}, {pipeline_mode = #tpu.pipeline_mode<synchronous>, transform_indices = @transform_4, window_bounds = array<i64: 1, 8>}, {pipeline_mode = #tpu.pipeline_mode<synchronous>, transform_indices = @transform_5, window_bounds = array<i64: 1, 8>}, {transform_indices = @transform_6, window_bounds = array<i64: 1>}, {transform_indices = @transform_7, window_bounds = array<i64: 1, 1, 512>}]} {
    %c0 = arith.constant 0 : index
    %c0_0 = arith.constant 0 : index
    %0 = vector.load %arg1[%c0, %c0_0] : memref<512x32xbf16, #tpu.memory_space<vmem>>, vector<512x32xbf16>
    %c0_1 = arith.constant 0 : index
    %c0_2 = arith.constant 0 : index
    %1 = vector.load %arg2[%c0_1, %c0_2] : memref<32x16xbf16, #tpu.memory_space<vmem>>, vector<32x16xbf16>
    %cst = arith.constant dense<0.000000e+00> : vector<512x16xf32>
    %2 = tpu.matmul %0, %1, %cst {dimension_numbers = #tpu.dot_dimension_numbers<[1], [0], [0], [1], [0, 0, 1, 1], [], []>} : vector<512x32xbf16>, vector<32x16xbf16>, vector<512x16xf32> -> vector<512x16xf32>
    %c0_3 = arith.constant 0 : index
    %c0_4 = arith.constant 0 : index
    %3 = vector.load %arg3[%c0_3, %c0_4] : memref<1x16xf32, #tpu.memory_space<vmem>>, vector<1x16xf32>
    %4 = vector.broadcast %3 : vector<1x16xf32> to vector<512x16xf32>
    %5 = arith.addf %2, %4 : vector<512x16xf32>
    %6 = math.tanh %5 : vector<512x16xf32>
    %c0_5 = arith.constant 0 : index
    %c0_6 = arith.constant 0 : index
    %7 = vector.load %arg4[%c0_5, %c0_6] : memref<16x8xf32, #tpu.memory_space<vmem>>, vector<16x8xf32>
    %cst_7 = arith.constant dense<0.000000e+00> : vector<512x8xf32>
    %8 = tpu.matmul %6, %7, %cst_7 {dimension_numbers = #tpu.dot_dimension_numbers<[1], [0], [0], [1], [0, 0, 1, 1], [], []>, precision = #tpu.contract_precision<fp32>} : vector<512x16xf32>, vector<16x8xf32>, vector<512x8xf32> -> vector<512x8xf32>
    %c0_8 = arith.constant 0 : index
    %c0_9 = arith.constant 0 : index
    %9 = vector.load %arg5[%c0_8, %c0_9] : memref<1x8xf32, #tpu.memory_space<vmem>>, vector<1x8xf32>
    %10 = vector.broadcast %9 : vector<1x8xf32> to vector<512x8xf32>
    %11 = arith.addf %8, %10 : vector<512x8xf32>
    %12 = math.tanh %11 : vector<512x8xf32>
    %c0_10 = arith.constant 0 : index
    %c0_11 = arith.constant 0 : index
    %13 = vector.load %arg6[%c0_10, %c0_11] : memref<1x8xf32, #tpu.memory_space<vmem>>, vector<1x8xf32>
    %cst_12 = arith.constant dense<0.000000e+00> : vector<1x512xf32>
    %14 = tpu.matmul %13, %12, %cst_12 {dimension_numbers = #tpu.dot_dimension_numbers<[1], [1], [0], [0], [0, 0, 1, 0], [], []>, precision = #tpu.contract_precision<fp32>} : vector<1x8xf32>, vector<512x8xf32>, vector<1x512xf32> -> vector<1x512xf32>
    %c0_13 = arith.constant 0 : index
    %15 = memref.load %arg7[%c0_13] : memref<1xf32, #tpu.memory_space<smem>>
    %16 = vector.broadcast %15 : f32 to vector<1x512xf32>
    %17 = arith.addf %14, %16 : vector<1x512xf32>
    %18 = vector.shape_cast %17 : vector<1x512xf32> to vector<1x1x512xf32>
    %c0_14 = arith.constant 0 : index
    %c0_15 = arith.constant 0 : index
    %c0_16 = arith.constant 0 : index
    %19 = vector.load %arg8[%c0_14, %c0_15, %c0_16] : memref<1x1x512xf32, #tpu.memory_space<vmem>>, vector<1x1x512xf32>
    tpu.vector_store %arg8[%c0_14, %c0_15, %c0_16], %18 {strides = array<i32>} : memref<1x1x512xf32, #tpu.memory_space<vmem>>, vector<1x1x512xf32>,
    return
  }
  func.func @transform_0(%arg0: i32) -> (i32, i32) {
    %c0_i32 = arith.constant 0 : i32
    %c0_i32_0 = arith.constant 0 : i32
    return %arg0, %c0_i32 : i32, i32
  }
  func.func @transform_1(%arg0: i32) -> (i32, i32) {
    %c0_i32 = arith.constant 0 : i32
    %c0_i32_0 = arith.constant 0 : i32
    %c0_i32_1 = arith.constant 0 : i32
    return %c0_i32, %c0_i32_0 : i32, i32
  }
  func.func @transform_2(%arg0: i32) -> (i32, i32) {
    %c0_i32 = arith.constant 0 : i32
    %c0_i32_0 = arith.constant 0 : i32
    %c0_i32_1 = arith.constant 0 : i32
    return %c0_i32, %c0_i32_0 : i32, i32
  }
  func.func @transform_3(%arg0: i32) -> (i32, i32) {
    %c0_i32 = arith.constant 0 : i32
    %c0_i32_0 = arith.constant 0 : i32
    %c0_i32_1 = arith.constant 0 : i32
    return %c0_i32, %c0_i32_0 : i32, i32
  }
  func.func @transform_4(%arg0: i32) -> (i32, i32) {
    %c0_i32 = arith.constant 0 : i32
    %c0_i32_0 = arith.constant 0 : i32
    %c0_i32_1 = arith.constant 0 : i32
    return %c0_i32, %c0_i32_0 : i32, i32
  }
  func.func @transform_5(%arg0: i32) -> (i32, i32) {
    %c0_i32 = arith.constant 0 : i32
    %c0_i32_0 = arith.constant 0 : i32
    %c0_i32_1 = arith.constant 0 : i32
    return %c0_i32, %c0_i32_0 : i32, i32
  }
  func.func @transform_6(%arg0: i32) -> i32 {
    %c0_i32 = arith.constant 0 : i32
    %c0_i32_0 = arith.constant 0 : i32
    return %c0_i32 : i32
  }
  func.func @transform_7(%arg0: i32) -> (i32, i32, i32) {
    %c0_i32 = arith.constant 0 : i32
    %c0_i32_0 = arith.constant 0 : i32
    %c0_i32_1 = arith.constant 0 : i32
    return %arg0, %c0_i32, %c0_i32_0 : i32, i32, i32
  }
}

</mosaic_0001>

<llo_original>
// kernel: tpu_custom_call.1
$region0: #{tpu_custom_call.1}
  #allocation0 [shape = 'u32[]', space=smem, size = 0x4, offset = 0x4, fixed_abs, tag = 'smem constant byte address 0x4 - core index']
  #allocation1 [shape = 'u32[144,128]{1,0:T(1,128)}', space=vmem, size = 0x12000, scoped, tag = 'internal scratch']
  #allocation2 [shape = 'f32[1]{0:T(128)S(6)}', space=smem, size = 0x200, scoped, tag = 'scoped memory for tpu_custom_call.1']
  %s0 = inlined_call_operand.vmem [shape: bf16[1024,32], index: 0, kind: input, shape index: {}]
  %s1 = inlined_call_operand.vmem [shape: bf16[32,16], index: 1, kind: input, shape index: {}]
  %s2 = inlined_call_operand.vmem [shape: f32[1,16], index: 2, kind: input, shape index: {}]
  %s3 = inlined_call_operand.vmem [shape: f32[16,8], index: 3, kind: input, shape index: {}]
  %s4 = inlined_call_operand.vmem [shape: f32[1,8], index: 4, kind: input, shape index: {}]
  %s5 = inlined_call_operand.vmem [shape: f32[1,8], index: 5, kind: input, shape index: {}]
  %s6 = inlined_call_operand.<no memory space> [shape: f32[1], index: 6, kind: input, shape index: {}]
  %s7 = inlined_call_operand.hbm [shape: f32[2,1,512], index: 7, kind: output, shape index: {}]
  %s8 = sld [smem:[#allocation0]]
  $region61: #{tpu_custom_call.1} parent=0
    _
  %s10 = ssub.s32 1, %s8
  %s11 = scalar_select 0, %s10, %s8
  %12 = sst [smem:[#allocation2]] %s6
  $region1: #{tpu_custom_call.1} parent=0
    #allocation3 [shape = 'u8[4096]{0}', space=vmem, size = 0x1000, scoped, tag = 'output window, operand 0']
    #allocation4 [shape = 's32[2]{0}', space=sflag, size = 0x8, scoped, tag = 'scoped memory for tpu_custom_call.1']
    %13 = vsyncpa [#allocation4], 0
    %s14 = scalar_lea.sflag [#allocation4], 1
    %15 = vsyncpa %s14, 0
    loop: start=0, step=1, limit=4
    $region2: #{tpu_custom_call.1} parent=1 // loop_pre_header
      _
    $region3: #{tpu_custom_call.1} parent=1 // loop_header
      %s17 = sphi 0, %s21
      %p18 = scmp.ge.s32.totalorder %s17, 4
      %s27 = sphi 0, %s29
      %s30 = sphi 0, %s27
      %s31 = sphi 0, %s30
      %s47 = sphi 0, %s31
      %s51 = sphi 0, %s51
      %s53 = sphi 0, %s51
      %s54 = sphi 0, %s53
      %s68 = sphi 0, %s54
      %s72 = sphi 0, %s72
      %s74 = sphi 0, %s72
      %s75 = sphi 0, %s74
      %s89 = sphi 0, %s75
      %s93 = sphi 0, %s93
      %s95 = sphi 0, %s93
      %s96 = sphi 0, %s95
      %s110 = sphi 0, %s96
      %s114 = sphi 0, %s114
      %s116 = sphi 0, %s114
      %s117 = sphi 0, %s116
      %s131 = sphi 0, %s117
      %s135 = sphi 0, %s135
      %s137 = sphi 0, %s135
      %s138 = sphi 0, %s137
      %s152 = sphi 0, %s138
      %s156 = sphi 0, %s156
      %s158 = sphi 0, %s156
      %s159 = sphi 0, %s158
      %s173 = sphi 0, %s159
      %s179 = sphi 0, %s181
      %s182 = sphi 0, %s179
      %s183 = sphi 0, %s182
      %s199 = sphi 0, %s183
    $region4: #{tpu_custom_call.1} parent=1 // loop_header_branch
      %20 = sbr.rel (%p18) target = $region8
    $region5: #{tpu_custom_call.1} parent=1 // loop_body
      %s22 = ssub.s32 %s17, 1
      %s23 = ssub.s32 %s17, 2
      %s24 = sadd.s32 %s17, 1
      %s25 = ssub.s32 %s17, %s24
      %p26 = scmp.eq.s32.totalorder %s25, 0
      %s28 = sadd.s32 %s27, 1
      %s29 = scalar_select %p26, %s27, %s28
      %p32 = pneg %p26
      %p33 = scmp.eq.s32.totalorder %s17, 1
      %p34 = por %p32, %p33
      %p35 = scmp.ne.s32.totalorder %s27, %s30
      %p36 = scmp.eq.s32.totalorder %s17, 0
      %p37 = por %p35, %p36
      %p38 = scmp.ne.s32.totalorder %s27, %s30
      %p39 = scmp.eq.s32.totalorder %s22, 1
      %p40 = por %p38, %p39
      %p41 = scmp.ne.s32.totalorder %s30, %s31
      %p42 = scmp.eq.s32.totalorder %s22, 0
      %p43 = por %p41, %p42
      %p44 = scmp.ne.s32.totalorder %s30, %s31
      %p45 = scmp.eq.s32.totalorder %s23, 1
      %p46 = por %p44, %p45
      %p48 = scmp.ne.s32.totalorder %s31, %s47
      %p49 = scmp.eq.s32.totalorder %s23, 0
      %p50 = por %p48, %p49
      %s52 = sadd.s32 %s51, 1
      %p55 = scmp.eq.s32.totalorder %s17, 1
      %p56 = scmp.ne.s32.totalorder %s51, %s53
      %p57 = scmp.eq.s32.totalorder %s17, 0
      %p58 = por %p56, %p57
      %p59 = scmp.ne.s32.totalorder %s51, %s53
      %p60 = scmp.eq.s32.totalorder %s22, 1
      %p61 = por %p59, %p60
      %p62 = scmp.ne.s32.totalorder %s53, %s54
      %p63 = scmp.eq.s32.totalorder %s22, 0
      %p64 = por %p62, %p63
      %p65 = scmp.ne.s32.totalorder %s53, %s54
      %p66 = scmp.eq.s32.totalorder %s23, 1
      %p67 = por %p65, %p66
      %p69 = scmp.ne.s32.totalorder %s54, %s68
      %p70 = scmp.eq.s32.totalorder %s23, 0
      %p71 = por %p69, %p70
      %s73 = sadd.s32 %s72, 1
      %p76 = scmp.eq.s32.totalorder %s17, 1
      %p77 = scmp.ne.s32.totalorder %s72, %s74
      %p78 = scmp.eq.s32.totalorder %s17, 0
      %p79 = por %p77, %p78
      %p80 = scmp.ne.s32.totalorder %s72, %s74
      %p81 = scmp.eq.s32.totalorder %s22, 1
      %p82 = por %p80, %p81
      %p83 = scmp.ne.s32.totalorder %s74, %s75
      %p84 = scmp.eq.s32.totalorder %s22, 0
      %p85 = por %p83, %p84
      %p86 = scmp.ne.s32.totalorder %s74, %s75
      %p87 = scmp.eq.s32.totalorder %s23, 1
      %p88 = por %p86, %p87
      %p90 = scmp.ne.s32.totalorder %s75, %s89
      %p91 = scmp.eq.s32.totalorder %s23, 0
      %p92 = por %p90, %p91
      %s94 = sadd.s32 %s93, 1
      %p97 = scmp.eq.s32.totalorder %s17, 1
      %p98 = scmp.ne.s32.totalorder %s93, %s95
      %p99 = scmp.eq.s32.totalorder %s17, 0
      %p100 = por %p98, %p99
      %p101 = scmp.ne.s32.totalorder %s93, %s95
      %p102 = scmp.eq.s32.totalorder %s22, 1
      %p103 = por %p101, %p102
      %p104 = scmp.ne.s32.totalorder %s95, %s96
      %p105 = scmp.eq.s32.totalorder %s22, 0
      %p106 = por %p104, %p105
      %p107 = scmp.ne.s32.totalorder %s95, %s96
      %p108 = scmp.eq.s32.totalorder %s23, 1
      %p109 = por %p107, %p108
      %p111 = scmp.ne.s32.totalorder %s96, %s110
      %p112 = scmp.eq.s32.totalorder %s23, 0
      %p113 = por %p111, %p112
      %s115 = sadd.s32 %s114, 1
      %p118 = scmp.eq.s32.totalorder %s17, 1
      %p119 = scmp.ne.s32.totalorder %s114, %s116
      %p120 = scmp.eq.s32.totalorder %s17, 0
      %p121 = por %p119, %p120
      %p122 = scmp.ne.s32.totalorder %s114, %s116
      %p123 = scmp.eq.s32.totalorder %s22, 1
      %p124 = por %p122, %p123
      %p125 = scmp.ne.s32.totalorder %s116, %s117
      %p126 = scmp.eq.s32.totalorder %s22, 0
      %p127 = por %p125, %p126
      %p128 = scmp.ne.s32.totalorder %s116, %s117
      %p129 = scmp.eq.s32.totalorder %s23, 1
      %p130 = por %p128, %p129
      %p132 = scmp.ne.s32.totalorder %s117, %s131
      %p133 = scmp.eq.s32.totalorder %s23, 0
      %p134 = por %p132, %p133
      %s136 = sadd.s32 %s135, 1
      %p139 = scmp.eq.s32.totalorder %s17, 1
      %p140 = scmp.ne.s32.totalorder %s135, %s137
      %p141 = scmp.eq.s32.totalorder %s17, 0
      %p142 = por %p140, %p141
      %p143 = scmp.ne.s32.totalorder %s135, %s137
      %p144 = scmp.eq.s32.totalorder %s22, 1
      %p145 = por %p143, %p144
      %p146 = scmp.ne.s32.totalorder %s137, %s138
      %p147 = scmp.eq.s32.totalorder %s22, 0
      %p148 = por %p146, %p147
      %p149 = scmp.ne.s32.totalorder %s137, %s138
      %p150 = scmp.eq.s32.totalorder %s23, 1
      %p151 = por %p149, %p150
      %p153 = scmp.ne.s32.totalorder %s138, %s152
      %p154 = scmp.eq.s32.totalorder %s23, 0
      %p155 = por %p153, %p154
      %s157 = sadd.s32 %s156, 1
      %p160 = scmp.eq.s32.totalorder %s17, 1
      %p161 = scmp.ne.s32.totalorder %s156, %s158
      %p162 = scmp.eq.s32.totalorder %s17, 0
      %p163 = por %p161, %p162
      %p164 = scmp.ne.s32.totalorder %s156, %s158
      %p165 = scmp.eq.s32.totalorder %s22, 1
      %p166 = por %p164, %p165
      %p167 = scmp.ne.s32.totalorder %s158, %s159
      %p168 = scmp.eq.s32.totalorder %s22, 0
      %p169 = por %p167, %p168
      %p170 = scmp.ne.s32.totalorder %s158, %s159
      %p171 = scmp.eq.s32.totalorder %s23, 1
      %p172 = por %p170, %p171
      %p174 = scmp.ne.s32.totalorder %s159, %s173
      %p175 = scmp.eq.s32.totalorder %s23, 0
      %p176 = por %p174, %p175
      %s177 = ssub.s32 %s17, %s24
      %p178 = scmp.eq.s32.totalorder %s177, 0
      %s180 = sadd.s32 %s179, 1
      %s181 = scalar_select %p178, %s179, %s180
      %p184 = pneg %p178
      %p185 = scmp.eq.s32.totalorder %s17, 1
      %p186 = por %p184, %p185
      %p187 = scmp.ne.s32.totalorder %s179, %s182
      %p188 = scmp.eq.s32.totalorder %s17, 0
      %p189 = por %p187, %p188
      %p190 = scmp.ne.s32.totalorder %s179, %s182
      %p191 = scmp.eq.s32.totalorder %s22, 1
      %p192 = por %p190, %p191
      %p193 = scmp.ne.s32.totalorder %s182, %s183
      %p194 = scmp.eq.s32.totalorder %s22, 0
      %p195 = por %p193, %p194
      %p196 = scmp.ne.s32.totalorder %s182, %s183
      %p197 = scmp.eq.s32.totalorder %s23, 1
      %p198 = por %p196, %p197
      %p200 = scmp.ne.s32.totalorder %s183, %s199
      %p201 = scmp.eq.s32.totalorder %s23, 0
      %p202 = por %p200, %p201
      %p203 = scmp.le.s32.totalorder 1, %s17
      %p204 = scmp.lt.s32.totalorder %s17, 3
      %p205 = pnand %p203, %p204
      %p206 = pneg %p205
      // Predicated region
      $region9: #{tpu_custom_call.1} parent=5 // pred_check
        _
      $region10: #{tpu_custom_call.1} parent=5 // pred_check_branch
        %208 = sbr.rel (%p205) target = $region12
      $region11: #{tpu_custom_call.1} parent=5 // pred_region
        %s209 = ssub.s32 %s17, 1
        // Predicated region
        $region13: #{tpu_custom_call.1} parent=11 // pred_check
          %p210 = pneg %p64
        $region14: #{tpu_custom_call.1} parent=11 // pred_check_branch
          %212 = sbr.rel (%p210) target = $region16
        $region15: #{tpu_custom_call.1} parent=11 // pred_region
          _
        $region16: #{tpu_custom_call.1} parent=11 // pred_fallthru
          _
        // Predicated region
        $region17: #{tpu_custom_call.1} parent=11 // pred_check
          %p213 = pneg %p85
        $region18: #{tpu_custom_call.1} parent=11 // pred_check_branch
          %215 = sbr.rel (%p213) target = $region20
        $region19: #{tpu_custom_call.1} parent=11 // pred_region
          _
        $region20: #{tpu_custom_call.1} parent=11 // pred_fallthru
          _
        // Predicated region
        $region21: #{tpu_custom_call.1} parent=11 // pred_check
          %p216 = pneg %p106
        $region22: #{tpu_custom_call.1} parent=11 // pred_check_branch
          %218 = sbr.rel (%p216) target = $region24
        $region23: #{tpu_custom_call.1} parent=11 // pred_region
          _
        $region24: #{tpu_custom_call.1} parent=11 // pred_fallthru
          _
        // Predicated region
        $region25: #{tpu_custom_call.1} parent=11 // pred_check
          %p219 = pneg %p127
        $region26: #{tpu_custom_call.1} parent=11 // pred_check_branch
          %221 = sbr.rel (%p219) target = $region28
        $region27: #{tpu_custom_call.1} parent=11 // pred_region
          _
        $region28: #{tpu_custom_call.1} parent=11 // pred_fallthru
          _
        // Predicated region
        $region29: #{tpu_custom_call.1} parent=11 // pred_check
          %p222 = pneg %p148
        $region30: #{tpu_custom_call.1} parent=11 // pred_check_branch
          %224 = sbr.rel (%p222) target = $region32
        $region31: #{tpu_custom_call.1} parent=11 // pred_region
          _
        $region32: #{tpu_custom_call.1} parent=11 // pred_fallthru
          _
        // Predicated region
        $region33: #{tpu_custom_call.1} parent=11 // pred_check
          %p225 = pneg %p169
        $region34: #{tpu_custom_call.1} parent=11 // pred_check_branch
          %227 = sbr.rel (%p225) target = $region36
        $region35: #{tpu_custom_call.1} parent=11 // pred_region
          _
        $region36: #{tpu_custom_call.1} parent=11 // pred_fallthru
          _
      $region12: #{tpu_custom_call.1} parent=5 // pred_fallthru
        _
      %p228 = scmp.lt.s32.totalorder %s17, 2
      // Predicated region
      $region37: #{tpu_custom_call.1} parent=5 // pred_check
        %p229 = pneg %p228
      $region38: #{tpu_custom_call.1} parent=5 // pred_check_branch
        %231 = sbr.rel (%p229) target = $region40
      $region39: #{tpu_custom_call.1} parent=5 // pred_region
        // Predicated region
        $region41: #{tpu_custom_call.1} parent=39 // pred_check
          %p232 = pneg %p37
        $region42: #{tpu_custom_call.1} parent=39 // pred_check_branch
          %234 = sbr.rel (%p232) target = $region44
        $region43: #{tpu_custom_call.1} parent=39 // pred_region
          %s235 = smul.u32 64, %s17
          %p236 = scmp.lt.s32.totalorder %s235, 127
          %s237 = scalar_select %p236, %s235, 127
          %s238 = smul.addr %s237, 4
          %s239 = scalar_lea.vmem %s0, %s238
          %s240 = smul.u32 64, %s17
        $region44: #{tpu_custom_call.1} parent=39 // pred_fallthru
          _
      $region40: #{tpu_custom_call.1} parent=5 // pred_fallthru
        _
      %p241 = scmp.le.s32.totalorder 1, %s17
      %p242 = scmp.lt.s32.totalorder %s17, 3
      %p243 = pnand %p241, %p242
      %p244 = pneg %p243
      // Predicated region
      $region45: #{tpu_custom_call.1} parent=5 // pred_check
        _
      $region46: #{tpu_custom_call.1} parent=5 // pred_check_branch
        %246 = sbr.rel (%p243) target = $region48
      $region47: #{tpu_custom_call.1} parent=5 // pred_region
        %s247 = ssub.s32 %s17, 1
        %s248 = smul.u32 64, %s22
        %p249 = scmp.lt.s32.totalorder %s248, 127
        %s250 = scalar_select %p249, %s248, 127
        %s251 = smul.addr %s250, 4
        %s252 = scalar_lea.vmem %s0, %s251
        %p253 = pneg %p43
        %p254 = pneg %p40
        %p255 = pneg %p64
        %p256 = pneg %p61
        %p257 = pneg %p85
        %p258 = pneg %p82
        %p259 = pneg %p106
        %p260 = pneg %p103
        %p261 = pneg %p127
        %p262 = pneg %p124
        %p263 = pneg %p148
        %p264 = pneg %p145
        %p265 = pneg %p169
        %p266 = pneg %p166
        %p267 = pneg %p195
        %p268 = pneg %p192
        %s269 = sand.u32 %s182, 1
        %s270 = scalar_lea.sflag [#allocation4], %s269
        %s271 = sand.u32 %s182, 1
        %s272 = smul.addr %s271, 4
        %s273 = scalar_lea.vmem [#allocation3], %s272
        %s274 = smul.u32 64, %s22
        %p275 = scmp.lt.s32.totalorder %s274, 127
        %s276 = scalar_select %p275, %s274, 127
        %s277 = smul.addr %s276, 4
        %s278 = scalar_lea.vmem %s0, %s277
        %s279 = smul.u32 64, %s22
        %v281 = vld [vmem:[%s278] sm:$0xf]
        %v282 = vld [vmem:[%s278 + $0x4] sm:$0xf]
        %v283 = vld [vmem:[%s278 + $0x8] sm:$0xf]
        %v284 = vld [vmem:[%s278 + $0xc] sm:$0xf]
        %v285 = vld [vmem:[%s278 + $0x10] sm:$0xf]
        %v286 = vld [vmem:[%s278 + $0x14] sm:$0xf]
        %v287 = vld [vmem:[%s278 + $0x18] sm:$0xf]
        %v288 = vld [vmem:[%s278 + $0x1c] sm:$0xf]
        %v289 = vld [vmem:[%s278 + $0x20] sm:$0xf]
        %v290 = vld [vmem:[%s278 + $0x24] sm:$0xf]
        %v291 = vld [vmem:[%s278 + $0x28] sm:$0xf]
        %v292 = vld [vmem:[%s278 + $0x2c] sm:$0xf]
        %v293 = vld [vmem:[%s278 + $0x30] sm:$0xf]
        %v294 = vld [vmem:[%s278 + $0x34] sm:$0xf]
        %v295 = vld [vmem:[%s278 + $0x38] sm:$0xf]
        %v296 = vld [vmem:[%s278 + $0x3c] sm:$0xf]
        %v297 = vld [vmem:[%s278 + $0x40] sm:$0xf]
        %v298 = vld [vmem:[%s278 + $0x44] sm:$0xf]
        %v299 = vld [vmem:[%s278 + $0x48] sm:$0xf]
        %v300 = vld [vmem:[%s278 + $0x4c] sm:$0xf]
        %v301 = vld [vmem:[%s278 + $0x50] sm:$0xf]
        %v302 = vld [vmem:[%s278 + $0x54] sm:$0xf]
        %v303 = vld [vmem:[%s278 + $0x58] sm:$0xf]
        %v304 = vld [vmem:[%s278 + $0x5c] sm:$0xf]
        %v305 = vld [vmem:[%s278 + $0x60] sm:$0xf]
        %v306 = vld [vmem:[%s278 + $0x64] sm:$0xf]
        %v307 = vld [vmem:[%s278 + $0x68] sm:$0xf]
        %v308 = vld [vmem:[%s278 + $0x6c] sm:$0xf]
        %v309 = vld [vmem:[%s278 + $0x70] sm:$0xf]
        %v310 = vld [vmem:[%s278 + $0x74] sm:$0xf]
        %v311 = vld [vmem:[%s278 + $0x78] sm:$0xf]
        %v312 = vld [vmem:[%s278 + $0x7c] sm:$0xf]
        %v313 = vld [vmem:[%s278 + $0x80] sm:$0xf]
        %v314 = vld [vmem:[%s278 + $0x84] sm:$0xf]
        %v315 = vld [vmem:[%s278 + $0x88] sm:$0xf]
        %v316 = vld [vmem:[%s278 + $0x8c] sm:$0xf]
        %v317 = vld [vmem:[%s278 + $0x90] sm:$0xf]
        %v318 = vld [vmem:[%s278 + $0x94] sm:$0xf]
        %v319 = vld [vmem:[%s278 + $0x98] sm:$0xf]
        %v320 = vld [vmem:[%s278 + $0x9c] sm:$0xf]
        %v321 = vld [vmem:[%s278 + $0xa0] sm:$0xf]
        %v322 = vld [vmem:[%s278 + $0xa4] sm:$0xf]
        %v323 = vld [vmem:[%s278 + $0xa8] sm:$0xf]
        %v324 = vld [vmem:[%s278 + $0xac] sm:$0xf]
        %v325 = vld [vmem:[%s278 + $0xb0] sm:$0xf]
        %v326 = vld [vmem:[%s278 + $0xb4] sm:$0xf]
        %v327 = vld [vmem:[%s278 + $0xb8] sm:$0xf]
        %v328 = vld [vmem:[%s278 + $0xbc] sm:$0xf]
        %v329 = vld [vmem:[%s278 + $0xc0] sm:$0xf]
        %v330 = vld [vmem:[%s278 + $0xc4] sm:$0xf]
        %v331 = vld [vmem:[%s278 + $0xc8] sm:$0xf]
        %v332 = vld [vmem:[%s278 + $0xcc] sm:$0xf]
        %v333 = vld [vmem:[%s278 + $0xd0] sm:$0xf]
        %v334 = vld [vmem:[%s278 + $0xd4] sm:$0xf]
        %v335 = vld [vmem:[%s278 + $0xd8] sm:$0xf]
        %v336 = vld [vmem:[%s278 + $0xdc] sm:$0xf]
        %v337 = vld [vmem:[%s278 + $0xe0] sm:$0xf]
        %v338 = vld [vmem:[%s278 + $0xe4] sm:$0xf]
        %v339 = vld [vmem:[%s278 + $0xe8] sm:$0xf]
        %v340 = vld [vmem:[%s278 + $0xec] sm:$0xf]
        %v341 = vld [vmem:[%s278 + $0xf0] sm:$0xf]
        %v342 = vld [vmem:[%s278 + $0xf4] sm:$0xf]
        %v343 = vld [vmem:[%s278 + $0xf8] sm:$0xf]
        %v344 = vld [vmem:[%s278 + $0xfc] sm:$0xf]
        %v345 = vld [vmem:[%s1] sm:$0xf]
        %v346 = vld [vmem:[%s1 + $0x4] sm:$0xf]
        %v347 = vld [vmem:[%s1 + $0x8] sm:$0xf]
        %v348 = vld [vmem:[%s1 + $0xc] sm:$0xf]
        %v349 = vld [vmem:[%s2] sm:$0x1]
        %v351 = vlaneseq
        %v352 = vshrl.u32 %v351, 7
        %v353 = vsub.s32 0, %v352
        %v354 = vrot.slane %v349, %v353
        %v420 = vunpack.c.l.b16 %v281
        %v421 = vunpack.c.l.b16 %v282
        %v422 = vunpack.c.l.b16 %v283
        %v423 = vunpack.c.l.b16 %v284
        %v424 = vunpack.c.l.b16 %v285
        %v425 = vunpack.c.l.b16 %v286
        %v426 = vunpack.c.l.b16 %v287
        %v427 = vunpack.c.l.b16 %v288
        %v428 = vunpack.c.l.b16 %v289
        %v429 = vunpack.c.l.b16 %v290
        %v430 = vunpack.c.l.b16 %v291
        %v431 = vunpack.c.l.b16 %v292
        %v432 = vunpack.c.l.b16 %v293
        %v433 = vunpack.c.l.b16 %v294
        %v434 = vunpack.c.l.b16 %v295
        %v435 = vunpack.c.l.b16 %v296
        %v436 = vunpack.c.l.b16 %v297
        %v437 = vunpack.c.l.b16 %v298
        %v438 = vunpack.c.l.b16 %v299
        %v439 = vunpack.c.l.b16 %v300
        %v440 = vunpack.c.l.b16 %v301
        %v441 = vunpack.c.l.b16 %v302
        %v442 = vunpack.c.l.b16 %v303
        %v443 = vunpack.c.l.b16 %v304
        %v444 = vunpack.c.l.b16 %v305
        %v445 = vunpack.c.l.b16 %v306
        %v446 = vunpack.c.l.b16 %v307
        %v447 = vunpack.c.l.b16 %v308
        %v448 = vunpack.c.l.b16 %v309
        %v449 = vunpack.c.l.b16 %v310
        %v450 = vunpack.c.l.b16 %v311
        %v451 = vunpack.c.l.b16 %v312
        %v452 = vunpack.c.l.b16 %v313
        %v453 = vunpack.c.l.b16 %v314
        %v454 = vunpack.c.l.b16 %v315
        %v455 = vunpack.c.l.b16 %v316
        %v456 = vunpack.c.l.b16 %v317
        %v457 = vunpack.c.l.b16 %v318
        %v458 = vunpack.c.l.b16 %v319
        %v459 = vunpack.c.l.b16 %v320
        %v460 = vunpack.c.l.b16 %v321
        %v461 = vunpack.c.l.b16 %v322
        %v462 = vunpack.c.l.b16 %v323
        %v463 = vunpack.c.l.b16 %v324
        %v464 = vunpack.c.l.b16 %v325
        %v465 = vunpack.c.l.b16 %v326
        %v466 = vunpack.c.l.b16 %v327
        %v467 = vunpack.c.l.b16 %v328
        %v468 = vunpack.c.l.b16 %v329
        %v469 = vunpack.c.l.b16 %v330
        %v470 = vunpack.c.l.b16 %v331
        %v471 = vunpack.c.l.b16 %v332
        %v472 = vunpack.c.l.b16 %v333
        %v473 = vunpack.c.l.b16 %v334
        %v474 = vunpack.c.l.b16 %v335
        %v475 = vunpack.c.l.b16 %v336
        %v476 = vunpack.c.l.b16 %v337
        %v477 = vunpack.c.l.b16 %v338
        %v478 = vunpack.c.l.b16 %v339
        %v479 = vunpack.c.l.b16 %v340
        %v480 = vunpack.c.l.b16 %v341
        %v481 = vunpack.c.l.b16 %v342
        %v482 = vunpack.c.l.b16 %v343
        %v483 = vunpack.c.l.b16 %v344
        %v484 = vpack.c.b16 %v421, %v420
        %v485 = vpack.c.b16 %v423, %v422
        %v486 = vpack.c.b16 %v425, %v424
        %v487 = vpack.c.b16 %v427, %v426
        %v488 = vpack.c.b16 %v429, %v428
        %v489 = vpack.c.b16 %v431, %v430
        %v490 = vpack.c.b16 %v433, %v432
        %v491 = vpack.c.b16 %v435, %v434
        %v492 = vpack.c.b16 %v437, %v436
        %v493 = vpack.c.b16 %v439, %v438
        %v494 = vpack.c.b16 %v441, %v440
        %v495 = vpack.c.b16 %v443, %v442
        %v496 = vpack.c.b16 %v445, %v444
        %v497 = vpack.c.b16 %v447, %v446
        %v498 = vpack.c.b16 %v449, %v448
        %v499 = vpack.c.b16 %v451, %v450
        %v500 = vpack.c.b16 %v453, %v452
        %v501 = vpack.c.b16 %v455, %v454
        %v502 = vpack.c.b16 %v457, %v456
        %v503 = vpack.c.b16 %v459, %v458
        %v504 = vpack.c.b16 %v461, %v460
        %v505 = vpack.c.b16 %v463, %v462
        %v506 = vpack.c.b16 %v465, %v464
        %v507 = vpack.c.b16 %v467, %v466
        %v508 = vpack.c.b16 %v469, %v468
        %v509 = vpack.c.b16 %v471, %v470
        %v510 = vpack.c.b16 %v473, %v472
        %v511 = vpack.c.b16 %v475, %v474
        %v512 = vpack.c.b16 %v477, %v476
        %v513 = vpack.c.b16 %v479, %v478
        %v514 = vpack.c.b16 %v481, %v480
        %v515 = vpack.c.b16 %v483, %v482
        %v520 = vunpack.c.l.b16 %v345
        %v521 = vunpack.c.l.b16 %v346
        %v522 = vunpack.c.l.b16 %v347
        %v523 = vunpack.c.l.b16 %v348
        %v524 = vpack.c.b16 %v521, %v520
        %v525 = vpack.c.b16 %v523, %v522
        %vm528 = vcmask 261120
        %v530 = vsel %vm528, %v484, 0
        %v533 = vsel %vm528, %v485, 0
        %v536 = vsel %vm528, %v486, 0
        %v539 = vsel %vm528, %v487, 0
        %v542 = vsel %vm528, %v488, 0
        %v545 = vsel %vm528, %v489, 0
        %v548 = vsel %vm528, %v490, 0
        %v551 = vsel %vm528, %v491, 0
        %v554 = vsel %vm528, %v492, 0
        %v557 = vsel %vm528, %v493, 0
        %v560 = vsel %vm528, %v494, 0
        %v563 = vsel %vm528, %v495, 0
        %v566 = vsel %vm528, %v496, 0
        %v569 = vsel %vm528, %v497, 0
        %v572 = vsel %vm528, %v498, 0
        %v575 = vsel %vm528, %v499, 0
        %v578 = vsel %vm528, %v500, 0
        %v581 = vsel %vm528, %v501, 0
        %v584 = vsel %vm528, %v502, 0
        %v587 = vsel %vm528, %v503, 0
        %v590 = vsel %vm528, %v504, 0
        %v593 = vsel %vm528, %v505, 0
        %v596 = vsel %vm528, %v506, 0
        %v599 = vsel %vm528, %v507, 0
        %v602 = vsel %vm528, %v508, 0
        %v605 = vsel %vm528, %v509, 0
        %v608 = vsel %vm528, %v510, 0
        %v611 = vsel %vm528, %v511, 0
        %v614 = vsel %vm528, %v512, 0
        %v617 = vsel %vm528, %v513, 0
        %v620 = vsel %vm528, %v514, 0
        %v623 = vsel %vm528, %v515, 0
        %625 = vmatprep.subr.bf16.mxu0 0
        %626 = vmatpush1.bf16.msra.mxu0 0
        %627 = vmatprep.subr.bf16.mxu0 0
        %628 = vmatpush1.bf16.msra.mxu0 0
        %629 = vmatprep.subr.bf16.mxu0 0
        %630 = vmatpush1.bf16.msra.mxu0 0
        %631 = vmatprep.subr.bf16.mxu0 0
        %632 = vmatpush1.bf16.msra.mxu0 0
        %633 = vmatprep.subr.bf16.mxu0 0
        %634 = vmatpush1.bf16.msra.mxu0 0
        %635 = vmatprep.subr.bf16.mxu0 0
        %636 = vmatpush1.bf16.msra.mxu0 0
        %637 = vmatprep.subr.bf16.mxu0 0
        %638 = vmatpush1.bf16.msra.mxu0 %v525
        %639 = vmatprep.subr.bf16.mxu0 0
        %640 = vmatpush1.bf16.msra.mxu0 %v524
        %641 = vmatprep.subr.bf16.mxu0 0
        %642 = vmatpush2.bf16.msra.mxu0 0
        %643 = vmatprep.subr.bf16.mxu0 0
        %644 = vmatpush2.bf16.msra.mxu0 0
        %645 = vmatprep.subr.bf16.mxu0 0
        %646 = vmatpush2.bf16.msra.mxu0 0
        %647 = vmatprep.subr.bf16.mxu0 0
        %648 = vmatpush2.bf16.msra.mxu0 0
        %649 = vmatprep.subr.bf16.mxu0 0
        %650 = vmatpush2.bf16.msra.mxu0 0
        %651 = vmatprep.subr.bf16.mxu0 0
        %652 = vmatpush2.bf16.msra.mxu0 0
        %653 = vmatprep.subr.bf16.mxu0 0
        %654 = vmatpush2.bf16.msra.mxu0 0
        %655 = vmatprep.subr.bf16.mxu0 0
        %656 = vmatpush2.bf16.msra.mxu0 0
        %657 = vmatprep.mubr.bf16.mxu0 0
        %658 = vmatmul.mubr.bf16.gmra.mxu0 %v530
        %v659 = vpop.f32.mrf.mxu0
        %v660 = vadd.f32 %v354, %v659
        %v661 = vpop.f32.mrf.mxu0
        %v662 = vpop.f32.mrf.mxu0
        %v663 = vadd.f32 %v354, %v662
        %v664 = vpop.f32.mrf.mxu0
        %665 = vmatprep.mubr.bf16.mxu0 0
        %666 = vmatmul.mubr.bf16.gmra.mxu0 %v533
        %v667 = vpop.f32.mrf.mxu0
        %v668 = vadd.f32 %v354, %v667
        %v669 = vpop.f32.mrf.mxu0
        %v670 = vpop.f32.mrf.mxu0
        %v671 = vadd.f32 %v354, %v670
        %v672 = vpop.f32.mrf.mxu0
        %673 = vmatprep.mubr.bf16.mxu0 0
        %674 = vmatmul.mubr.bf16.gmra.mxu0 %v536
        %v675 = vpop.f32.mrf.mxu0
        %v676 = vadd.f32 %v354, %v675
        %v677 = vpop.f32.mrf.mxu0
        %v678 = vpop.f32.mrf.mxu0
        %v679 = vadd.f32 %v354, %v678
        %v680 = vpop.f32.mrf.mxu0
        %681 = vmatprep.mubr.bf16.mxu0 0
        %682 = vmatmul.mubr.bf16.gmra.mxu0 %v539
        %v683 = vpop.f32.mrf.mxu0
        %v684 = vadd.f32 %v354, %v683
        %v685 = vpop.f32.mrf.mxu0
        %v686 = vpop.f32.mrf.mxu0
        %v687 = vadd.f32 %v354, %v686
        %v688 = vpop.f32.mrf.mxu0
        %689 = vmatprep.mubr.bf16.mxu0 0
        %690 = vmatmul.mubr.bf16.gmra.mxu0 %v542
        %v691 = vpop.f32.mrf.mxu0
        %v692 = vadd.f32 %v354, %v691
        %v693 = vpop.f32.mrf.mxu0
        %v694 = vpop.f32.mrf.mxu0
        %v695 = vadd.f32 %v354, %v694
        %v696 = vpop.f32.mrf.mxu0
        %697 = vmatprep.mubr.bf16.mxu0 0
        %698 = vmatmul.mubr.bf16.gmra.mxu0 %v545
        %v699 = vpop.f32.mrf.mxu0
        %v700 = vadd.f32 %v354, %v699
        %v701 = vpop.f32.mrf.mxu0
        %v702 = vpop.f32.mrf.mxu0
        %v703 = vadd.f32 %v354, %v702
        %v704 = vpop.f32.mrf.mxu0
        %705 = vmatprep.mubr.bf16.mxu0 0
        %706 = vmatmul.mubr.bf16.gmra.mxu0 %v548
        %v707 = vpop.f32.mrf.mxu0
        %v708 = vadd.f32 %v354, %v707
        %v709 = vpop.f32.mrf.mxu0
        %v710 = vpop.f32.mrf.mxu0
        %v711 = vadd.f32 %v354, %v710
        %v712 = vpop.f32.mrf.mxu0
        %713 = vmatprep.mubr.bf16.mxu0 0
        %714 = vmatmul.mubr.bf16.gmra.mxu0 %v551
        %v715 = vpop.f32.mrf.mxu0
        %v716 = vadd.f32 %v354, %v715
        %v717 = vpop.f32.mrf.mxu0
        %v718 = vpop.f32.mrf.mxu0
        %v719 = vadd.f32 %v354, %v718
        %v720 = vpop.f32.mrf.mxu0
        %721 = vmatprep.mubr.bf16.mxu0 0
        %722 = vmatmul.mubr.bf16.gmra.mxu0 %v554
        %v723 = vpop.f32.mrf.mxu0
        %v724 = vadd.f32 %v354, %v723
        %v725 = vpop.f32.mrf.mxu0
        %v726 = vpop.f32.mrf.mxu0
        %v727 = vadd.f32 %v354, %v726
        %v728 = vpop.f32.mrf.mxu0
        %729 = vmatprep.mubr.bf16.mxu0 0
        %730 = vmatmul.mubr.bf16.gmra.mxu0 %v557
        %v731 = vpop.f32.mrf.mxu0
        %v732 = vadd.f32 %v354, %v731
        %v733 = vpop.f32.mrf.mxu0
        %v734 = vpop.f32.mrf.mxu0
        %v735 = vadd.f32 %v354, %v734
        %v736 = vpop.f32.mrf.mxu0
        %737 = vmatprep.mubr.bf16.mxu0 0
        %738 = vmatmul.mubr.bf16.gmra.mxu0 %v560
        %v739 = vpop.f32.mrf.mxu0
        %v740 = vadd.f32 %v354, %v739
        %v741 = vpop.f32.mrf.mxu0
        %v742 = vpop.f32.mrf.mxu0
        %v743 = vadd.f32 %v354, %v742
        %v744 = vpop.f32.mrf.mxu0
        %745 = vmatprep.mubr.bf16.mxu0 0
        %746 = vmatmul.mubr.bf16.gmra.mxu0 %v563
        %v747 = vpop.f32.mrf.mxu0
        %v748 = vadd.f32 %v354, %v747
        %v749 = vpop.f32.mrf.mxu0
        %v750 = vpop.f32.mrf.mxu0
        %v751 = vadd.f32 %v354, %v750
        %v752 = vpop.f32.mrf.mxu0
        %753 = vmatprep.mubr.bf16.mxu0 0
        %754 = vmatmul.mubr.bf16.gmra.mxu0 %v566
        %v755 = vpop.f32.mrf.mxu0
        %v756 = vadd.f32 %v354, %v755
        %v757 = vpop.f32.mrf.mxu0
        %v758 = vpop.f32.mrf.mxu0
        %v759 = vadd.f32 %v354, %v758
        %v760 = vpop.f32.mrf.mxu0
        %761 = vmatprep.mubr.bf16.mxu0 0
        %762 = vmatmul.mubr.bf16.gmra.mxu0 %v569
        %v763 = vpop.f32.mrf.mxu0
        %v764 = vadd.f32 %v354, %v763
        %v765 = vpop.f32.mrf.mxu0
        %v766 = vpop.f32.mrf.mxu0
        %v767 = vadd.f32 %v354, %v766
        %v768 = vpop.f32.mrf.mxu0
        %769 = vmatprep.mubr.bf16.mxu0 0
        %770 = vmatmul.mubr.bf16.gmra.mxu0 %v572
        %v771 = vpop.f32.mrf.mxu0
        %v772 = vadd.f32 %v354, %v771
        %v773 = vpop.f32.mrf.mxu0
        %v774 = vpop.f32.mrf.mxu0
        %v775 = vadd.f32 %v354, %v774
        %v776 = vpop.f32.mrf.mxu0
        %777 = vmatprep.mubr.bf16.mxu0 0
        %778 = vmatmul.mubr.bf16.gmra.mxu0 %v575
        %v779 = vpop.f32.mrf.mxu0
        %v780 = vadd.f32 %v354, %v779
        %v781 = vpop.f32.mrf.mxu0
        %v782 = vpop.f32.mrf.mxu0
        %v783 = vadd.f32 %v354, %v782
        %v784 = vpop.f32.mrf.mxu0
        %785 = vmatprep.mubr.bf16.mxu0 0
        %786 = vmatmul.mubr.bf16.gmra.mxu0 %v578
        %v787 = vpop.f32.mrf.mxu0
        %v788 = vadd.f32 %v354, %v787
        %v789 = vpop.f32.mrf.mxu0
        %v790 = vpop.f32.mrf.mxu0
        %v791 = vadd.f32 %v354, %v790
        %v792 = vpop.f32.mrf.mxu0
        %793 = vmatprep.mubr.bf16.mxu0 0
        %794 = vmatmul.mubr.bf16.gmra.mxu0 %v581
        %v795 = vpop.f32.mrf.mxu0
        %v796 = vadd.f32 %v354, %v795
        %v797 = vpop.f32.mrf.mxu0
        %v798 = vpop.f32.mrf.mxu0
        %v799 = vadd.f32 %v354, %v798
        %v800 = vpop.f32.mrf.mxu0
        %801 = vmatprep.mubr.bf16.mxu0 0
        %802 = vmatmul.mubr.bf16.gmra.mxu0 %v584
        %v803 = vpop.f32.mrf.mxu0
        %v804 = vadd.f32 %v354, %v803
        %v805 = vpop.f32.mrf.mxu0
        %v806 = vpop.f32.mrf.mxu0
        %v807 = vadd.f32 %v354, %v806
        %v808 = vpop.f32.mrf.mxu0
        %809 = vmatprep.mubr.bf16.mxu0 0
        %810 = vmatmul.mubr.bf16.gmra.mxu0 %v587
        %v811 = vpop.f32.mrf.mxu0
        %v812 = vadd.f32 %v354, %v811
        %v813 = vpop.f32.mrf.mxu0
        %v814 = vpop.f32.mrf.mxu0
        %v815 = vadd.f32 %v354, %v814
        %v816 = vpop.f32.mrf.mxu0
        %817 = vmatprep.mubr.bf16.mxu0 0
        %818 = vmatmul.mubr.bf16.gmra.mxu0 %v590
        %v819 = vpop.f32.mrf.mxu0
        %v820 = vadd.f32 %v354, %v819
        %v821 = vpop.f32.mrf.mxu0
        %v822 = vpop.f32.mrf.mxu0
        %v823 = vadd.f32 %v354, %v822
        %v824 = vpop.f32.mrf.mxu0
        %825 = vmatprep.mubr.bf16.mxu0 0
        %826 = vmatmul.mubr.bf16.gmra.mxu0 %v593
        %v827 = vpop.f32.mrf.mxu0
        %v828 = vadd.f32 %v354, %v827
        %v829 = vpop.f32.mrf.mxu0
        %v830 = vpop.f32.mrf.mxu0
        %v831 = vadd.f32 %v354, %v830
        %v832 = vpop.f32.mrf.mxu0
        %833 = vmatprep.mubr.bf16.mxu0 0
        %834 = vmatmul.mubr.bf16.gmra.mxu0 %v596
        %v835 = vpop.f32.mrf.mxu0
        %v836 = vadd.f32 %v354, %v835
        %v837 = vpop.f32.mrf.mxu0
        %v838 = vpop.f32.mrf.mxu0
        %v839 = vadd.f32 %v354, %v838
        %v840 = vpop.f32.mrf.mxu0
        %841 = vmatprep.mubr.bf16.mxu0 0
        %842 = vmatmul.mubr.bf16.gmra.mxu0 %v599
        %v843 = vpop.f32.mrf.mxu0
        %v844 = vadd.f32 %v354, %v843
        %v845 = vpop.f32.mrf.mxu0
        %v846 = vpop.f32.mrf.mxu0
        %v847 = vadd.f32 %v354, %v846
        %v848 = vpop.f32.mrf.mxu0
        %849 = vmatprep.mubr.bf16.mxu0 0
        %850 = vmatmul.mubr.bf16.gmra.mxu0 %v602
        %v851 = vpop.f32.mrf.mxu0
        %v852 = vadd.f32 %v354, %v851
        %v853 = vpop.f32.mrf.mxu0
        %v854 = vpop.f32.mrf.mxu0
        %v855 = vadd.f32 %v354, %v854
        %v856 = vpop.f32.mrf.mxu0
        %857 = vmatprep.mubr.bf16.mxu0 0
        %858 = vmatmul.mubr.bf16.gmra.mxu0 %v605
        %v859 = vpop.f32.mrf.mxu0
        %v860 = vadd.f32 %v354, %v859
        %v861 = vpop.f32.mrf.mxu0
        %v862 = vpop.f32.mrf.mxu0
        %v863 = vadd.f32 %v354, %v862
        %v864 = vpop.f32.mrf.mxu0
        %865 = vmatprep.mubr.bf16.mxu0 0
        %866 = vmatmul.mubr.bf16.gmra.mxu0 %v608
        %v867 = vpop.f32.mrf.mxu0
        %v868 = vadd.f32 %v354, %v867
        %v869 = vpop.f32.mrf.mxu0
        %v870 = vpop.f32.mrf.mxu0
        %v871 = vadd.f32 %v354, %v870
        %v872 = vpop.f32.mrf.mxu0
        %873 = vmatprep.mubr.bf16.mxu0 0
        %874 = vmatmul.mubr.bf16.gmra.mxu0 %v611
        %v875 = vpop.f32.mrf.mxu0
        %v876 = vadd.f32 %v354, %v875
        %v877 = vpop.f32.mrf.mxu0
        %v878 = vpop.f32.mrf.mxu0
        %v879 = vadd.f32 %v354, %v878
        %v880 = vpop.f32.mrf.mxu0
        %881 = vmatprep.mubr.bf16.mxu0 0
        %882 = vmatmul.mubr.bf16.gmra.mxu0 %v614
        %v883 = vpop.f32.mrf.mxu0
        %v884 = vadd.f32 %v354, %v883
        %v885 = vpop.f32.mrf.mxu0
        %v886 = vpop.f32.mrf.mxu0
        %v887 = vadd.f32 %v354, %v886
        %v888 = vpop.f32.mrf.mxu0
        %889 = vmatprep.mubr.bf16.mxu0 0
        %890 = vmatmul.mubr.bf16.gmra.mxu0 %v617
        %v891 = vpop.f32.mrf.mxu0
        %v892 = vadd.f32 %v354, %v891
        %v893 = vpop.f32.mrf.mxu0
        %v894 = vpop.f32.mrf.mxu0
        %v895 = vadd.f32 %v354, %v894
        %v896 = vpop.f32.mrf.mxu0
        %897 = vmatprep.mubr.bf16.mxu0 0
        %898 = vmatmul.mubr.bf16.gmra.mxu0 %v620
        %v899 = vpop.f32.mrf.mxu0
        %v900 = vadd.f32 %v354, %v899
        %v901 = vpop.f32.mrf.mxu0
        %v902 = vpop.f32.mrf.mxu0
        %v903 = vadd.f32 %v354, %v902
        %v904 = vpop.f32.mrf.mxu0
        %905 = vmatprep.mubr.bf16.mxu0 0
        %906 = vmatmul.mubr.bf16.gmra.mxu0 %v623
        %v907 = vpop.f32.mrf.mxu0
        %v908 = vadd.f32 %v354, %v907
        %v909 = vpop.f32.mrf.mxu0
        %v910 = vpop.f32.mrf.mxu0
        %v911 = vadd.f32 %v354, %v910
        %v912 = vpop.f32.mrf.mxu0
        %913 = vdwg.mxu0
        %v914 = vtanh.pop %v660
        %v915 = vtanh.pop %v663
        %v916 = vtanh.pop %v668
        %v917 = vtanh.pop %v671
        %v918 = vtanh.pop %v676
        %v919 = vtanh.pop %v679
        %v920 = vtanh.pop %v684
        %v921 = vtanh.pop %v687
        %v922 = vtanh.pop %v692
        %v923 = vtanh.pop %v695
        %v924 = vtanh.pop %v700
        %v925 = vtanh.pop %v703
        %v926 = vtanh.pop %v708
        %v927 = vtanh.pop %v711
        %v928 = vtanh.pop %v716
        %v929 = vtanh.pop %v719
        %v930 = vtanh.pop %v724
        %v931 = vtanh.pop %v727
        %v932 = vtanh.pop %v732
        %v933 = vtanh.pop %v735
        %v934 = vtanh.pop %v740
        %v935 = vtanh.pop %v743
        %v936 = vtanh.pop %v748
        %v937 = vtanh.pop %v751
        %v938 = vtanh.pop %v756
        %v939 = vtanh.pop %v759
        %v940 = vtanh.pop %v764
        %v941 = vtanh.pop %v767
        %v942 = vtanh.pop %v772
        %v943 = vtanh.pop %v775
        %v944 = vtanh.pop %v780
        %v945 = vtanh.pop %v783
        %v946 = vtanh.pop %v788
        %v947 = vtanh.pop %v791
        %v948 = vtanh.pop %v796
        %v949 = vtanh.pop %v799
        %v950 = vtanh.pop %v804
        %v951 = vtanh.pop %v807
        %v952 = vtanh.pop %v812
        %v953 = vtanh.pop %v815
        %v954 = vtanh.pop %v820
        %v955 = vtanh.pop %v823
        %v956 = vtanh.pop %v828
        %v957 = vtanh.pop %v831
        %v958 = vtanh.pop %v836
        %v959 = vtanh.pop %v839
        %v960 = vtanh.pop %v844
        %v961 = vtanh.pop %v847
        %v962 = vtanh.pop %v852
        %v963 = vtanh.pop %v855
        %v964 = vtanh.pop %v860
        %v965 = vtanh.pop %v863
        %v966 = vtanh.pop %v868
        %v967 = vtanh.pop %v871
        %v968 = vtanh.pop %v876
        %v969 = vtanh.pop %v879
        %v970 = vtanh.pop %v884
        %v971 = vtanh.pop %v887
        %v972 = vtanh.pop %v892
        %v973 = vtanh.pop %v895
        %v974 = vtanh.pop %v900
        %v975 = vtanh.pop %v903
        %v976 = vtanh.pop %v908
        %v977 = vtanh.pop %v911
        %v978 = vld [vmem:[%s3] sm:$0xff]
        %v979 = vld [vmem:[%s3 + $0x8] sm:$0xff]
        %v980 = vld [vmem:[%s4] sm:$0x1]
        %v982 = vlaneseq
        %v983 = vshrl.u32 %v982, 7
        %v984 = vsub.s32 0, %v983
        %v985 = vrot.slane %v980, %v984
        %vm987 = vcmask 130048
        %v989 = vsel %vm987, %v914, 0
        %v992 = vsel %vm987, %v915, 0
        %v995 = vsel %vm987, %v916, 0
        %v998 = vsel %vm987, %v917, 0
        %v1001 = vsel %vm987, %v918, 0
        %v1004 = vsel %vm987, %v919, 0
        %v1007 = vsel %vm987, %v920, 0
        %v1010 = vsel %vm987, %v921, 0
        %v1013 = vsel %vm987, %v922, 0
        %v1016 = vsel %vm987, %v923, 0
        %v1019 = vsel %vm987, %v924, 0
        %v1022 = vsel %vm987, %v925, 0
        %v1025 = vsel %vm987, %v926, 0
        %v1028 = vsel %vm987, %v927, 0
        %v1031 = vsel %vm987, %v928, 0
        %v1034 = vsel %vm987, %v929, 0
        %v1037 = vsel %vm987, %v930, 0
        %v1040 = vsel %vm987, %v931, 0
        %v1043 = vsel %vm987, %v932, 0
        %v1046 = vsel %vm987, %v933, 0
        %v1049 = vsel %vm987, %v934, 0
        %v1052 = vsel %vm987, %v935, 0
        %v1055 = vsel %vm987, %v936, 0
        %v1058 = vsel %vm987, %v937, 0
        %v1061 = vsel %vm987, %v938, 0
        %v1064 = vsel %vm987, %v939, 0
        %v1067 = vsel %vm987, %v940, 0
        %v1070 = vsel %vm987, %v941, 0
        %v1073 = vsel %vm987, %v942, 0
        %v1076 = vsel %vm987, %v943, 0
        %v1079 = vsel %vm987, %v944, 0
        %v1082 = vsel %vm987, %v945, 0
        %v1085 = vsel %vm987, %v946, 0
        %v1088 = vsel %vm987, %v947, 0
        %v1091 = vsel %vm987, %v948, 0
        %v1094 = vsel %vm987, %v949, 0
        %v1097 = vsel %vm987, %v950, 0
        %v1100 = vsel %vm987, %v951, 0
        %v1103 = vsel %vm987, %v952, 0
        %v1106 = vsel %vm987, %v953, 0
        %v1109 = vsel %vm987, %v954, 0
        %v1112 = vsel %vm987, %v955, 0
        %v1115 = vsel %vm987, %v956, 0
        %v1118 = vsel %vm987, %v957, 0
        %v1121 = vsel %vm987, %v958, 0
        %v1124 = vsel %vm987, %v959, 0
        %v1127 = vsel %vm987, %v960, 0
        %v1130 = vsel %vm987, %v961, 0
        %v1133 = vsel %vm987, %v962, 0
        %v1136 = vsel %vm987, %v963, 0
        %v1139 = vsel %vm987, %v964, 0
        %v1142 = vsel %vm987, %v965, 0
        %v1145 = vsel %vm987, %v966, 0
        %v1148 = vsel %vm987, %v967, 0
        %v1151 = vsel %vm987, %v968, 0
        %v1154 = vsel %vm987, %v969, 0
        %v1157 = vsel %vm987, %v970, 0
        %v1160 = vsel %vm987, %v971, 0
        %v1163 = vsel %vm987, %v972, 0
        %v1166 = vsel %vm987, %v973, 0
        %v1169 = vsel %vm987, %v974, 0
        %v1172 = vsel %vm987, %v975, 0
        %v1175 = vsel %vm987, %v976, 0
        %v1178 = vsel %vm987, %v977, 0
        %1180 = vmatprep.subr.mxu0 0.0
        %1181 = vmatpush1.msra.mxu0 0.0
        %1182 = vmatprep.subr.mxu0 0.0
        %1183 = vmatpush1.msra.mxu0 0.0
        %1184 = vmatprep.subr.mxu0 0.0
        %1185 = vmatpush1.msra.mxu0 0.0
        %1186 = vmatprep.subr.mxu0 0.0
        %1187 = vmatpush1.msra.mxu0 0.0
        %1188 = vmatprep.subr.mxu0 0.0
        %1189 = vmatpush1.msra.mxu0 0.0
        %1190 = vmatprep.subr.mxu0 0.0
        %1191 = vmatpush1.msra.mxu0 0.0
        %1192 = vmatprep.subr.mxu0 0.0
        %1193 = vmatpush1.msra.mxu0 0.0
        %1194 = vmatprep.subr.mxu0 0.0
        %1195 = vmatpush1.msra.mxu0 0.0
        %1196 = vmatprep.subr.mxu0 0.0
        %1197 = vmatpush1.msra.mxu0 0.0
        %1198 = vmatprep.subr.mxu0 0.0
        %1199 = vmatpush1.msra.mxu0 0.0
        %1200 = vmatprep.subr.mxu0 0.0
        %1201 = vmatpush1.msra.mxu0 0.0
        %1202 = vmatprep.subr.mxu0 0.0
        %1203 = vmatpush1.msra.mxu0 0.0
        %1204 = vmatprep.subr.mxu0 0.0
        %1205 = vmatpush1.msra.mxu0 0.0
        %1206 = vmatprep.subr.mxu0 0.0
        %1207 = vmatpush1.msra.mxu0 0.0
        %1208 = vmatprep.subr.mxu0 0.0
        %v1209 = vand.u32 %v979, 4294901760
        %1210 = vmatpush1.msra.mxu0 %v1209
        %1211 = vmatprep.subr.mxu0 0.0
        %v1212 = vand.u32 %v978, 4294901760
        %1213 = vmatpush1.msra.mxu0 %v1212
        %1214 = vmatprep.subr.mxu0 0.0
        %1215 = vmatpush2.msra.mxu0 0.0
        %1216 = vmatprep.subr.mxu0 0.0
        %1217 = vmatpush2.msra.mxu0 0.0
        %1218 = vmatprep.subr.mxu0 0.0
        %1219 = vmatpush2.msra.mxu0 0.0
        %1220 = vmatprep.subr.mxu0 0.0
        %1221 = vmatpush2.msra.mxu0 0.0
        %1222 = vmatprep.subr.mxu0 0.0
        %1223 = vmatpush2.msra.mxu0 0.0
        %1224 = vmatprep.subr.mxu0 0.0
        %1225 = vmatpush2.msra.mxu0 0.0
        %1226 = vmatprep.subr.mxu0 0.0
        %1227 = vmatpush2.msra.mxu0 0.0
        %1228 = vmatprep.subr.mxu0 0.0
        %1229 = vmatpush2.msra.mxu0 0.0
        %1230 = vmatprep.subr.mxu0 0.0
        %1231 = vmatpush2.msra.mxu0 0.0
        %1232 = vmatprep.subr.mxu0 0.0
        %1233 = vmatpush2.msra.mxu0 0.0
        %1234 = vmatprep.subr.mxu0 0.0
        %1235 = vmatpush2.msra.mxu0 0.0
        %1236 = vmatprep.subr.mxu0 0.0
        %1237 = vmatpush2.msra.mxu0 0.0
        %1238 = vmatprep.subr.mxu0 0.0
        %1239 = vmatpush2.msra.mxu0 0.0
        %1240 = vmatprep.subr.mxu0 0.0
        %1241 = vmatpush2.msra.mxu0 0.0
        %1242 = vmatprep.subr.mxu0 0.0
        %1243 = vmatpush2.msra.mxu0 0.0
        %1244 = vmatprep.subr.mxu0 0.0
        %1245 = vmatpush2.msra.mxu0 0.0
        %1246 = vmatprep.mubr.f32.mxu0 0.0
        %v1247 = vand.u32 %v989, 4294901760
        %v1248 = vsub.f32 %v989, %v1247
        %v1249 = vand.u32 %v1248, 4294901760
        %v1250 = vsub.f32 %v1248, %v1249
        %v1251 = vand.u32 %v1250, 4294901760
        %1252 = vmatmul.mubr.f32.gmra.mxu0 %v1251
        %v1253 = vpop.f32.mrf.mxu0
        %v1254 = vadd.f32 %v985, %v1253
        %v1255 = vpop.f32.mrf.mxu0
        %1256 = vmatprep.mubr.f32.mxu0 0.0
        %v1257 = vand.u32 %v992, 4294901760
        %v1258 = vsub.f32 %v992, %v1257
        %v1259 = vand.u32 %v1258, 4294901760
        %v1260 = vsub.f32 %v1258, %v1259
        %v1261 = vand.u32 %v1260, 4294901760
        %1262 = vmatmul.mubr.f32.gmra.mxu0 %v1261
        %v1263 = vpop.f32.mrf.mxu0
        %v1264 = vadd.f32 %v985, %v1263
        %v1265 = vpop.f32.mrf.mxu0
        %1266 = vmatprep.mubr.f32.mxu0 0.0
        %v1267 = vand.u32 %v995, 4294901760
        %v1268 = vsub.f32 %v995, %v1267
        %v1269 = vand.u32 %v1268, 4294901760
        %v1270 = vsub.f32 %v1268, %v1269
        %v1271 = vand.u32 %v1270, 4294901760
        %1272 = vmatmul.mubr.f32.gmra.mxu0 %v1271
        %v1273 = vpop.f32.mrf.mxu0
        %v1274 = vadd.f32 %v985, %v1273
        %v1275 = vpop.f32.mrf.mxu0
        %1276 = vmatprep.mubr.f32.mxu0 0.0
        %v1277 = vand.u32 %v998, 4294901760
        %v1278 = vsub.f32 %v998, %v1277
        %v1279 = vand.u32 %v1278, 4294901760
        %v1280 = vsub.f32 %v1278, %v1279
        %v1281 = vand.u32 %v1280, 4294901760
        %1282 = vmatmul.mubr.f32.gmra.mxu0 %v1281
        %v1283 = vpop.f32.mrf.mxu0
        %v1284 = vadd.f32 %v985, %v1283
        %v1285 = vpop.f32.mrf.mxu0
        %1286 = vmatprep.mubr.f32.mxu0 0.0
        %v1287 = vand.u32 %v1001, 4294901760
        %v1288 = vsub.f32 %v1001, %v1287
        %v1289 = vand.u32 %v1288, 4294901760
        %v1290 = vsub.f32 %v1288, %v1289
        %v1291 = vand.u32 %v1290, 4294901760
        %1292 = vmatmul.mubr.f32.gmra.mxu0 %v1291
        %v1293 = vpop.f32.mrf.mxu0
        %v1294 = vadd.f32 %v985, %v1293
        %v1295 = vpop.f32.mrf.mxu0
        %1296 = vmatprep.mubr.f32.mxu0 0.0
        %v1297 = vand.u32 %v1004, 4294901760
        %v1298 = vsub.f32 %v1004, %v1297
        %v1299 = vand.u32 %v1298, 4294901760
        %v1300 = vsub.f32 %v1298, %v1299
        %v1301 = vand.u32 %v1300, 4294901760
        %1302 = vmatmul.mubr.f32.gmra.mxu0 %v1301
        %v1303 = vpop.f32.mrf.mxu0
        %v1304 = vadd.f32 %v985, %v1303
        %v1305 = vpop.f32.mrf.mxu0
        %1306 = vmatprep.mubr.f32.mxu0 0.0
        %v1307 = vand.u32 %v1007, 4294901760
        %v1308 = vsub.f32 %v1007, %v1307
        %v1309 = vand.u32 %v1308, 4294901760
        %v1310 = vsub.f32 %v1308, %v1309
        %v1311 = vand.u32 %v1310, 4294901760
        %1312 = vmatmul.mubr.f32.gmra.mxu0 %v1311
        %v1313 = vpop.f32.mrf.mxu0
        %v1314 = vadd.f32 %v985, %v1313
        %v1315 = vpop.f32.mrf.mxu0
        %1316 = vmatprep.mubr.f32.mxu0 0.0
        %v1317 = vand.u32 %v1010, 4294901760
        %v1318 = vsub.f32 %v1010, %v1317
        %v1319 = vand.u32 %v1318, 4294901760
        %v1320 = vsub.f32 %v1318, %v1319
        %v1321 = vand.u32 %v1320, 4294901760
        %1322 = vmatmul.mubr.f32.gmra.mxu0 %v1321
        %v1323 = vpop.f32.mrf.mxu0
        %v1324 = vadd.f32 %v985, %v1323
        %v1325 = vpop.f32.mrf.mxu0
        %1326 = vmatprep.mubr.f32.mxu0 0.0
        %v1327 = vand.u32 %v1013, 4294901760
        %v1328 = vsub.f32 %v1013, %v1327
        %v1329 = vand.u32 %v1328, 4294901760
        %v1330 = vsub.f32 %v1328, %v1329
        %v1331 = vand.u32 %v1330, 4294901760
        %1332 = vmatmul.mubr.f32.gmra.mxu0 %v1331
        %v1333 = vpop.f32.mrf.mxu0
        %v1334 = vadd.f32 %v985, %v1333
        %v1335 = vpop.f32.mrf.mxu0
        %1336 = vmatprep.mubr.f32.mxu0 0.0
        %v1337 = vand.u32 %v1016, 4294901760
        %v1338 = vsub.f32 %v1016, %v1337
        %v1339 = vand.u32 %v1338, 4294901760
        %v1340 = vsub.f32 %v1338, %v1339
        %v1341 = vand.u32 %v1340, 4294901760
        %1342 = vmatmul.mubr.f32.gmra.mxu0 %v1341
        %v1343 = vpop.f32.mrf.mxu0
        %v1344 = vadd.f32 %v985, %v1343
        %v1345 = vpop.f32.mrf.mxu0
        %1346 = vmatprep.mubr.f32.mxu0 0.0
        %v1347 = vand.u32 %v1019, 4294901760
        %v1348 = vsub.f32 %v1019, %v1347
        %v1349 = vand.u32 %v1348, 4294901760
        %v1350 = vsub.f32 %v1348, %v1349
        %v1351 = vand.u32 %v1350, 4294901760
        %1352 = vmatmul.mubr.f32.gmra.mxu0 %v1351
        %v1353 = vpop.f32.mrf.mxu0
        %v1354 = vadd.f32 %v985, %v1353
        %v1355 = vpop.f32.mrf.mxu0
        %1356 = vmatprep.mubr.f32.mxu0 0.0
        %v1357 = vand.u32 %v1022, 4294901760
        %v1358 = vsub.f32 %v1022, %v1357
        %v1359 = vand.u32 %v1358, 4294901760
        %v1360 = vsub.f32 %v1358, %v1359
        %v1361 = vand.u32 %v1360, 4294901760
        %1362 = vmatmul.mubr.f32.gmra.mxu0 %v1361
        %v1363 = vpop.f32.mrf.mxu0
        %v1364 = vadd.f32 %v985, %v1363
        %v1365 = vpop.f32.mrf.mxu0
        %1366 = vmatprep.mubr.f32.mxu0 0.0
        %v1367 = vand.u32 %v1025, 4294901760
        %v1368 = vsub.f32 %v1025, %v1367
        %v1369 = vand.u32 %v1368, 4294901760
        %v1370 = vsub.f32 %v1368, %v1369
        %v1371 = vand.u32 %v1370, 4294901760
        %1372 = vmatmul.mubr.f32.gmra.mxu0 %v1371
        %v1373 = vpop.f32.mrf.mxu0
        %v1374 = vadd.f32 %v985, %v1373
        %v1375 = vpop.f32.mrf.mxu0
        %1376 = vmatprep.mubr.f32.mxu0 0.0
        %v1377 = vand.u32 %v1028, 4294901760
        %v1378 = vsub.f32 %v1028, %v1377
        %v1379 = vand.u32 %v1378, 4294901760
        %v1380 = vsub.f32 %v1378, %v1379
        %v1381 = vand.u32 %v1380, 4294901760
        %1382 = vmatmul.mubr.f32.gmra.mxu0 %v1381
        %v1383 = vpop.f32.mrf.mxu0
        %v1384 = vadd.f32 %v985, %v1383
        %v1385 = vpop.f32.mrf.mxu0
        %1386 = vmatprep.mubr.f32.mxu0 0.0
        %v1387 = vand.u32 %v1031, 4294901760
        %v1388 = vsub.f32 %v1031, %v1387
        %v1389 = vand.u32 %v1388, 4294901760
        %v1390 = vsub.f32 %v1388, %v1389
        %v1391 = vand.u32 %v1390, 4294901760
        %1392 = vmatmul.mubr.f32.gmra.mxu0 %v1391
        %v1393 = vpop.f32.mrf.mxu0
        %v1394 = vadd.f32 %v985, %v1393
        %v1395 = vpop.f32.mrf.mxu0
        %1396 = vmatprep.mubr.f32.mxu0 0.0
        %v1397 = vand.u32 %v1034, 4294901760
        %v1398 = vsub.f32 %v1034, %v1397
        %v1399 = vand.u32 %v1398, 4294901760
        %v1400 = vsub.f32 %v1398, %v1399
        %v1401 = vand.u32 %v1400, 4294901760
        %1402 = vmatmul.mubr.f32.gmra.mxu0 %v1401
        %v1403 = vpop.f32.mrf.mxu0
        %v1404 = vadd.f32 %v985, %v1403
        %v1405 = vpop.f32.mrf.mxu0
        %1406 = vmatprep.mubr.f32.mxu0 0.0
        %v1407 = vand.u32 %v1037, 4294901760
        %v1408 = vsub.f32 %v1037, %v1407
        %v1409 = vand.u32 %v1408, 4294901760
        %v1410 = vsub.f32 %v1408, %v1409
        %v1411 = vand.u32 %v1410, 4294901760
        %1412 = vmatmul.mubr.f32.gmra.mxu0 %v1411
        %v1413 = vpop.f32.mrf.mxu0
        %v1414 = vadd.f32 %v985, %v1413
        %v1415 = vpop.f32.mrf.mxu0
        %1416 = vmatprep.mubr.f32.mxu0 0.0
        %v1417 = vand.u32 %v1040, 4294901760
        %v1418 = vsub.f32 %v1040, %v1417
        %v1419 = vand.u32 %v1418, 4294901760
        %v1420 = vsub.f32 %v1418, %v1419
        %v1421 = vand.u32 %v1420, 4294901760
        %1422 = vmatmul.mubr.f32.gmra.mxu0 %v1421
        %v1423 = vpop.f32.mrf.mxu0
        %v1424 = vadd.f32 %v985, %v1423
        %v1425 = vpop.f32.mrf.mxu0
        %1426 = vmatprep.mubr.f32.mxu0 0.0
        %v1427 = vand.u32 %v1043, 4294901760
        %v1428 = vsub.f32 %v1043, %v1427
        %v1429 = vand.u32 %v1428, 4294901760
        %v1430 = vsub.f32 %v1428, %v1429
        %v1431 = vand.u32 %v1430, 4294901760
        %1432 = vmatmul.mubr.f32.gmra.mxu0 %v1431
        %v1433 = vpop.f32.mrf.mxu0
        %v1434 = vadd.f32 %v985, %v1433
        %v1435 = vpop.f32.mrf.mxu0
        %1436 = vmatprep.mubr.f32.mxu0 0.0
        %v1437 = vand.u32 %v1046, 4294901760
        %v1438 = vsub.f32 %v1046, %v1437
        %v1439 = vand.u32 %v1438, 4294901760
        %v1440 = vsub.f32 %v1438, %v1439
        %v1441 = vand.u32 %v1440, 4294901760
        %1442 = vmatmul.mubr.f32.gmra.mxu0 %v1441
        %v1443 = vpop.f32.mrf.mxu0
        %v1444 = vadd.f32 %v985, %v1443
        %v1445 = vpop.f32.mrf.mxu0
        %1446 = vmatprep.mubr.f32.mxu0 0.0
        %v1447 = vand.u32 %v1049, 4294901760
        %v1448 = vsub.f32 %v1049, %v1447
        %v1449 = vand.u32 %v1448, 4294901760
        %v1450 = vsub.f32 %v1448, %v1449
        %v1451 = vand.u32 %v1450, 4294901760
        %1452 = vmatmul.mubr.f32.gmra.mxu0 %v1451
        %v1453 = vpop.f32.mrf.mxu0
        %v1454 = vadd.f32 %v985, %v1453
        %v1455 = vpop.f32.mrf.mxu0
        %1456 = vmatprep.mubr.f32.mxu0 0.0
        %v1457 = vand.u32 %v1052, 4294901760
        %v1458 = vsub.f32 %v1052, %v1457
        %v1459 = vand.u32 %v1458, 4294901760
        %v1460 = vsub.f32 %v1458, %v1459
        %v1461 = vand.u32 %v1460, 4294901760
        %1462 = vmatmul.mubr.f32.gmra.mxu0 %v1461
        %v1463 = vpop.f32.mrf.mxu0
        %v1464 = vadd.f32 %v985, %v1463
        %v1465 = vpop.f32.mrf.mxu0
        %1466 = vmatprep.mubr.f32.mxu0 0.0
        %v1467 = vand.u32 %v1055, 4294901760
        %v1468 = vsub.f32 %v1055, %v1467
        %v1469 = vand.u32 %v1468, 4294901760
        %v1470 = vsub.f32 %v1468, %v1469
        %v1471 = vand.u32 %v1470, 4294901760
        %1472 = vmatmul.mubr.f32.gmra.mxu0 %v1471
        %v1473 = vpop.f32.mrf.mxu0
        %v1474 = vadd.f32 %v985, %v1473
        %v1475 = vpop.f32.mrf.mxu0
        %1476 = vmatprep.mubr.f32.mxu0 0.0
        %v1477 = vand.u32 %v1058, 4294901760
        %v1478 = vsub.f32 %v1058, %v1477
        %v1479 = vand.u32 %v1478, 4294901760
        %v1480 = vsub.f32 %v1478, %v1479
        %v1481 = vand.u32 %v1480, 4294901760
        %1482 = vmatmul.mubr.f32.gmra.mxu0 %v1481
        %v1483 = vpop.f32.mrf.mxu0
        %v1484 = vadd.f32 %v985, %v1483
        %v1485 = vpop.f32.mrf.mxu0
        %1486 = vmatprep.mubr.f32.mxu0 0.0
        %v1487 = vand.u32 %v1061, 4294901760
        %v1488 = vsub.f32 %v1061, %v1487
        %v1489 = vand.u32 %v1488, 4294901760
        %v1490 = vsub.f32 %v1488, %v1489
        %v1491 = vand.u32 %v1490, 4294901760
        %1492 = vmatmul.mubr.f32.gmra.mxu0 %v1491
        %v1493 = vpop.f32.mrf.mxu0
        %v1494 = vadd.f32 %v985, %v1493
        %v1495 = vpop.f32.mrf.mxu0
        %1496 = vmatprep.mubr.f32.mxu0 0.0
        %v1497 = vand.u32 %v1064, 4294901760
        %v1498 = vsub.f32 %v1064, %v1497
        %v1499 = vand.u32 %v1498, 4294901760
        %v1500 = vsub.f32 %v1498, %v1499
        %v1501 = vand.u32 %v1500, 4294901760
        %1502 = vmatmul.mubr.f32.gmra.mxu0 %v1501
        %v1503 = vpop.f32.mrf.mxu0
        %v1504 = vadd.f32 %v985, %v1503
        %v1505 = vpop.f32.mrf.mxu0
        %1506 = vmatprep.mubr.f32.mxu0 0.0
        %v1507 = vand.u32 %v1067, 4294901760
        %v1508 = vsub.f32 %v1067, %v1507
        %v1509 = vand.u32 %v1508, 4294901760
        %v1510 = vsub.f32 %v1508, %v1509
        %v1511 = vand.u32 %v1510, 4294901760
        %1512 = vmatmul.mubr.f32.gmra.mxu0 %v1511
        %v1513 = vpop.f32.mrf.mxu0
        %v1514 = vadd.f32 %v985, %v1513
        %v1515 = vpop.f32.mrf.mxu0
        %1516 = vmatprep.mubr.f32.mxu0 0.0
        %v1517 = vand.u32 %v1070, 4294901760
        %v1518 = vsub.f32 %v1070, %v1517
        %v1519 = vand.u32 %v1518, 4294901760
        %v1520 = vsub.f32 %v1518, %v1519
        %v1521 = vand.u32 %v1520, 4294901760
        %1522 = vmatmul.mubr.f32.gmra.mxu0 %v1521
        %v1523 = vpop.f32.mrf.mxu0
        %v1524 = vadd.f32 %v985, %v1523
        %v1525 = vpop.f32.mrf.mxu0
        %1526 = vmatprep.mubr.f32.mxu0 0.0
        %v1527 = vand.u32 %v1073, 4294901760
        %v1528 = vsub.f32 %v1073, %v1527
        %v1529 = vand.u32 %v1528, 4294901760
        %v1530 = vsub.f32 %v1528, %v1529
        %v1531 = vand.u32 %v1530, 4294901760
        %1532 = vmatmul.mubr.f32.gmra.mxu0 %v1531
        %v1533 = vpop.f32.mrf.mxu0
        %v1534 = vadd.f32 %v985, %v1533
        %v1535 = vpop.f32.mrf.mxu0
        %1536 = vmatprep.mubr.f32.mxu0 0.0
        %v1537 = vand.u32 %v1076, 4294901760
        %v1538 = vsub.f32 %v1076, %v1537
        %v1539 = vand.u32 %v1538, 4294901760
        %v1540 = vsub.f32 %v1538, %v1539
        %v1541 = vand.u32 %v1540, 4294901760
        %1542 = vmatmul.mubr.f32.gmra.mxu0 %v1541
        %v1543 = vpop.f32.mrf.mxu0
        %v1544 = vadd.f32 %v985, %v1543
        %v1545 = vpop.f32.mrf.mxu0
        %1546 = vmatprep.mubr.f32.mxu0 0.0
        %v1547 = vand.u32 %v1079, 4294901760
        %v1548 = vsub.f32 %v1079, %v1547
        %v1549 = vand.u32 %v1548, 4294901760
        %v1550 = vsub.f32 %v1548, %v1549
        %v1551 = vand.u32 %v1550, 4294901760
        %1552 = vmatmul.mubr.f32.gmra.mxu0 %v1551
        %v1553 = vpop.f32.mrf.mxu0
        %v1554 = vadd.f32 %v985, %v1553
        %v1555 = vpop.f32.mrf.mxu0
        %1556 = vmatprep.mubr.f32.mxu0 0.0
        %v1557 = vand.u32 %v1082, 4294901760
        %v1558 = vsub.f32 %v1082, %v1557
        %v1559 = vand.u32 %v1558, 4294901760
        %v1560 = vsub.f32 %v1558, %v1559
        %v1561 = vand.u32 %v1560, 4294901760
        %1562 = vmatmul.mubr.f32.gmra.mxu0 %v1561
        %v1563 = vpop.f32.mrf.mxu0
        %v1564 = vadd.f32 %v985, %v1563
        %v1565 = vpop.f32.mrf.mxu0
        %1566 = vmatprep.mubr.f32.mxu0 0.0
        %v1567 = vand.u32 %v1085, 4294901760
        %v1568 = vsub.f32 %v1085, %v1567
        %v1569 = vand.u32 %v1568, 4294901760
        %v1570 = vsub.f32 %v1568, %v1569
        %v1571 = vand.u32 %v1570, 4294901760
        %1572 = vmatmul.mubr.f32.gmra.mxu0 %v1571
        %v1573 = vpop.f32.mrf.mxu0
        %v1574 = vadd.f32 %v985, %v1573
        %v1575 = vpop.f32.mrf.mxu0
        %1576 = vmatprep.mubr.f32.mxu0 0.0
        %v1577 = vand.u32 %v1088, 4294901760
        %v1578 = vsub.f32 %v1088, %v1577
        %v1579 = vand.u32 %v1578, 4294901760
        %v1580 = vsub.f32 %v1578, %v1579
        %v1581 = vand.u32 %v1580, 4294901760
        %1582 = vmatmul.mubr.f32.gmra.mxu0 %v1581
        %v1583 = vpop.f32.mrf.mxu0
        %v1584 = vadd.f32 %v985, %v1583
        %v1585 = vpop.f32.mrf.mxu0
        %1586 = vmatprep.mubr.f32.mxu0 0.0
        %v1587 = vand.u32 %v1091, 4294901760
        %v1588 = vsub.f32 %v1091, %v1587
        %v1589 = vand.u32 %v1588, 4294901760
        %v1590 = vsub.f32 %v1588, %v1589
        %v1591 = vand.u32 %v1590, 4294901760
        %1592 = vmatmul.mubr.f32.gmra.mxu0 %v1591
        %v1593 = vpop.f32.mrf.mxu0
        %v1594 = vadd.f32 %v985, %v1593
        %v1595 = vpop.f32.mrf.mxu0
        %1596 = vmatprep.mubr.f32.mxu0 0.0
        %v1597 = vand.u32 %v1094, 4294901760
        %v1598 = vsub.f32 %v1094, %v1597
        %v1599 = vand.u32 %v1598, 4294901760
        %v1600 = vsub.f32 %v1598, %v1599
        %v1601 = vand.u32 %v1600, 4294901760
        %1602 = vmatmul.mubr.f32.gmra.mxu0 %v1601
        %v1603 = vpop.f32.mrf.mxu0
        %v1604 = vadd.f32 %v985, %v1603
        %v1605 = vpop.f32.mrf.mxu0
        %1606 = vmatprep.mubr.f32.mxu0 0.0
        %v1607 = vand.u32 %v1097, 4294901760
        %v1608 = vsub.f32 %v1097, %v1607
        %v1609 = vand.u32 %v1608, 4294901760
        %v1610 = vsub.f32 %v1608, %v1609
        %v1611 = vand.u32 %v1610, 4294901760
        %1612 = vmatmul.mubr.f32.gmra.mxu0 %v1611
        %v1613 = vpop.f32.mrf.mxu0
        %v1614 = vadd.f32 %v985, %v1613
        %v1615 = vpop.f32.mrf.mxu0
        %1616 = vmatprep.mubr.f32.mxu0 0.0
        %v1617 = vand.u32 %v1100, 4294901760
        %v1618 = vsub.f32 %v1100, %v1617
        %v1619 = vand.u32 %v1618, 4294901760
        %v1620 = vsub.f32 %v1618, %v1619
        %v1621 = vand.u32 %v1620, 4294901760
        %1622 = vmatmul.mubr.f32.gmra.mxu0 %v1621
        %v1623 = vpop.f32.mrf.mxu0
        %v1624 = vadd.f32 %v985, %v1623
        %v1625 = vpop.f32.mrf.mxu0
        %1626 = vmatprep.mubr.f32.mxu0 0.0
        %v1627 = vand.u32 %v1103, 4294901760
        %v1628 = vsub.f32 %v1103, %v1627
        %v1629 = vand.u32 %v1628, 4294901760
        %v1630 = vsub.f32 %v1628, %v1629
        %v1631 = vand.u32 %v1630, 4294901760
        %1632 = vmatmul.mubr.f32.gmra.mxu0 %v1631
        %v1633 = vpop.f32.mrf.mxu0
        %v1634 = vadd.f32 %v985, %v1633
        %v1635 = vpop.f32.mrf.mxu0
        %1636 = vmatprep.mubr.f32.mxu0 0.0
        %v1637 = vand.u32 %v1106, 4294901760
        %v1638 = vsub.f32 %v1106, %v1637
        %v1639 = vand.u32 %v1638, 4294901760
        %v1640 = vsub.f32 %v1638, %v1639
        %v1641 = vand.u32 %v1640, 4294901760
        %1642 = vmatmul.mubr.f32.gmra.mxu0 %v1641
        %v1643 = vpop.f32.mrf.mxu0
        %v1644 = vadd.f32 %v985, %v1643
        %v1645 = vpop.f32.mrf.mxu0
        %1646 = vmatprep.mubr.f32.mxu0 0.0
        %v1647 = vand.u32 %v1109, 4294901760
        %v1648 = vsub.f32 %v1109, %v1647
        %v1649 = vand.u32 %v1648, 4294901760
        %v1650 = vsub.f32 %v1648, %v1649
        %v1651 = vand.u32 %v1650, 4294901760
        %1652 = vmatmul.mubr.f32.gmra.mxu0 %v1651
        %v1653 = vpop.f32.mrf.mxu0
        %v1654 = vadd.f32 %v985, %v1653
        %v1655 = vpop.f32.mrf.mxu0
        %1656 = vmatprep.mubr.f32.mxu0 0.0
        %v1657 = vand.u32 %v1112, 4294901760
        %v1658 = vsub.f32 %v1112, %v1657
        %v1659 = vand.u32 %v1658, 4294901760
        %v1660 = vsub.f32 %v1658, %v1659
        %v1661 = vand.u32 %v1660, 4294901760
        %1662 = vmatmul.mubr.f32.gmra.mxu0 %v1661
        %v1663 = vpop.f32.mrf.mxu0
        %v1664 = vadd.f32 %v985, %v1663
        %v1665 = vpop.f32.mrf.mxu0
        %1666 = vmatprep.mubr.f32.mxu0 0.0
        %v1667 = vand.u32 %v1115, 4294901760
        %v1668 = vsub.f32 %v1115, %v1667
        %v1669 = vand.u32 %v1668, 4294901760
        %v1670 = vsub.f32 %v1668, %v1669
        %v1671 = vand.u32 %v1670, 4294901760
        %1672 = vmatmul.mubr.f32.gmra.mxu0 %v1671
        %v1673 = vpop.f32.mrf.mxu0
        %v1674 = vadd.f32 %v985, %v1673
        %v1675 = vpop.f32.mrf.mxu0
        %1676 = vmatprep.mubr.f32.mxu0 0.0
        %v1677 = vand.u32 %v1118, 4294901760
        %v1678 = vsub.f32 %v1118, %v1677
        %v1679 = vand.u32 %v1678, 4294901760
        %v1680 = vsub.f32 %v1678, %v1679
        %v1681 = vand.u32 %v1680, 4294901760
        %1682 = vmatmul.mubr.f32.gmra.mxu0 %v1681
        %v1683 = vpop.f32.mrf.mxu0
        %v1684 = vadd.f32 %v985, %v1683
        %v1685 = vpop.f32.mrf.mxu0
        %1686 = vmatprep.mubr.f32.mxu0 0.0
        %v1687 = vand.u32 %v1121, 4294901760
        %v1688 = vsub.f32 %v1121, %v1687
        %v1689 = vand.u32 %v1688, 4294901760
        %v1690 = vsub.f32 %v1688, %v1689
        %v1691 = vand.u32 %v1690, 4294901760
        %1692 = vmatmul.mubr.f32.gmra.mxu0 %v1691
        %v1693 = vpop.f32.mrf.mxu0
        %v1694 = vadd.f32 %v985, %v1693
        %v1695 = vpop.f32.mrf.mxu0
        %1696 = vmatprep.mubr.f32.mxu0 0.0
        %v1697 = vand.u32 %v1124, 4294901760
        %v1698 = vsub.f32 %v1124, %v1697
        %v1699 = vand.u32 %v1698, 4294901760
        %v1700 = vsub.f32 %v1698, %v1699
        %v1701 = vand.u32 %v1700, 4294901760
        %1702 = vmatmul.mubr.f32.gmra.mxu0 %v1701
        %v1703 = vpop.f32.mrf.mxu0
        %v1704 = vadd.f32 %v985, %v1703
        %v1705 = vpop.f32.mrf.mxu0
        %1706 = vmatprep.mubr.f32.mxu0 0.0
        %v1707 = vand.u32 %v1127, 4294901760
        %v1708 = vsub.f32 %v1127, %v1707
        %v1709 = vand.u32 %v1708, 4294901760
        %v1710 = vsub.f32 %v1708, %v1709
        %v1711 = vand.u32 %v1710, 4294901760
        %1712 = vmatmul.mubr.f32.gmra.mxu0 %v1711
        %v1713 = vpop.f32.mrf.mxu0
        %v1714 = vadd.f32 %v985, %v1713
        %v1715 = vpop.f32.mrf.mxu0
        %1716 = vmatprep.mubr.f32.mxu0 0.0
        %v1717 = vand.u32 %v1130, 4294901760
        %v1718 = vsub.f32 %v1130, %v1717
        %v1719 = vand.u32 %v1718, 4294901760
        %v1720 = vsub.f32 %v1718, %v1719
        %v1721 = vand.u32 %v1720, 4294901760
        %1722 = vmatmul.mubr.f32.gmra.mxu0 %v1721
        %v1723 = vpop.f32.mrf.mxu0
        %v1724 = vadd.f32 %v985, %v1723
        %v1725 = vpop.f32.mrf.mxu0
        %1726 = vmatprep.mubr.f32.mxu0 0.0
        %v1727 = vand.u32 %v1133, 4294901760
        %v1728 = vsub.f32 %v1133, %v1727
        %v1729 = vand.u32 %v1728, 4294901760
        %v1730 = vsub.f32 %v1728, %v1729
        %v1731 = vand.u32 %v1730, 4294901760
        %1732 = vmatmul.mubr.f32.gmra.mxu0 %v1731
        %v1733 = vpop.f32.mrf.mxu0
        %v1734 = vadd.f32 %v985, %v1733
        %v1735 = vpop.f32.mrf.mxu0
        %1736 = vmatprep.mubr.f32.mxu0 0.0
        %v1737 = vand.u32 %v1136, 4294901760
        %v1738 = vsub.f32 %v1136, %v1737
        %v1739 = vand.u32 %v1738, 4294901760
        %v1740 = vsub.f32 %v1738, %v1739
        %v1741 = vand.u32 %v1740, 4294901760
        %1742 = vmatmul.mubr.f32.gmra.mxu0 %v1741
        %v1743 = vpop.f32.mrf.mxu0
        %v1744 = vadd.f32 %v985, %v1743
        %v1745 = vpop.f32.mrf.mxu0
        %1746 = vmatprep.mubr.f32.mxu0 0.0
        %v1747 = vand.u32 %v1139, 4294901760
        %v1748 = vsub.f32 %v1139, %v1747
        %v1749 = vand.u32 %v1748, 4294901760
        %v1750 = vsub.f32 %v1748, %v1749
        %v1751 = vand.u32 %v1750, 4294901760
        %1752 = vmatmul.mubr.f32.gmra.mxu0 %v1751
        %v1753 = vpop.f32.mrf.mxu0
        %v1754 = vadd.f32 %v985, %v1753
        %v1755 = vpop.f32.mrf.mxu0
        %1756 = vmatprep.mubr.f32.mxu0 0.0
        %v1757 = vand.u32 %v1142, 4294901760
        %v1758 = vsub.f32 %v1142, %v1757
        %v1759 = vand.u32 %v1758, 4294901760
        %v1760 = vsub.f32 %v1758, %v1759
        %v1761 = vand.u32 %v1760, 4294901760
        %1762 = vmatmul.mubr.f32.gmra.mxu0 %v1761
        %v1763 = vpop.f32.mrf.mxu0
        %v1764 = vadd.f32 %v985, %v1763
        %v1765 = vpop.f32.mrf.mxu0
        %1766 = vmatprep.mubr.f32.mxu0 0.0
        %v1767 = vand.u32 %v1145, 4294901760
        %v1768 = vsub.f32 %v1145, %v1767
        %v1769 = vand.u32 %v1768, 4294901760
        %v1770 = vsub.f32 %v1768, %v1769
        %v1771 = vand.u32 %v1770, 4294901760
        %1772 = vmatmul.mubr.f32.gmra.mxu0 %v1771
        %v1773 = vpop.f32.mrf.mxu0
        %v1774 = vadd.f32 %v985, %v1773
        %v1775 = vpop.f32.mrf.mxu0
        %1776 = vmatprep.mubr.f32.mxu0 0.0
        %v1777 = vand.u32 %v1148, 4294901760
        %v1778 = vsub.f32 %v1148, %v1777
        %v1779 = vand.u32 %v1778, 4294901760
        %v1780 = vsub.f32 %v1778, %v1779
        %v1781 = vand.u32 %v1780, 4294901760
        %1782 = vmatmul.mubr.f32.gmra.mxu0 %v1781
        %v1783 = vpop.f32.mrf.mxu0
        %v1784 = vadd.f32 %v985, %v1783
        %v1785 = vpop.f32.mrf.mxu0
        %1786 = vmatprep.mubr.f32.mxu0 0.0
        %v1787 = vand.u32 %v1151, 4294901760
        %v1788 = vsub.f32 %v1151, %v1787
        %v1789 = vand.u32 %v1788, 4294901760
        %v1790 = vsub.f32 %v1788, %v1789
        %v1791 = vand.u32 %v1790, 4294901760
        %1792 = vmatmul.mubr.f32.gmra.mxu0 %v1791
        %v1793 = vpop.f32.mrf.mxu0
        %v1794 = vadd.f32 %v985, %v1793
        %v1795 = vpop.f32.mrf.mxu0
        %1796 = vmatprep.mubr.f32.mxu0 0.0
        %v1797 = vand.u32 %v1154, 4294901760
        %v1798 = vsub.f32 %v1154, %v1797
        %v1799 = vand.u32 %v1798, 4294901760
        %v1800 = vsub.f32 %v1798, %v1799
        %v1801 = vand.u32 %v1800, 4294901760
        %1802 = vmatmul.mubr.f32.gmra.mxu0 %v1801
        %v1803 = vpop.f32.mrf.mxu0
        %v1804 = vadd.f32 %v985, %v1803
        %v1805 = vpop.f32.mrf.mxu0
        %1806 = vmatprep.mubr.f32.mxu0 0.0
        %v1807 = vand.u32 %v1157, 4294901760
        %v1808 = vsub.f32 %v1157, %v1807
        %v1809 = vand.u32 %v1808, 4294901760
        %v1810 = vsub.f32 %v1808, %v1809
        %v1811 = vand.u32 %v1810, 4294901760
        %1812 = vmatmul.mubr.f32.gmra.mxu0 %v1811
        %v1813 = vpop.f32.mrf.mxu0
        %v1814 = vadd.f32 %v985, %v1813
        %v1815 = vpop.f32.mrf.mxu0
        %1816 = vmatprep.mubr.f32.mxu0 0.0
        %v1817 = vand.u32 %v1160, 4294901760
        %v1818 = vsub.f32 %v1160, %v1817
        %v1819 = vand.u32 %v1818, 4294901760
        %v1820 = vsub.f32 %v1818, %v1819
        %v1821 = vand.u32 %v1820, 4294901760
        %1822 = vmatmul.mubr.f32.gmra.mxu0 %v1821
        %v1823 = vpop.f32.mrf.mxu0
        %v1824 = vadd.f32 %v985, %v1823
        %v1825 = vpop.f32.mrf.mxu0
        %1826 = vmatprep.mubr.f32.mxu0 0.0
        %v1827 = vand.u32 %v1163, 4294901760
        %v1828 = vsub.f32 %v1163, %v1827
        %v1829 = vand.u32 %v1828, 4294901760
        %v1830 = vsub.f32 %v1828, %v1829
        %v1831 = vand.u32 %v1830, 4294901760
        %1832 = vmatmul.mubr.f32.gmra.mxu0 %v1831
        %v1833 = vpop.f32.mrf.mxu0
        %v1834 = vadd.f32 %v985, %v1833
        %v1835 = vpop.f32.mrf.mxu0
        %1836 = vmatprep.mubr.f32.mxu0 0.0
        %v1837 = vand.u32 %v1166, 4294901760
        %v1838 = vsub.f32 %v1166, %v1837
        %v1839 = vand.u32 %v1838, 4294901760
        %v1840 = vsub.f32 %v1838, %v1839
        %v1841 = vand.u32 %v1840, 4294901760
        %1842 = vmatmul.mubr.f32.gmra.mxu0 %v1841
        %v1843 = vpop.f32.mrf.mxu0
        %v1844 = vadd.f32 %v985, %v1843
        %v1845 = vpop.f32.mrf.mxu0
        %1846 = vmatprep.mubr.f32.mxu0 0.0
        %v1847 = vand.u32 %v1169, 4294901760
        %v1848 = vsub.f32 %v1169, %v1847
        %v1849 = vand.u32 %v1848, 4294901760
        %v1850 = vsub.f32 %v1848, %v1849
        %v1851 = vand.u32 %v1850, 4294901760
        %1852 = vmatmul.mubr.f32.gmra.mxu0 %v1851
        %v1853 = vpop.f32.mrf.mxu0
        %v1854 = vadd.f32 %v985, %v1853
        %v1855 = vpop.f32.mrf.mxu0
        %1856 = vmatprep.mubr.f32.mxu0 0.0
        %v1857 = vand.u32 %v1172, 4294901760
        %v1858 = vsub.f32 %v1172, %v1857
        %v1859 = vand.u32 %v1858, 4294901760
        %v1860 = vsub.f32 %v1858, %v1859
        %v1861 = vand.u32 %v1860, 4294901760
        %1862 = vmatmul.mubr.f32.gmra.mxu0 %v1861
        %v1863 = vpop.f32.mrf.mxu0
        %v1864 = vadd.f32 %v985, %v1863
        %v1865 = vpop.f32.mrf.mxu0
        %1866 = vmatprep.mubr.f32.mxu0 0.0
        %v1867 = vand.u32 %v1175, 4294901760
        %v1868 = vsub.f32 %v1175, %v1867
        %v1869 = vand.u32 %v1868, 4294901760
        %v1870 = vsub.f32 %v1868, %v1869
        %v1871 = vand.u32 %v1870, 4294901760
        %1872 = vmatmul.mubr.f32.gmra.mxu0 %v1871
        %v1873 = vpop.f32.mrf.mxu0
        %v1874 = vadd.f32 %v985, %v1873
        %v1875 = vpop.f32.mrf.mxu0
        %1876 = vmatprep.mubr.f32.mxu0 0.0
        %v1877 = vand.u32 %v1178, 4294901760
        %v1878 = vsub.f32 %v1178, %v1877
        %v1879 = vand.u32 %v1878, 4294901760
        %v1880 = vsub.f32 %v1878, %v1879
        %v1881 = vand.u32 %v1880, 4294901760
        %1882 = vmatmul.mubr.f32.gmra.mxu0 %v1881
        %v1883 = vpop.f32.mrf.mxu0
        %v1884 = vadd.f32 %v985, %v1883
        %v1885 = vpop.f32.mrf.mxu0
        %1886 = vdwg.mxu0
        %1887 = vmatprep.subr.mxu0 0.0
        %1888 = vmatpush1.msra.mxu0 0.0
        %1889 = vmatprep.subr.mxu0 0.0
        %1890 = vmatpush1.msra.mxu0 0.0
        %1891 = vmatprep.subr.mxu0 0.0
        %1892 = vmatpush1.msra.mxu0 0.0
        %1893 = vmatprep.subr.mxu0 0.0
        %1894 = vmatpush1.msra.mxu0 0.0
        %1895 = vmatprep.subr.mxu0 0.0
        %1896 = vmatpush1.msra.mxu0 0.0
        %1897 = vmatprep.subr.mxu0 0.0
        %1898 = vmatpush1.msra.mxu0 0.0
        %1899 = vmatprep.subr.mxu0 0.0
        %1900 = vmatpush1.msra.mxu0 0.0
        %1901 = vmatprep.subr.mxu0 0.0
        %1902 = vmatpush1.msra.mxu0 0.0
        %1903 = vmatprep.subr.mxu0 0.0
        %1904 = vmatpush1.msra.mxu0 0.0
        %1905 = vmatprep.subr.mxu0 0.0
        %1906 = vmatpush1.msra.mxu0 0.0
        %1907 = vmatprep.subr.mxu0 0.0
        %1908 = vmatpush1.msra.mxu0 0.0
        %1909 = vmatprep.subr.mxu0 0.0
        %1910 = vmatpush1.msra.mxu0 0.0
        %1911 = vmatprep.subr.mxu0 0.0
        %1912 = vmatpush1.msra.mxu0 0.0
        %1913 = vmatprep.subr.mxu0 0.0
        %1914 = vmatpush1.msra.mxu0 0.0
        %1915 = vmatprep.subr.mxu0 0.0
        %v1916 = vand.u32 %v979, 4294901760
        %v1917 = vsub.f32 %v979, %v1916
        %v1918 = vand.u32 %v1917, 4294901760
        %v1919 = vsub.f32 %v1917, %v1918
        %v1920 = vand.u32 %v1919, 4294901760
        %1921 = vmatpush1.msra.mxu0 %v1920
        %1922 = vmatprep.subr.mxu0 0.0
        %v1923 = vand.u32 %v978, 4294901760
        %v1924 = vsub.f32 %v978, %v1923
        %v1925 = vand.u32 %v1924, 4294901760
        %v1926 = vsub.f32 %v1924, %v1925
        %v1927 = vand.u32 %v1926, 4294901760
        %1928 = vmatpush1.msra.mxu0 %v1927
        %1929 = vmatprep.subr.mxu0 0.0
        %1930 = vmatpush2.msra.mxu0 0.0
        %1931 = vmatprep.subr.mxu0 0.0
        %1932 = vmatpush2.msra.mxu0 0.0
        %1933 = vmatprep.subr.mxu0 0.0
        %1934 = vmatpush2.msra.mxu0 0.0
        %1935 = vmatprep.subr.mxu0 0.0
        %1936 = vmatpush2.msra.mxu0 0.0
        %1937 = vmatprep.subr.mxu0 0.0
        %1938 = vmatpush2.msra.mxu0 0.0
        %1939 = vmatprep.subr.mxu0 0.0
        %1940 = vmatpush2.msra.mxu0 0.0
        %1941 = vmatprep.subr.mxu0 0.0
        %1942 = vmatpush2.msra.mxu0 0.0
        %1943 = vmatprep.subr.mxu0 0.0
        %1944 = vmatpush2.msra.mxu0 0.0
        %1945 = vmatprep.subr.mxu0 0.0
        %1946 = vmatpush2.msra.mxu0 0.0
        %1947 = vmatprep.subr.mxu0 0.0
        %1948 = vmatpush2.msra.mxu0 0.0
        %1949 = vmatprep.subr.mxu0 0.0
        %1950 = vmatpush2.msra.mxu0 0.0
        %1951 = vmatprep.subr.mxu0 0.0
        %1952 = vmatpush2.msra.mxu0 0.0
        %1953 = vmatprep.subr.mxu0 0.0
        %1954 = vmatpush2.msra.mxu0 0.0
        %1955 = vmatprep.subr.mxu0 0.0
        %1956 = vmatpush2.msra.mxu0 0.0
        %1957 = vmatprep.subr.mxu0 0.0
        %1958 = vmatpush2.msra.mxu0 0.0
        %1959 = vmatprep.subr.mxu0 0.0
        %1960 = vmatpush2.msra.mxu0 0.0
        %1961 = vmatprep.mubr.f32.mxu0 0.0
        %v1962 = vand.u32 %v989, 4294901760
        %1963 = vmatmul.mubr.f32.gmra.mxu0 %v1962
        %v1964 = vpop.f32.mrf.mxu0
        %v1965 = vadd.f32 %v1254, %v1964
        %v1966 = vpop.f32.mrf.mxu0
        %1967 = vmatprep.mubr.f32.mxu0 0.0
        %v1968 = vand.u32 %v992, 4294901760
        %1969 = vmatmul.mubr.f32.gmra.mxu0 %v1968
        %v1970 = vpop.f32.mrf.mxu0
        %v1971 = vadd.f32 %v1264, %v1970
        %v1972 = vpop.f32.mrf.mxu0
        %1973 = vmatprep.mubr.f32.mxu0 0.0
        %v1974 = vand.u32 %v995, 4294901760
        %1975 = vmatmul.mubr.f32.gmra.mxu0 %v1974
        %v1976 = vpop.f32.mrf.mxu0
        %v1977 = vadd.f32 %v1274, %v1976
        %v1978 = vpop.f32.mrf.mxu0
        %1979 = vmatprep.mubr.f32.mxu0 0.0
        %v1980 = vand.u32 %v998, 4294901760
        %1981 = vmatmul.mubr.f32.gmra.mxu0 %v1980
        %v1982 = vpop.f32.mrf.mxu0
        %v1983 = vadd.f32 %v1284, %v1982
        %v1984 = vpop.f32.mrf.mxu0
        %1985 = vmatprep.mubr.f32.mxu0 0.0
        %v1986 = vand.u32 %v1001, 4294901760
        %1987 = vmatmul.mubr.f32.gmra.mxu0 %v1986
        %v1988 = vpop.f32.mrf.mxu0
        %v1989 = vadd.f32 %v1294, %v1988
        %v1990 = vpop.f32.mrf.mxu0
        %1991 = vmatprep.mubr.f32.mxu0 0.0
        %v1992 = vand.u32 %v1004, 4294901760
        %1993 = vmatmul.mubr.f32.gmra.mxu0 %v1992
        %v1994 = vpop.f32.mrf.mxu0
        %v1995 = vadd.f32 %v1304, %v1994
        %v1996 = vpop.f32.mrf.mxu0
        %1997 = vmatprep.mubr.f32.mxu0 0.0
        %v1998 = vand.u32 %v1007, 4294901760
        %1999 = vmatmul.mubr.f32.gmra.mxu0 %v1998
        %v2000 = vpop.f32.mrf.mxu0
        %v2001 = vadd.f32 %v1314, %v2000
        %v2002 = vpop.f32.mrf.mxu0
        %2003 = vmatprep.mubr.f32.mxu0 0.0
        %v2004 = vand.u32 %v1010, 4294901760
        %2005 = vmatmul.mubr.f32.gmra.mxu0 %v2004
        %v2006 = vpop.f32.mrf.mxu0
        %v2007 = vadd.f32 %v1324, %v2006
        %v2008 = vpop.f32.mrf.mxu0
        %2009 = vmatprep.mubr.f32.mxu0 0.0
        %v2010 = vand.u32 %v1013, 4294901760
        %2011 = vmatmul.mubr.f32.gmra.mxu0 %v2010
        %v2012 = vpop.f32.mrf.mxu0
        %v2013 = vadd.f32 %v1334, %v2012
        %v2014 = vpop.f32.mrf.mxu0
        %2015 = vmatprep.mubr.f32.mxu0 0.0
        %v2016 = vand.u32 %v1016, 4294901760
        %2017 = vmatmul.mubr.f32.gmra.mxu0 %v2016
        %v2018 = vpop.f32.mrf.mxu0
        %v2019 = vadd.f32 %v1344, %v2018
        %v2020 = vpop.f32.mrf.mxu0
        %2021 = vmatprep.mubr.f32.mxu0 0.0
        %v2022 = vand.u32 %v1019, 4294901760
        %2023 = vmatmul.mubr.f32.gmra.mxu0 %v2022
        %v2024 = vpop.f32.mrf.mxu0
        %v2025 = vadd.f32 %v1354, %v2024
        %v2026 = vpop.f32.mrf.mxu0
        %2027 = vmatprep.mubr.f32.mxu0 0.0
        %v2028 = vand.u32 %v1022, 4294901760
        %2029 = vmatmul.mubr.f32.gmra.mxu0 %v2028
        %v2030 = vpop.f32.mrf.mxu0
        %v2031 = vadd.f32 %v1364, %v2030
        %v2032 = vpop.f32.mrf.mxu0
        %2033 = vmatprep.mubr.f32.mxu0 0.0
        %v2034 = vand.u32 %v1025, 4294901760
        %2035 = vmatmul.mubr.f32.gmra.mxu0 %v2034
        %v2036 = vpop.f32.mrf.mxu0
        %v2037 = vadd.f32 %v1374, %v2036
        %v2038 = vpop.f32.mrf.mxu0
        %2039 = vmatprep.mubr.f32.mxu0 0.0
        %v2040 = vand.u32 %v1028, 4294901760
        %2041 = vmatmul.mubr.f32.gmra.mxu0 %v2040
        %v2042 = vpop.f32.mrf.mxu0
        %v2043 = vadd.f32 %v1384, %v2042
        %v2044 = vpop.f32.mrf.mxu0
        %2045 = vmatprep.mubr.f32.mxu0 0.0
        %v2046 = vand.u32 %v1031, 4294901760
        %2047 = vmatmul.mubr.f32.gmra.mxu0 %v2046
        %v2048 = vpop.f32.mrf.mxu0
        %v2049 = vadd.f32 %v1394, %v2048
        %v2050 = vpop.f32.mrf.mxu0
        %2051 = vmatprep.mubr.f32.mxu0 0.0
        %v2052 = vand.u32 %v1034, 4294901760
        %2053 = vmatmul.mubr.f32.gmra.mxu0 %v2052
        %v2054 = vpop.f32.mrf.mxu0
        %v2055 = vadd.f32 %v1404, %v2054
        %v2056 = vpop.f32.mrf.mxu0
        %2057 = vmatprep.mubr.f32.mxu0 0.0
        %v2058 = vand.u32 %v1037, 4294901760
        %2059 = vmatmul.mubr.f32.gmra.mxu0 %v2058
        %v2060 = vpop.f32.mrf.mxu0
        %v2061 = vadd.f32 %v1414, %v2060
        %v2062 = vpop.f32.mrf.mxu0
        %2063 = vmatprep.mubr.f32.mxu0 0.0
        %v2064 = vand.u32 %v1040, 4294901760
        %2065 = vmatmul.mubr.f32.gmra.mxu0 %v2064
        %v2066 = vpop.f32.mrf.mxu0
        %v2067 = vadd.f32 %v1424, %v2066
        %v2068 = vpop.f32.mrf.mxu0
        %2069 = vmatprep.mubr.f32.mxu0 0.0
        %v2070 = vand.u32 %v1043, 4294901760
        %2071 = vmatmul.mubr.f32.gmra.mxu0 %v2070
        %v2072 = vpop.f32.mrf.mxu0
        %v2073 = vadd.f32 %v1434, %v2072
        %v2074 = vpop.f32.mrf.mxu0
        %2075 = vmatprep.mubr.f32.mxu0 0.0
        %v2076 = vand.u32 %v1046, 4294901760
        %2077 = vmatmul.mubr.f32.gmra.mxu0 %v2076
        %v2078 = vpop.f32.mrf.mxu0
        %v2079 = vadd.f32 %v1444, %v2078
        %v2080 = vpop.f32.mrf.mxu0
        %2081 = vmatprep.mubr.f32.mxu0 0.0
        %v2082 = vand.u32 %v1049, 4294901760
        %2083 = vmatmul.mubr.f32.gmra.mxu0 %v2082
        %v2084 = vpop.f32.mrf.mxu0
        %v2085 = vadd.f32 %v1454, %v2084
        %v2086 = vpop.f32.mrf.mxu0
        %2087 = vmatprep.mubr.f32.mxu0 0.0
        %v2088 = vand.u32 %v1052, 4294901760
        %2089 = vmatmul.mubr.f32.gmra.mxu0 %v2088
        %v2090 = vpop.f32.mrf.mxu0
        %v2091 = vadd.f32 %v1464, %v2090
        %v2092 = vpop.f32.mrf.mxu0
        %2093 = vmatprep.mubr.f32.mxu0 0.0
        %v2094 = vand.u32 %v1055, 4294901760
        %2095 = vmatmul.mubr.f32.gmra.mxu0 %v2094
        %v2096 = vpop.f32.mrf.mxu0
        %v2097 = vadd.f32 %v1474, %v2096
        %v2098 = vpop.f32.mrf.mxu0
        %2099 = vmatprep.mubr.f32.mxu0 0.0
        %v2100 = vand.u32 %v1058, 4294901760
        %2101 = vmatmul.mubr.f32.gmra.mxu0 %v2100
        %v2102 = vpop.f32.mrf.mxu0
        %v2103 = vadd.f32 %v1484, %v2102
        %v2104 = vpop.f32.mrf.mxu0
        %2105 = vmatprep.mubr.f32.mxu0 0.0
        %v2106 = vand.u32 %v1061, 4294901760
        %2107 = vmatmul.mubr.f32.gmra.mxu0 %v2106
        %v2108 = vpop.f32.mrf.mxu0
        %v2109 = vadd.f32 %v1494, %v2108
        %v2110 = vpop.f32.mrf.mxu0
        %2111 = vmatprep.mubr.f32.mxu0 0.0
        %v2112 = vand.u32 %v1064, 4294901760
        %2113 = vmatmul.mubr.f32.gmra.mxu0 %v2112
        %v2114 = vpop.f32.mrf.mxu0
        %v2115 = vadd.f32 %v1504, %v2114
        %v2116 = vpop.f32.mrf.mxu0
        %2117 = vmatprep.mubr.f32.mxu0 0.0
        %v2118 = vand.u32 %v1067, 4294901760
        %2119 = vmatmul.mubr.f32.gmra.mxu0 %v2118
        %v2120 = vpop.f32.mrf.mxu0
        %v2121 = vadd.f32 %v1514, %v2120
        %v2122 = vpop.f32.mrf.mxu0
        %2123 = vmatprep.mubr.f32.mxu0 0.0
        %v2124 = vand.u32 %v1070, 4294901760
        %2125 = vmatmul.mubr.f32.gmra.mxu0 %v2124
        %v2126 = vpop.f32.mrf.mxu0
        %v2127 = vadd.f32 %v1524, %v2126
        %v2128 = vpop.f32.mrf.mxu0
        %2129 = vmatprep.mubr.f32.mxu0 0.0
        %v2130 = vand.u32 %v1073, 4294901760
        %2131 = vmatmul.mubr.f32.gmra.mxu0 %v2130
        %v2132 = vpop.f32.mrf.mxu0
        %v2133 = vadd.f32 %v1534, %v2132
        %v2134 = vpop.f32.mrf.mxu0
        %2135 = vmatprep.mubr.f32.mxu0 0.0
        %v2136 = vand.u32 %v1076, 4294901760
        %2137 = vmatmul.mubr.f32.gmra.mxu0 %v2136
        %v2138 = vpop.f32.mrf.mxu0
        %v2139 = vadd.f32 %v1544, %v2138
        %v2140 = vpop.f32.mrf.mxu0
        %2141 = vmatprep.mubr.f32.mxu0 0.0
        %v2142 = vand.u32 %v1079, 4294901760
        %2143 = vmatmul.mubr.f32.gmra.mxu0 %v2142
        %v2144 = vpop.f32.mrf.mxu0
        %v2145 = vadd.f32 %v1554, %v2144
        %v2146 = vpop.f32.mrf.mxu0
        %2147 = vmatprep.mubr.f32.mxu0 0.0
        %v2148 = vand.u32 %v1082, 4294901760
        %2149 = vmatmul.mubr.f32.gmra.mxu0 %v2148
        %v2150 = vpop.f32.mrf.mxu0
        %v2151 = vadd.f32 %v1564, %v2150
        %v2152 = vpop.f32.mrf.mxu0
        %2153 = vmatprep.mubr.f32.mxu0 0.0
        %v2154 = vand.u32 %v1085, 4294901760
        %2155 = vmatmul.mubr.f32.gmra.mxu0 %v2154
        %v2156 = vpop.f32.mrf.mxu0
        %v2157 = vadd.f32 %v1574, %v2156
        %v2158 = vpop.f32.mrf.mxu0
        %2159 = vmatprep.mubr.f32.mxu0 0.0
        %v2160 = vand.u32 %v1088, 4294901760
        %2161 = vmatmul.mubr.f32.gmra.mxu0 %v2160
        %v2162 = vpop.f32.mrf.mxu0
        %v2163 = vadd.f32 %v1584, %v2162
        %v2164 = vpop.f32.mrf.mxu0
        %2165 = vmatprep.mubr.f32.mxu0 0.0
        %v2166 = vand.u32 %v1091, 4294901760
        %2167 = vmatmul.mubr.f32.gmra.mxu0 %v2166
        %v2168 = vpop.f32.mrf.mxu0
        %v2169 = vadd.f32 %v1594, %v2168
        %v2170 = vpop.f32.mrf.mxu0
        %2171 = vmatprep.mubr.f32.mxu0 0.0
        %v2172 = vand.u32 %v1094, 4294901760
        %2173 = vmatmul.mubr.f32.gmra.mxu0 %v2172
        %v2174 = vpop.f32.mrf.mxu0
        %v2175 = vadd.f32 %v1604, %v2174
        %v2176 = vpop.f32.mrf.mxu0
        %2177 = vmatprep.mubr.f32.mxu0 0.0
        %v2178 = vand.u32 %v1097, 4294901760
        %2179 = vmatmul.mubr.f32.gmra.mxu0 %v2178
        %v2180 = vpop.f32.mrf.mxu0
        %v2181 = vadd.f32 %v1614, %v2180
        %v2182 = vpop.f32.mrf.mxu0
        %2183 = vmatprep.mubr.f32.mxu0 0.0
        %v2184 = vand.u32 %v1100, 4294901760
        %2185 = vmatmul.mubr.f32.gmra.mxu0 %v2184
        %v2186 = vpop.f32.mrf.mxu0
        %v2187 = vadd.f32 %v1624, %v2186
        %v2188 = vpop.f32.mrf.mxu0
        %2189 = vmatprep.mubr.f32.mxu0 0.0
        %v2190 = vand.u32 %v1103, 4294901760
        %2191 = vmatmul.mubr.f32.gmra.mxu0 %v2190
        %v2192 = vpop.f32.mrf.mxu0
        %v2193 = vadd.f32 %v1634, %v2192
        %v2194 = vpop.f32.mrf.mxu0
        %2195 = vmatprep.mubr.f32.mxu0 0.0
        %v2196 = vand.u32 %v1106, 4294901760
        %2197 = vmatmul.mubr.f32.gmra.mxu0 %v2196
        %v2198 = vpop.f32.mrf.mxu0
        %v2199 = vadd.f32 %v1644, %v2198
        %v2200 = vpop.f32.mrf.mxu0
        %2201 = vmatprep.mubr.f32.mxu0 0.0
        %v2202 = vand.u32 %v1109, 4294901760
        %2203 = vmatmul.mubr.f32.gmra.mxu0 %v2202
        %v2204 = vpop.f32.mrf.mxu0
        %v2205 = vadd.f32 %v1654, %v2204
        %v2206 = vpop.f32.mrf.mxu0
        %2207 = vmatprep.mubr.f32.mxu0 0.0
        %v2208 = vand.u32 %v1112, 4294901760
        %2209 = vmatmul.mubr.f32.gmra.mxu0 %v2208
        %v2210 = vpop.f32.mrf.mxu0
        %v2211 = vadd.f32 %v1664, %v2210
        %v2212 = vpop.f32.mrf.mxu0
        %2213 = vmatprep.mubr.f32.mxu0 0.0
        %v2214 = vand.u32 %v1115, 4294901760
        %2215 = vmatmul.mubr.f32.gmra.mxu0 %v2214
        %v2216 = vpop.f32.mrf.mxu0
        %v2217 = vadd.f32 %v1674, %v2216
        %v2218 = vpop.f32.mrf.mxu0
        %2219 = vmatprep.mubr.f32.mxu0 0.0
        %v2220 = vand.u32 %v1118, 4294901760
        %2221 = vmatmul.mubr.f32.gmra.mxu0 %v2220
        %v2222 = vpop.f32.mrf.mxu0
        %v2223 = vadd.f32 %v1684, %v2222
        %v2224 = vpop.f32.mrf.mxu0
        %2225 = vmatprep.mubr.f32.mxu0 0.0
        %v2226 = vand.u32 %v1121, 4294901760
        %2227 = vmatmul.mubr.f32.gmra.mxu0 %v2226
        %v2228 = vpop.f32.mrf.mxu0
        %v2229 = vadd.f32 %v1694, %v2228
        %v2230 = vpop.f32.mrf.mxu0
        %2231 = vmatprep.mubr.f32.mxu0 0.0
        %v2232 = vand.u32 %v1124, 4294901760
        %2233 = vmatmul.mubr.f32.gmra.mxu0 %v2232
        %v2234 = vpop.f32.mrf.mxu0
        %v2235 = vadd.f32 %v1704, %v2234
        %v2236 = vpop.f32.mrf.mxu0
        %2237 = vmatprep.mubr.f32.mxu0 0.0
        %v2238 = vand.u32 %v1127, 4294901760
        %2239 = vmatmul.mubr.f32.gmra.mxu0 %v2238
        %v2240 = vpop.f32.mrf.mxu0
        %v2241 = vadd.f32 %v1714, %v2240
        %v2242 = vpop.f32.mrf.mxu0
        %2243 = vmatprep.mubr.f32.mxu0 0.0
        %v2244 = vand.u32 %v1130, 4294901760
        %2245 = vmatmul.mubr.f32.gmra.mxu0 %v2244
        %v2246 = vpop.f32.mrf.mxu0
        %v2247 = vadd.f32 %v1724, %v2246
        %v2248 = vpop.f32.mrf.mxu0
        %2249 = vmatprep.mubr.f32.mxu0 0.0
        %v2250 = vand.u32 %v1133, 4294901760
        %2251 = vmatmul.mubr.f32.gmra.mxu0 %v2250
        %v2252 = vpop.f32.mrf.mxu0
        %v2253 = vadd.f32 %v1734, %v2252
        %v2254 = vpop.f32.mrf.mxu0
        %2255 = vmatprep.mubr.f32.mxu0 0.0
        %v2256 = vand.u32 %v1136, 4294901760
        %2257 = vmatmul.mubr.f32.gmra.mxu0 %v2256
        %v2258 = vpop.f32.mrf.mxu0
        %v2259 = vadd.f32 %v1744, %v2258
        %v2260 = vpop.f32.mrf.mxu0
        %2261 = vmatprep.mubr.f32.mxu0 0.0
        %v2262 = vand.u32 %v1139, 4294901760
        %2263 = vmatmul.mubr.f32.gmra.mxu0 %v2262
        %v2264 = vpop.f32.mrf.mxu0
        %v2265 = vadd.f32 %v1754, %v2264
        %v2266 = vpop.f32.mrf.mxu0
        %2267 = vmatprep.mubr.f32.mxu0 0.0
        %v2268 = vand.u32 %v1142, 4294901760
        %2269 = vmatmul.mubr.f32.gmra.mxu0 %v2268
        %v2270 = vpop.f32.mrf.mxu0
        %v2271 = vadd.f32 %v1764, %v2270
        %v2272 = vpop.f32.mrf.mxu0
        %2273 = vmatprep.mubr.f32.mxu0 0.0
        %v2274 = vand.u32 %v1145, 4294901760
        %2275 = vmatmul.mubr.f32.gmra.mxu0 %v2274
        %v2276 = vpop.f32.mrf.mxu0
        %v2277 = vadd.f32 %v1774, %v2276
        %v2278 = vpop.f32.mrf.mxu0
        %2279 = vmatprep.mubr.f32.mxu0 0.0
        %v2280 = vand.u32 %v1148, 4294901760
        %2281 = vmatmul.mubr.f32.gmra.mxu0 %v2280
        %v2282 = vpop.f32.mrf.mxu0
        %v2283 = vadd.f32 %v1784, %v2282
        %v2284 = vpop.f32.mrf.mxu0
        %2285 = vmatprep.mubr.f32.mxu0 0.0
        %v2286 = vand.u32 %v1151, 4294901760
        %2287 = vmatmul.mubr.f32.gmra.mxu0 %v2286
        %v2288 = vpop.f32.mrf.mxu0
        %v2289 = vadd.f32 %v1794, %v2288
        %v2290 = vpop.f32.mrf.mxu0
        %2291 = vmatprep.mubr.f32.mxu0 0.0
        %v2292 = vand.u32 %v1154, 4294901760
        %2293 = vmatmul.mubr.f32.gmra.mxu0 %v2292
        %v2294 = vpop.f32.mrf.mxu0
        %v2295 = vadd.f32 %v1804, %v2294
        %v2296 = vpop.f32.mrf.mxu0
        %2297 = vmatprep.mubr.f32.mxu0 0.0
        %v2298 = vand.u32 %v1157, 4294901760
        %2299 = vmatmul.mubr.f32.gmra.mxu0 %v2298
        %v2300 = vpop.f32.mrf.mxu0
        %v2301 = vadd.f32 %v1814, %v2300
        %v2302 = vpop.f32.mrf.mxu0
        %2303 = vmatprep.mubr.f32.mxu0 0.0
        %v2304 = vand.u32 %v1160, 4294901760
        %2305 = vmatmul.mubr.f32.gmra.mxu0 %v2304
        %v2306 = vpop.f32.mrf.mxu0
        %v2307 = vadd.f32 %v1824, %v2306
        %v2308 = vpop.f32.mrf.mxu0
        %2309 = vmatprep.mubr.f32.mxu0 0.0
        %v2310 = vand.u32 %v1163, 4294901760
        %2311 = vmatmul.mubr.f32.gmra.mxu0 %v2310
        %v2312 = vpop.f32.mrf.mxu0
        %v2313 = vadd.f32 %v1834, %v2312
        %v2314 = vpop.f32.mrf.mxu0
        %2315 = vmatprep.mubr.f32.mxu0 0.0
        %v2316 = vand.u32 %v1166, 4294901760
        %2317 = vmatmul.mubr.f32.gmra.mxu0 %v2316
        %v2318 = vpop.f32.mrf.mxu0
        %v2319 = vadd.f32 %v1844, %v2318
        %v2320 = vpop.f32.mrf.mxu0
        %2321 = vmatprep.mubr.f32.mxu0 0.0
        %v2322 = vand.u32 %v1169, 4294901760
        %2323 = vmatmul.mubr.f32.gmra.mxu0 %v2322
        %v2324 = vpop.f32.mrf.mxu0
        %v2325 = vadd.f32 %v1854, %v2324
        %v2326 = vpop.f32.mrf.mxu0
        %2327 = vmatprep.mubr.f32.mxu0 0.0
        %v2328 = vand.u32 %v1172, 4294901760
        %2329 = vmatmul.mubr.f32.gmra.mxu0 %v2328
        %v2330 = vpop.f32.mrf.mxu0
        %v2331 = vadd.f32 %v1864, %v2330
        %v2332 = vpop.f32.mrf.mxu0
        %2333 = vmatprep.mubr.f32.mxu0 0.0
        %v2334 = vand.u32 %v1175, 4294901760
        %2335 = vmatmul.mubr.f32.gmra.mxu0 %v2334
        %v2336 = vpop.f32.mrf.mxu0
        %v2337 = vadd.f32 %v1874, %v2336
        %v2338 = vpop.f32.mrf.mxu0
        %2339 = vmatprep.mubr.f32.mxu0 0.0
        %v2340 = vand.u32 %v1178, 4294901760
        %2341 = vmatmul.mubr.f32.gmra.mxu0 %v2340
        %v2342 = vpop.f32.mrf.mxu0
        %v2343 = vadd.f32 %v1884, %v2342
        %v2344 = vpop.f32.mrf.mxu0
        %2345 = vdwg.mxu0
        %2346 = vmatprep.subr.mxu0 0.0
        %2347 = vmatpush1.msra.mxu0 0.0
        %2348 = vmatprep.subr.mxu0 0.0
        %2349 = vmatpush1.msra.mxu0 0.0
        %2350 = vmatprep.subr.mxu0 0.0
        %2351 = vmatpush1.msra.mxu0 0.0
        %2352 = vmatprep.subr.mxu0 0.0
        %2353 = vmatpush1.msra.mxu0 0.0
        %2354 = vmatprep.subr.mxu0 0.0
        %2355 = vmatpush1.msra.mxu0 0.0
        %2356 = vmatprep.subr.mxu0 0.0
        %2357 = vmatpush1.msra.mxu0 0.0
        %2358 = vmatprep.subr.mxu0 0.0
        %2359 = vmatpush1.msra.mxu0 0.0
        %2360 = vmatprep.subr.mxu0 0.0
        %2361 = vmatpush1.msra.mxu0 0.0
        %2362 = vmatprep.subr.mxu0 0.0
        %2363 = vmatpush1.msra.mxu0 0.0
        %2364 = vmatprep.subr.mxu0 0.0
        %2365 = vmatpush1.msra.mxu0 0.0
        %2366 = vmatprep.subr.mxu0 0.0
        %2367 = vmatpush1.msra.mxu0 0.0
        %2368 = vmatprep.subr.mxu0 0.0
        %2369 = vmatpush1.msra.mxu0 0.0
        %2370 = vmatprep.subr.mxu0 0.0
        %2371 = vmatpush1.msra.mxu0 0.0
        %2372 = vmatprep.subr.mxu0 0.0
        %2373 = vmatpush1.msra.mxu0 0.0
        %2374 = vmatprep.subr.mxu0 0.0
        %v2375 = vand.u32 %v979, 4294901760
        %v2376 = vsub.f32 %v979, %v2375
        %2377 = vmatpush1.msra.mxu0 %v2376
        %2378 = vmatprep.subr.mxu0 0.0
        %v2379 = vand.u32 %v978, 4294901760
        %v2380 = vsub.f32 %v978, %v2379
        %2381 = vmatpush1.msra.mxu0 %v2380
        %2382 = vmatprep.subr.mxu0 0.0
        %2383 = vmatpush2.msra.mxu0 0.0
        %2384 = vmatprep.subr.mxu0 0.0
        %2385 = vmatpush2.msra.mxu0 0.0
        %2386 = vmatprep.subr.mxu0 0.0
        %2387 = vmatpush2.msra.mxu0 0.0
        %2388 = vmatprep.subr.mxu0 0.0
        %2389 = vmatpush2.msra.mxu0 0.0
        %2390 = vmatprep.subr.mxu0 0.0
        %2391 = vmatpush2.msra.mxu0 0.0
        %2392 = vmatprep.subr.mxu0 0.0
        %2393 = vmatpush2.msra.mxu0 0.0
        %2394 = vmatprep.subr.mxu0 0.0
        %2395 = vmatpush2.msra.mxu0 0.0
        %2396 = vmatprep.subr.mxu0 0.0
        %2397 = vmatpush2.msra.mxu0 0.0
        %2398 = vmatprep.subr.mxu0 0.0
        %2399 = vmatpush2.msra.mxu0 0.0
        %2400 = vmatprep.subr.mxu0 0.0
        %2401 = vmatpush2.msra.mxu0 0.0
        %2402 = vmatprep.subr.mxu0 0.0
        %2403 = vmatpush2.msra.mxu0 0.0
        %2404 = vmatprep.subr.mxu0 0.0
        %2405 = vmatpush2.msra.mxu0 0.0
        %2406 = vmatprep.subr.mxu0 0.0
        %2407 = vmatpush2.msra.mxu0 0.0
        %2408 = vmatprep.subr.mxu0 0.0
        %2409 = vmatpush2.msra.mxu0 0.0
        %2410 = vmatprep.subr.mxu0 0.0
        %2411 = vmatpush2.msra.mxu0 0.0
        %2412 = vmatprep.subr.mxu0 0.0
        %2413 = vmatpush2.msra.mxu0 0.0
        %2414 = vmatprep.mubr.f32.mxu0 0.0
        %v2415 = vand.u32 %v989, 4294901760
        %v2416 = vsub.f32 %v989, %v2415
        %2417 = vmatmul.mubr.f32.gmra.mxu0 %v2416
        %v2418 = vpop.f32.mrf.mxu0
        %v2419 = vadd.f32 %v1965, %v2418
        %v2420 = vpop.f32.mrf.mxu0
        %2421 = vmatprep.mubr.f32.mxu0 0.0
        %v2422 = vand.u32 %v992, 4294901760
        %v2423 = vsub.f32 %v992, %v2422
        %2424 = vmatmul.mubr.f32.gmra.mxu0 %v2423
        %v2425 = vpop.f32.mrf.mxu0
        %v2426 = vadd.f32 %v1971, %v2425
        %v2427 = vpop.f32.mrf.mxu0
        %2428 = vmatprep.mubr.f32.mxu0 0.0
        %v2429 = vand.u32 %v995, 4294901760
        %v2430 = vsub.f32 %v995, %v2429
        %2431 = vmatmul.mubr.f32.gmra.mxu0 %v2430
        %v2432 = vpop.f32.mrf.mxu0
        %v2433 = vadd.f32 %v1977, %v2432
        %v2434 = vpop.f32.mrf.mxu0
        %2435 = vmatprep.mubr.f32.mxu0 0.0
        %v2436 = vand.u32 %v998, 4294901760
        %v2437 = vsub.f32 %v998, %v2436
        %2438 = vmatmul.mubr.f32.gmra.mxu0 %v2437
        %v2439 = vpop.f32.mrf.mxu0
        %v2440 = vadd.f32 %v1983, %v2439
        %v2441 = vpop.f32.mrf.mxu0
        %2442 = vmatprep.mubr.f32.mxu0 0.0
        %v2443 = vand.u32 %v1001, 4294901760
        %v2444 = vsub.f32 %v1001, %v2443
        %2445 = vmatmul.mubr.f32.gmra.mxu0 %v2444
        %v2446 = vpop.f32.mrf.mxu0
        %v2447 = vadd.f32 %v1989, %v2446
        %v2448 = vpop.f32.mrf.mxu0
        %2449 = vmatprep.mubr.f32.mxu0 0.0
        %v2450 = vand.u32 %v1004, 4294901760
        %v2451 = vsub.f32 %v1004, %v2450
        %2452 = vmatmul.mubr.f32.gmra.mxu0 %v2451
        %v2453 = vpop.f32.mrf.mxu0
        %v2454 = vadd.f32 %v1995, %v2453
        %v2455 = vpop.f32.mrf.mxu0
        %2456 = vmatprep.mubr.f32.mxu0 0.0
        %v2457 = vand.u32 %v1007, 4294901760
        %v2458 = vsub.f32 %v1007, %v2457
        %2459 = vmatmul.mubr.f32.gmra.mxu0 %v2458
        %v2460 = vpop.f32.mrf.mxu0
        %v2461 = vadd.f32 %v2001, %v2460
        %v2462 = vpop.f32.mrf.mxu0
        %2463 = vmatprep.mubr.f32.mxu0 0.0
        %v2464 = vand.u32 %v1010, 4294901760
        %v2465 = vsub.f32 %v1010, %v2464
        %2466 = vmatmul.mubr.f32.gmra.mxu0 %v2465
        %v2467 = vpop.f32.mrf.mxu0
        %v2468 = vadd.f32 %v2007, %v2467
        %v2469 = vpop.f32.mrf.mxu0
        %2470 = vmatprep.mubr.f32.mxu0 0.0
        %v2471 = vand.u32 %v1013, 4294901760
        %v2472 = vsub.f32 %v1013, %v2471
        %2473 = vmatmul.mubr.f32.gmra.mxu0 %v2472
        %v2474 = vpop.f32.mrf.mxu0
        %v2475 = vadd.f32 %v2013, %v2474
        %v2476 = vpop.f32.mrf.mxu0
        %2477 = vmatprep.mubr.f32.mxu0 0.0
        %v2478 = vand.u32 %v1016, 4294901760
        %v2479 = vsub.f32 %v1016, %v2478
        %2480 = vmatmul.mubr.f32.gmra.mxu0 %v2479
        %v2481 = vpop.f32.mrf.mxu0
        %v2482 = vadd.f32 %v2019, %v2481
        %v2483 = vpop.f32.mrf.mxu0
        %2484 = vmatprep.mubr.f32.mxu0 0.0
        %v2485 = vand.u32 %v1019, 4294901760
        %v2486 = vsub.f32 %v1019, %v2485
        %2487 = vmatmul.mubr.f32.gmra.mxu0 %v2486
        %v2488 = vpop.f32.mrf.mxu0
        %v2489 = vadd.f32 %v2025, %v2488
        %v2490 = vpop.f32.mrf.mxu0
        %2491 = vmatprep.mubr.f32.mxu0 0.0
        %v2492 = vand.u32 %v1022, 4294901760
        %v2493 = vsub.f32 %v1022, %v2492
        %2494 = vmatmul.mubr.f32.gmra.mxu0 %v2493
        %v2495 = vpop.f32.mrf.mxu0
        %v2496 = vadd.f32 %v2031, %v2495
        %v2497 = vpop.f32.mrf.mxu0
        %2498 = vmatprep.mubr.f32.mxu0 0.0
        %v2499 = vand.u32 %v1025, 4294901760
        %v2500 = vsub.f32 %v1025, %v2499
        %2501 = vmatmul.mubr.f32.gmra.mxu0 %v2500
        %v2502 = vpop.f32.mrf.mxu0
        %v2503 = vadd.f32 %v2037, %v2502
        %v2504 = vpop.f32.mrf.mxu0
        %2505 = vmatprep.mubr.f32.mxu0 0.0
        %v2506 = vand.u32 %v1028, 4294901760
        %v2507 = vsub.f32 %v1028, %v2506
        %2508 = vmatmul.mubr.f32.gmra.mxu0 %v2507
        %v2509 = vpop.f32.mrf.mxu0
        %v2510 = vadd.f32 %v2043, %v2509
        %v2511 = vpop.f32.mrf.mxu0
        %2512 = vmatprep.mubr.f32.mxu0 0.0
        %v2513 = vand.u32 %v1031, 4294901760
        %v2514 = vsub.f32 %v1031, %v2513
        %2515 = vmatmul.mubr.f32.gmra.mxu0 %v2514
        %v2516 = vpop.f32.mrf.mxu0
        %v2517 = vadd.f32 %v2049, %v2516
        %v2518 = vpop.f32.mrf.mxu0
        %2519 = vmatprep.mubr.f32.mxu0 0.0
        %v2520 = vand.u32 %v1034, 4294901760
        %v2521 = vsub.f32 %v1034, %v2520
        %2522 = vmatmul.mubr.f32.gmra.mxu0 %v2521
        %v2523 = vpop.f32.mrf.mxu0
        %v2524 = vadd.f32 %v2055, %v2523
        %v2525 = vpop.f32.mrf.mxu0
        %2526 = vmatprep.mubr.f32.mxu0 0.0
        %v2527 = vand.u32 %v1037, 4294901760
        %v2528 = vsub.f32 %v1037, %v2527
        %2529 = vmatmul.mubr.f32.gmra.mxu0 %v2528
        %v2530 = vpop.f32.mrf.mxu0
        %v2531 = vadd.f32 %v2061, %v2530
        %v2532 = vpop.f32.mrf.mxu0
        %2533 = vmatprep.mubr.f32.mxu0 0.0
        %v2534 = vand.u32 %v1040, 4294901760
        %v2535 = vsub.f32 %v1040, %v2534
        %2536 = vmatmul.mubr.f32.gmra.mxu0 %v2535
        %v2537 = vpop.f32.mrf.mxu0
        %v2538 = vadd.f32 %v2067, %v2537
        %v2539 = vpop.f32.mrf.mxu0
        %2540 = vmatprep.mubr.f32.mxu0 0.0
        %v2541 = vand.u32 %v1043, 4294901760
        %v2542 = vsub.f32 %v1043, %v2541
        %2543 = vmatmul.mubr.f32.gmra.mxu0 %v2542
        %v2544 = vpop.f32.mrf.mxu0
        %v2545 = vadd.f32 %v2073, %v2544
        %v2546 = vpop.f32.mrf.mxu0
        %2547 = vmatprep.mubr.f32.mxu0 0.0
        %v2548 = vand.u32 %v1046, 4294901760
        %v2549 = vsub.f32 %v1046, %v2548
        %2550 = vmatmul.mubr.f32.gmra.mxu0 %v2549
        %v2551 = vpop.f32.mrf.mxu0
        %v2552 = vadd.f32 %v2079, %v2551
        %v2553 = vpop.f32.mrf.mxu0
        %2554 = vmatprep.mubr.f32.mxu0 0.0
        %v2555 = vand.u32 %v1049, 4294901760
        %v2556 = vsub.f32 %v1049, %v2555
        %2557 = vmatmul.mubr.f32.gmra.mxu0 %v2556
        %v2558 = vpop.f32.mrf.mxu0
        %v2559 = vadd.f32 %v2085, %v2558
        %v2560 = vpop.f32.mrf.mxu0
        %2561 = vmatprep.mubr.f32.mxu0 0.0
        %v2562 = vand.u32 %v1052, 4294901760
        %v2563 = vsub.f32 %v1052, %v2562
        %2564 = vmatmul.mubr.f32.gmra.mxu0 %v2563
        %v2565 = vpop.f32.mrf.mxu0
        %v2566 = vadd.f32 %v2091, %v2565
        %v2567 = vpop.f32.mrf.mxu0
        %2568 = vmatprep.mubr.f32.mxu0 0.0
        %v2569 = vand.u32 %v1055, 4294901760
        %v2570 = vsub.f32 %v1055, %v2569
        %2571 = vmatmul.mubr.f32.gmra.mxu0 %v2570
        %v2572 = vpop.f32.mrf.mxu0
        %v2573 = vadd.f32 %v2097, %v2572
        %v2574 = vpop.f32.mrf.mxu0
        %2575 = vmatprep.mubr.f32.mxu0 0.0
        %v2576 = vand.u32 %v1058, 4294901760
        %v2577 = vsub.f32 %v1058, %v2576
        %2578 = vmatmul.mubr.f32.gmra.mxu0 %v2577
        %v2579 = vpop.f32.mrf.mxu0
        %v2580 = vadd.f32 %v2103, %v2579
        %v2581 = vpop.f32.mrf.mxu0
        %2582 = vmatprep.mubr.f32.mxu0 0.0
        %v2583 = vand.u32 %v1061, 4294901760
        %v2584 = vsub.f32 %v1061, %v2583
        %2585 = vmatmul.mubr.f32.gmra.mxu0 %v2584
        %v2586 = vpop.f32.mrf.mxu0
        %v2587 = vadd.f32 %v2109, %v2586
        %v2588 = vpop.f32.mrf.mxu0
        %2589 = vmatprep.mubr.f32.mxu0 0.0
        %v2590 = vand.u32 %v1064, 4294901760
        %v2591 = vsub.f32 %v1064, %v2590
        %2592 = vmatmul.mubr.f32.gmra.mxu0 %v2591
        %v2593 = vpop.f32.mrf.mxu0
        %v2594 = vadd.f32 %v2115, %v2593
        %v2595 = vpop.f32.mrf.mxu0
        %2596 = vmatprep.mubr.f32.mxu0 0.0
        %v2597 = vand.u32 %v1067, 4294901760
        %v2598 = vsub.f32 %v1067, %v2597
        %2599 = vmatmul.mubr.f32.gmra.mxu0 %v2598
        %v2600 = vpop.f32.mrf.mxu0
        %v2601 = vadd.f32 %v2121, %v2600
        %v2602 = vpop.f32.mrf.mxu0
        %2603 = vmatprep.mubr.f32.mxu0 0.0
        %v2604 = vand.u32 %v1070, 4294901760
        %v2605 = vsub.f32 %v1070, %v2604
        %2606 = vmatmul.mubr.f32.gmra.mxu0 %v2605
        %v2607 = vpop.f32.mrf.mxu0
        %v2608 = vadd.f32 %v2127, %v2607
        %v2609 = vpop.f32.mrf.mxu0
        %2610 = vmatprep.mubr.f32.mxu0 0.0
        %v2611 = vand.u32 %v1073, 4294901760
        %v2612 = vsub.f32 %v1073, %v2611
        %2613 = vmatmul.mubr.f32.gmra.mxu0 %v2612
        %v2614 = vpop.f32.mrf.mxu0
        %v2615 = vadd.f32 %v2133, %v2614
        %v2616 = vpop.f32.mrf.mxu0
        %2617 = vmatprep.mubr.f32.mxu0 0.0
        %v2618 = vand.u32 %v1076, 4294901760
        %v2619 = vsub.f32 %v1076, %v2618
        %2620 = vmatmul.mubr.f32.gmra.mxu0 %v2619
        %v2621 = vpop.f32.mrf.mxu0
        %v2622 = vadd.f32 %v2139, %v2621
        %v2623 = vpop.f32.mrf.mxu0
        %2624 = vmatprep.mubr.f32.mxu0 0.0
        %v2625 = vand.u32 %v1079, 4294901760
        %v2626 = vsub.f32 %v1079, %v2625
        %2627 = vmatmul.mubr.f32.gmra.mxu0 %v2626
        %v2628 = vpop.f32.mrf.mxu0
        %v2629 = vadd.f32 %v2145, %v2628
        %v2630 = vpop.f32.mrf.mxu0
        %2631 = vmatprep.mubr.f32.mxu0 0.0
        %v2632 = vand.u32 %v1082, 4294901760
        %v2633 = vsub.f32 %v1082, %v2632
        %2634 = vmatmul.mubr.f32.gmra.mxu0 %v2633
        %v2635 = vpop.f32.mrf.mxu0
        %v2636 = vadd.f32 %v2151, %v2635
        %v2637 = vpop.f32.mrf.mxu0
        %2638 = vmatprep.mubr.f32.mxu0 0.0
        %v2639 = vand.u32 %v1085, 4294901760
        %v2640 = vsub.f32 %v1085, %v2639
        %2641 = vmatmul.mubr.f32.gmra.mxu0 %v2640
        %v2642 = vpop.f32.mrf.mxu0
        %v2643 = vadd.f32 %v2157, %v2642
        %v2644 = vpop.f32.mrf.mxu0
        %2645 = vmatprep.mubr.f32.mxu0 0.0
        %v2646 = vand.u32 %v1088, 4294901760
        %v2647 = vsub.f32 %v1088, %v2646
        %2648 = vmatmul.mubr.f32.gmra.mxu0 %v2647
        %v2649 = vpop.f32.mrf.mxu0
        %v2650 = vadd.f32 %v2163, %v2649
        %v2651 = vpop.f32.mrf.mxu0
        %2652 = vmatprep.mubr.f32.mxu0 0.0
        %v2653 = vand.u32 %v1091, 4294901760
        %v2654 = vsub.f32 %v1091, %v2653
        %2655 = vmatmul.mubr.f32.gmra.mxu0 %v2654
        %v2656 = vpop.f32.mrf.mxu0
        %v2657 = vadd.f32 %v2169, %v2656
        %v2658 = vpop.f32.mrf.mxu0
        %2659 = vmatprep.mubr.f32.mxu0 0.0
        %v2660 = vand.u32 %v1094, 4294901760
        %v2661 = vsub.f32 %v1094, %v2660
        %2662 = vmatmul.mubr.f32.gmra.mxu0 %v2661
        %v2663 = vpop.f32.mrf.mxu0
        %v2664 = vadd.f32 %v2175, %v2663
        %v2665 = vpop.f32.mrf.mxu0
        %2666 = vmatprep.mubr.f32.mxu0 0.0
        %v2667 = vand.u32 %v1097, 4294901760
        %v2668 = vsub.f32 %v1097, %v2667
        %2669 = vmatmul.mubr.f32.gmra.mxu0 %v2668
        %v2670 = vpop.f32.mrf.mxu0
        %v2671 = vadd.f32 %v2181, %v2670
        %v2672 = vpop.f32.mrf.mxu0
        %2673 = vmatprep.mubr.f32.mxu0 0.0
        %v2674 = vand.u32 %v1100, 4294901760
        %v2675 = vsub.f32 %v1100, %v2674
        %2676 = vmatmul.mubr.f32.gmra.mxu0 %v2675
        %v2677 = vpop.f32.mrf.mxu0
        %v2678 = vadd.f32 %v2187, %v2677
        %v2679 = vpop.f32.mrf.mxu0
        %2680 = vmatprep.mubr.f32.mxu0 0.0
        %v2681 = vand.u32 %v1103, 4294901760
        %v2682 = vsub.f32 %v1103, %v2681
        %2683 = vmatmul.mubr.f32.gmra.mxu0 %v2682
        %v2684 = vpop.f32.mrf.mxu0
        %v2685 = vadd.f32 %v2193, %v2684
        %v2686 = vpop.f32.mrf.mxu0
        %2687 = vmatprep.mubr.f32.mxu0 0.0
        %v2688 = vand.u32 %v1106, 4294901760
        %v2689 = vsub.f32 %v1106, %v2688
        %2690 = vmatmul.mubr.f32.gmra.mxu0 %v2689
        %v2691 = vpop.f32.mrf.mxu0
        %v2692 = vadd.f32 %v2199, %v2691
        %v2693 = vpop.f32.mrf.mxu0
        %2694 = vmatprep.mubr.f32.mxu0 0.0
        %v2695 = vand.u32 %v1109, 4294901760
        %v2696 = vsub.f32 %v1109, %v2695
        %2697 = vmatmul.mubr.f32.gmra.mxu0 %v2696
        %v2698 = vpop.f32.mrf.mxu0
        %v2699 = vadd.f32 %v2205, %v2698
        %v2700 = vpop.f32.mrf.mxu0
        %2701 = vmatprep.mubr.f32.mxu0 0.0
        %v2702 = vand.u32 %v1112, 4294901760
        %v2703 = vsub.f32 %v1112, %v2702
        %2704 = vmatmul.mubr.f32.gmra.mxu0 %v2703
        %v2705 = vpop.f32.mrf.mxu0
        %v2706 = vadd.f32 %v2211, %v2705
        %v2707 = vpop.f32.mrf.mxu0
        %2708 = vmatprep.mubr.f32.mxu0 0.0
        %v2709 = vand.u32 %v1115, 4294901760
        %v2710 = vsub.f32 %v1115, %v2709
        %2711 = vmatmul.mubr.f32.gmra.mxu0 %v2710
        %v2712 = vpop.f32.mrf.mxu0
        %v2713 = vadd.f32 %v2217, %v2712
        %v2714 = vpop.f32.mrf.mxu0
        %2715 = vmatprep.mubr.f32.mxu0 0.0
        %v2716 = vand.u32 %v1118, 4294901760
        %v2717 = vsub.f32 %v1118, %v2716
        %2718 = vmatmul.mubr.f32.gmra.mxu0 %v2717
        %v2719 = vpop.f32.mrf.mxu0
        %v2720 = vadd.f32 %v2223, %v2719
        %v2721 = vpop.f32.mrf.mxu0
        %2722 = vmatprep.mubr.f32.mxu0 0.0
        %v2723 = vand.u32 %v1121, 4294901760
        %v2724 = vsub.f32 %v1121, %v2723
        %2725 = vmatmul.mubr.f32.gmra.mxu0 %v2724
        %v2726 = vpop.f32.mrf.mxu0
        %v2727 = vadd.f32 %v2229, %v2726
        %v2728 = vpop.f32.mrf.mxu0
        %2729 = vmatprep.mubr.f32.mxu0 0.0
        %v2730 = vand.u32 %v1124, 4294901760
        %v2731 = vsub.f32 %v1124, %v2730
        %2732 = vmatmul.mubr.f32.gmra.mxu0 %v2731
        %v2733 = vpop.f32.mrf.mxu0
        %v2734 = vadd.f32 %v2235, %v2733
        %v2735 = vpop.f32.mrf.mxu0
        %2736 = vmatprep.mubr.f32.mxu0 0.0
        %v2737 = vand.u32 %v1127, 4294901760
        %v2738 = vsub.f32 %v1127, %v2737
        %2739 = vmatmul.mubr.f32.gmra.mxu0 %v2738
        %v2740 = vpop.f32.mrf.mxu0
        %v2741 = vadd.f32 %v2241, %v2740
        %v2742 = vpop.f32.mrf.mxu0
        %2743 = vmatprep.mubr.f32.mxu0 0.0
        %v2744 = vand.u32 %v1130, 4294901760
        %v2745 = vsub.f32 %v1130, %v2744
        %2746 = vmatmul.mubr.f32.gmra.mxu0 %v2745
        %v2747 = vpop.f32.mrf.mxu0
        %v2748 = vadd.f32 %v2247, %v2747
        %v2749 = vpop.f32.mrf.mxu0
        %2750 = vmatprep.mubr.f32.mxu0 0.0
        %v2751 = vand.u32 %v1133, 4294901760
        %v2752 = vsub.f32 %v1133, %v2751
        %2753 = vmatmul.mubr.f32.gmra.mxu0 %v2752
        %v2754 = vpop.f32.mrf.mxu0
        %v2755 = vadd.f32 %v2253, %v2754
        %v2756 = vpop.f32.mrf.mxu0
        %2757 = vmatprep.mubr.f32.mxu0 0.0
        %v2758 = vand.u32 %v1136, 4294901760
        %v2759 = vsub.f32 %v1136, %v2758
        %2760 = vmatmul.mubr.f32.gmra.mxu0 %v2759
        %v2761 = vpop.f32.mrf.mxu0
        %v2762 = vadd.f32 %v2259, %v2761
        %v2763 = vpop.f32.mrf.mxu0
        %2764 = vmatprep.mubr.f32.mxu0 0.0
        %v2765 = vand.u32 %v1139, 4294901760
        %v2766 = vsub.f32 %v1139, %v2765
        %2767 = vmatmul.mubr.f32.gmra.mxu0 %v2766
        %v2768 = vpop.f32.mrf.mxu0
        %v2769 = vadd.f32 %v2265, %v2768
        %v2770 = vpop.f32.mrf.mxu0
        %2771 = vmatprep.mubr.f32.mxu0 0.0
        %v2772 = vand.u32 %v1142, 4294901760
        %v2773 = vsub.f32 %v1142, %v2772
        %2774 = vmatmul.mubr.f32.gmra.mxu0 %v2773
        %v2775 = vpop.f32.mrf.mxu0
        %v2776 = vadd.f32 %v2271, %v2775
        %v2777 = vpop.f32.mrf.mxu0
        %2778 = vmatprep.mubr.f32.mxu0 0.0
        %v2779 = vand.u32 %v1145, 4294901760
        %v2780 = vsub.f32 %v1145, %v2779
        %2781 = vmatmul.mubr.f32.gmra.mxu0 %v2780
        %v2782 = vpop.f32.mrf.mxu0
        %v2783 = vadd.f32 %v2277, %v2782
        %v2784 = vpop.f32.mrf.mxu0
        %2785 = vmatprep.mubr.f32.mxu0 0.0
        %v2786 = vand.u32 %v1148, 4294901760
        %v2787 = vsub.f32 %v1148, %v2786
        %2788 = vmatmul.mubr.f32.gmra.mxu0 %v2787
        %v2789 = vpop.f32.mrf.mxu0
        %v2790 = vadd.f32 %v2283, %v2789
        %v2791 = vpop.f32.mrf.mxu0
        %2792 = vmatprep.mubr.f32.mxu0 0.0
        %v2793 = vand.u32 %v1151, 4294901760
        %v2794 = vsub.f32 %v1151, %v2793
        %2795 = vmatmul.mubr.f32.gmra.mxu0 %v2794
        %v2796 = vpop.f32.mrf.mxu0
        %v2797 = vadd.f32 %v2289, %v2796
        %v2798 = vpop.f32.mrf.mxu0
        %2799 = vmatprep.mubr.f32.mxu0 0.0
        %v2800 = vand.u32 %v1154, 4294901760
        %v2801 = vsub.f32 %v1154, %v2800
        %2802 = vmatmul.mubr.f32.gmra.mxu0 %v2801
        %v2803 = vpop.f32.mrf.mxu0
        %v2804 = vadd.f32 %v2295, %v2803
        %v2805 = vpop.f32.mrf.mxu0
        %2806 = vmatprep.mubr.f32.mxu0 0.0
        %v2807 = vand.u32 %v1157, 4294901760
        %v2808 = vsub.f32 %v1157, %v2807
        %2809 = vmatmul.mubr.f32.gmra.mxu0 %v2808
        %v2810 = vpop.f32.mrf.mxu0
        %v2811 = vadd.f32 %v2301, %v2810
        %v2812 = vpop.f32.mrf.mxu0
        %2813 = vmatprep.mubr.f32.mxu0 0.0
        %v2814 = vand.u32 %v1160, 4294901760
        %v2815 = vsub.f32 %v1160, %v2814
        %2816 = vmatmul.mubr.f32.gmra.mxu0 %v2815
        %v2817 = vpop.f32.mrf.mxu0
        %v2818 = vadd.f32 %v2307, %v2817
        %v2819 = vpop.f32.mrf.mxu0
        %2820 = vmatprep.mubr.f32.mxu0 0.0
        %v2821 = vand.u32 %v1163, 4294901760
        %v2822 = vsub.f32 %v1163, %v2821
        %2823 = vmatmul.mubr.f32.gmra.mxu0 %v2822
        %v2824 = vpop.f32.mrf.mxu0
        %v2825 = vadd.f32 %v2313, %v2824
        %v2826 = vpop.f32.mrf.mxu0
        %2827 = vmatprep.mubr.f32.mxu0 0.0
        %v2828 = vand.u32 %v1166, 4294901760
        %v2829 = vsub.f32 %v1166, %v2828
        %2830 = vmatmul.mubr.f32.gmra.mxu0 %v2829
        %v2831 = vpop.f32.mrf.mxu0
        %v2832 = vadd.f32 %v2319, %v2831
        %v2833 = vpop.f32.mrf.mxu0
        %2834 = vmatprep.mubr.f32.mxu0 0.0
        %v2835 = vand.u32 %v1169, 4294901760
        %v2836 = vsub.f32 %v1169, %v2835
        %2837 = vmatmul.mubr.f32.gmra.mxu0 %v2836
        %v2838 = vpop.f32.mrf.mxu0
        %v2839 = vadd.f32 %v2325, %v2838
        %v2840 = vpop.f32.mrf.mxu0
        %2841 = vmatprep.mubr.f32.mxu0 0.0
        %v2842 = vand.u32 %v1172, 4294901760
        %v2843 = vsub.f32 %v1172, %v2842
        %2844 = vmatmul.mubr.f32.gmra.mxu0 %v2843
        %v2845 = vpop.f32.mrf.mxu0
        %v2846 = vadd.f32 %v2331, %v2845
        %v2847 = vpop.f32.mrf.mxu0
        %2848 = vmatprep.mubr.f32.mxu0 0.0
        %v2849 = vand.u32 %v1175, 4294901760
        %v2850 = vsub.f32 %v1175, %v2849
        %2851 = vmatmul.mubr.f32.gmra.mxu0 %v2850
        %v2852 = vpop.f32.mrf.mxu0
        %v2853 = vadd.f32 %v2337, %v2852
        %v2854 = vpop.f32.mrf.mxu0
        %2855 = vmatprep.mubr.f32.mxu0 0.0
        %v2856 = vand.u32 %v1178, 4294901760
        %v2857 = vsub.f32 %v1178, %v2856
        %2858 = vmatmul.mubr.f32.gmra.mxu0 %v2857
        %v2859 = vpop.f32.mrf.mxu0
        %v2860 = vadd.f32 %v2343, %v2859
        %v2861 = vpop.f32.mrf.mxu0
        %2862 = vdwg.mxu0
        %2863 = vmatprep.subr.mxu0 0.0
        %2864 = vmatpush1.msra.mxu0 0.0
        %2865 = vmatprep.subr.mxu0 0.0
        %2866 = vmatpush1.msra.mxu0 0.0
        %2867 = vmatprep.subr.mxu0 0.0
        %2868 = vmatpush1.msra.mxu0 0.0
        %2869 = vmatprep.subr.mxu0 0.0
        %2870 = vmatpush1.msra.mxu0 0.0
        %2871 = vmatprep.subr.mxu0 0.0
        %2872 = vmatpush1.msra.mxu0 0.0
        %2873 = vmatprep.subr.mxu0 0.0
        %2874 = vmatpush1.msra.mxu0 0.0
        %2875 = vmatprep.subr.mxu0 0.0
        %2876 = vmatpush1.msra.mxu0 0.0
        %2877 = vmatprep.subr.mxu0 0.0
        %2878 = vmatpush1.msra.mxu0 0.0
        %2879 = vmatprep.subr.mxu0 0.0
        %2880 = vmatpush1.msra.mxu0 0.0
        %2881 = vmatprep.subr.mxu0 0.0
        %2882 = vmatpush1.msra.mxu0 0.0
        %2883 = vmatprep.subr.mxu0 0.0
        %2884 = vmatpush1.msra.mxu0 0.0
        %2885 = vmatprep.subr.mxu0 0.0
        %2886 = vmatpush1.msra.mxu0 0.0
        %2887 = vmatprep.subr.mxu0 0.0
        %2888 = vmatpush1.msra.mxu0 0.0
        %2889 = vmatprep.subr.mxu0 0.0
        %2890 = vmatpush1.msra.mxu0 0.0
        %2891 = vmatprep.subr.mxu0 0.0
        %v2892 = vand.u32 %v979, 4294901760
        %2893 = vmatpush1.msra.mxu0 %v2892
        %2894 = vmatprep.subr.mxu0 0.0
        %v2895 = vand.u32 %v978, 4294901760
        %2896 = vmatpush1.msra.mxu0 %v2895
        %2897 = vmatprep.subr.mxu0 0.0
        %2898 = vmatpush2.msra.mxu0 0.0
        %2899 = vmatprep.subr.mxu0 0.0
        %2900 = vmatpush2.msra.mxu0 0.0
        %2901 = vmatprep.subr.mxu0 0.0
        %2902 = vmatpush2.msra.mxu0 0.0
        %2903 = vmatprep.subr.mxu0 0.0
        %2904 = vmatpush2.msra.mxu0 0.0
        %2905 = vmatprep.subr.mxu0 0.0
        %2906 = vmatpush2.msra.mxu0 0.0
        %2907 = vmatprep.subr.mxu0 0.0
        %2908 = vmatpush2.msra.mxu0 0.0
        %2909 = vmatprep.subr.mxu0 0.0
        %2910 = vmatpush2.msra.mxu0 0.0
        %2911 = vmatprep.subr.mxu0 0.0
        %2912 = vmatpush2.msra.mxu0 0.0
        %2913 = vmatprep.subr.mxu0 0.0
        %2914 = vmatpush2.msra.mxu0 0.0
        %2915 = vmatprep.subr.mxu0 0.0
        %2916 = vmatpush2.msra.mxu0 0.0
        %2917 = vmatprep.subr.mxu0 0.0
        %2918 = vmatpush2.msra.mxu0 0.0
        %2919 = vmatprep.subr.mxu0 0.0
        %2920 = vmatpush2.msra.mxu0 0.0
        %2921 = vmatprep.subr.mxu0 0.0
        %2922 = vmatpush2.msra.mxu0 0.0
        %2923 = vmatprep.subr.mxu0 0.0
        %2924 = vmatpush2.msra.mxu0 0.0
        %2925 = vmatprep.subr.mxu0 0.0
        %2926 = vmatpush2.msra.mxu0 0.0
        %2927 = vmatprep.subr.mxu0 0.0
        %2928 = vmatpush2.msra.mxu0 0.0
        %2929 = vmatprep.mubr.f32.mxu0 0.0
        %v2930 = vand.u32 %v989, 4294901760
        %v2931 = vsub.f32 %v989, %v2930
        %v2932 = vand.u32 %v2931, 4294901760
        %2933 = vmatmul.mubr.f32.gmra.mxu0 %v2932
        %v2934 = vpop.f32.mrf.mxu0
        %v2935 = vadd.f32 %v2419, %v2934
        %v2936 = vpop.f32.mrf.mxu0
        %2937 = vmatprep.mubr.f32.mxu0 0.0
        %v2938 = vand.u32 %v992, 4294901760
        %v2939 = vsub.f32 %v992, %v2938
        %v2940 = vand.u32 %v2939, 4294901760
        %2941 = vmatmul.mubr.f32.gmra.mxu0 %v2940
        %v2942 = vpop.f32.mrf.mxu0
        %v2943 = vadd.f32 %v2426, %v2942
        %v2944 = vpop.f32.mrf.mxu0
        %2945 = vmatprep.mubr.f32.mxu0 0.0
        %v2946 = vand.u32 %v995, 4294901760
        %v2947 = vsub.f32 %v995, %v2946
        %v2948 = vand.u32 %v2947, 4294901760
        %2949 = vmatmul.mubr.f32.gmra.mxu0 %v2948
        %v2950 = vpop.f32.mrf.mxu0
        %v2951 = vadd.f32 %v2433, %v2950
        %v2952 = vpop.f32.mrf.mxu0
        %2953 = vmatprep.mubr.f32.mxu0 0.0
        %v2954 = vand.u32 %v998, 4294901760
        %v2955 = vsub.f32 %v998, %v2954
        %v2956 = vand.u32 %v2955, 4294901760
        %2957 = vmatmul.mubr.f32.gmra.mxu0 %v2956
        %v2958 = vpop.f32.mrf.mxu0
        %v2959 = vadd.f32 %v2440, %v2958
        %v2960 = vpop.f32.mrf.mxu0
        %2961 = vmatprep.mubr.f32.mxu0 0.0
        %v2962 = vand.u32 %v1001, 4294901760
        %v2963 = vsub.f32 %v1001, %v2962
        %v2964 = vand.u32 %v2963, 4294901760
        %2965 = vmatmul.mubr.f32.gmra.mxu0 %v2964
        %v2966 = vpop.f32.mrf.mxu0
        %v2967 = vadd.f32 %v2447, %v2966
        %v2968 = vpop.f32.mrf.mxu0
        %2969 = vmatprep.mubr.f32.mxu0 0.0
        %v2970 = vand.u32 %v1004, 4294901760
        %v2971 = vsub.f32 %v1004, %v2970
        %v2972 = vand.u32 %v2971, 4294901760
        %2973 = vmatmul.mubr.f32.gmra.mxu0 %v2972
        %v2974 = vpop.f32.mrf.mxu0
        %v2975 = vadd.f32 %v2454, %v2974
        %v2976 = vpop.f32.mrf.mxu0
        %2977 = vmatprep.mubr.f32.mxu0 0.0
        %v2978 = vand.u32 %v1007, 4294901760
        %v2979 = vsub.f32 %v1007, %v2978
        %v2980 = vand.u32 %v2979, 4294901760
        %2981 = vmatmul.mubr.f32.gmra.mxu0 %v2980
        %v2982 = vpop.f32.mrf.mxu0
        %v2983 = vadd.f32 %v2461, %v2982
        %v2984 = vpop.f32.mrf.mxu0
        %2985 = vmatprep.mubr.f32.mxu0 0.0
        %v2986 = vand.u32 %v1010, 4294901760
        %v2987 = vsub.f32 %v1010, %v2986
        %v2988 = vand.u32 %v2987, 4294901760
        %2989 = vmatmul.mubr.f32.gmra.mxu0 %v2988
        %v2990 = vpop.f32.mrf.mxu0
        %v2991 = vadd.f32 %v2468, %v2990
        %v2992 = vpop.f32.mrf.mxu0
        %2993 = vmatprep.mubr.f32.mxu0 0.0
        %v2994 = vand.u32 %v1013, 4294901760
        %v2995 = vsub.f32 %v1013, %v2994
        %v2996 = vand.u32 %v2995, 4294901760
        %2997 = vmatmul.mubr.f32.gmra.mxu0 %v2996
        %v2998 = vpop.f32.mrf.mxu0
        %v2999 = vadd.f32 %v2475, %v2998
        %v3000 = vpop.f32.mrf.mxu0
        %3001 = vmatprep.mubr.f32.mxu0 0.0
        %v3002 = vand.u32 %v1016, 4294901760
        %v3003 = vsub.f32 %v1016, %v3002
        %v3004 = vand.u32 %v3003, 4294901760
        %3005 = vmatmul.mubr.f32.gmra.mxu0 %v3004
        %v3006 = vpop.f32.mrf.mxu0
        %v3007 = vadd.f32 %v2482, %v3006
        %v3008 = vpop.f32.mrf.mxu0
        %3009 = vmatprep.mubr.f32.mxu0 0.0
        %v3010 = vand.u32 %v1019, 4294901760
        %v3011 = vsub.f32 %v1019, %v3010
        %v3012 = vand.u32 %v3011, 4294901760
        %3013 = vmatmul.mubr.f32.gmra.mxu0 %v3012
        %v3014 = vpop.f32.mrf.mxu0
        %v3015 = vadd.f32 %v2489, %v3014
        %v3016 = vpop.f32.mrf.mxu0
        %3017 = vmatprep.mubr.f32.mxu0 0.0
        %v3018 = vand.u32 %v1022, 4294901760
        %v3019 = vsub.f32 %v1022, %v3018
        %v3020 = vand.u32 %v3019, 4294901760
        %3021 = vmatmul.mubr.f32.gmra.mxu0 %v3020
        %v3022 = vpop.f32.mrf.mxu0
        %v3023 = vadd.f32 %v2496, %v3022
        %v3024 = vpop.f32.mrf.mxu0
        %3025 = vmatprep.mubr.f32.mxu0 0.0
        %v3026 = vand.u32 %v1025, 4294901760
        %v3027 = vsub.f32 %v1025, %v3026
        %v3028 = vand.u32 %v3027, 4294901760
        %3029 = vmatmul.mubr.f32.gmra.mxu0 %v3028
        %v3030 = vpop.f32.mrf.mxu0
        %v3031 = vadd.f32 %v2503, %v3030
        %v3032 = vpop.f32.mrf.mxu0
        %3033 = vmatprep.mubr.f32.mxu0 0.0
        %v3034 = vand.u32 %v1028, 4294901760
        %v3035 = vsub.f32 %v1028, %v3034
        %v3036 = vand.u32 %v3035, 4294901760
        %3037 = vmatmul.mubr.f32.gmra.mxu0 %v3036
        %v3038 = vpop.f32.mrf.mxu0
        %v3039 = vadd.f32 %v2510, %v3038
        %v3040 = vpop.f32.mrf.mxu0
        %3041 = vmatprep.mubr.f32.mxu0 0.0
        %v3042 = vand.u32 %v1031, 4294901760
        %v3043 = vsub.f32 %v1031, %v3042
        %v3044 = vand.u32 %v3043, 4294901760
        %3045 = vmatmul.mubr.f32.gmra.mxu0 %v3044
        %v3046 = vpop.f32.mrf.mxu0
        %v3047 = vadd.f32 %v2517, %v3046
        %v3048 = vpop.f32.mrf.mxu0
        %3049 = vmatprep.mubr.f32.mxu0 0.0
        %v3050 = vand.u32 %v1034, 4294901760
        %v3051 = vsub.f32 %v1034, %v3050
        %v3052 = vand.u32 %v3051, 4294901760
        %3053 = vmatmul.mubr.f32.gmra.mxu0 %v3052
        %v3054 = vpop.f32.mrf.mxu0
        %v3055 = vadd.f32 %v2524, %v3054
        %v3056 = vpop.f32.mrf.mxu0
        %3057 = vmatprep.mubr.f32.mxu0 0.0
        %v3058 = vand.u32 %v1037, 4294901760
        %v3059 = vsub.f32 %v1037, %v3058
        %v3060 = vand.u32 %v3059, 4294901760
        %3061 = vmatmul.mubr.f32.gmra.mxu0 %v3060
        %v3062 = vpop.f32.mrf.mxu0
        %v3063 = vadd.f32 %v2531, %v3062
        %v3064 = vpop.f32.mrf.mxu0
        %3065 = vmatprep.mubr.f32.mxu0 0.0
        %v3066 = vand.u32 %v1040, 4294901760
        %v3067 = vsub.f32 %v1040, %v3066
        %v3068 = vand.u32 %v3067, 4294901760
        %3069 = vmatmul.mubr.f32.gmra.mxu0 %v3068
        %v3070 = vpop.f32.mrf.mxu0
        %v3071 = vadd.f32 %v2538, %v3070
        %v3072 = vpop.f32.mrf.mxu0
        %3073 = vmatprep.mubr.f32.mxu0 0.0
        %v3074 = vand.u32 %v1043, 4294901760
        %v3075 = vsub.f32 %v1043, %v3074
        %v3076 = vand.u32 %v3075, 4294901760
        %3077 = vmatmul.mubr.f32.gmra.mxu0 %v3076
        %v3078 = vpop.f32.mrf.mxu0
        %v3079 = vadd.f32 %v2545, %v3078
        %v3080 = vpop.f32.mrf.mxu0
        %3081 = vmatprep.mubr.f32.mxu0 0.0
        %v3082 = vand.u32 %v1046, 4294901760
        %v3083 = vsub.f32 %v1046, %v3082
        %v3084 = vand.u32 %v3083, 4294901760
        %3085 = vmatmul.mubr.f32.gmra.mxu0 %v3084
        %v3086 = vpop.f32.mrf.mxu0
        %v3087 = vadd.f32 %v2552, %v3086
        %v3088 = vpop.f32.mrf.mxu0
        %3089 = vmatprep.mubr.f32.mxu0 0.0
        %v3090 = vand.u32 %v1049, 4294901760
        %v3091 = vsub.f32 %v1049, %v3090
        %v3092 = vand.u32 %v3091, 4294901760
        %3093 = vmatmul.mubr.f32.gmra.mxu0 %v3092
        %v3094 = vpop.f32.mrf.mxu0
        %v3095 = vadd.f32 %v2559, %v3094
        %v3096 = vpop.f32.mrf.mxu0
        %3097 = vmatprep.mubr.f32.mxu0 0.0
        %v3098 = vand.u32 %v1052, 4294901760
        %v3099 = vsub.f32 %v1052, %v3098
        %v3100 = vand.u32 %v3099, 4294901760
        %3101 = vmatmul.mubr.f32.gmra.mxu0 %v3100
        %v3102 = vpop.f32.mrf.mxu0
        %v3103 = vadd.f32 %v2566, %v3102
        %v3104 = vpop.f32.mrf.mxu0
        %3105 = vmatprep.mubr.f32.mxu0 0.0
        %v3106 = vand.u32 %v1055, 4294901760
        %v3107 = vsub.f32 %v1055, %v3106
        %v3108 = vand.u32 %v3107, 4294901760
        %3109 = vmatmul.mubr.f32.gmra.mxu0 %v3108
        %v3110 = vpop.f32.mrf.mxu0
        %v3111 = vadd.f32 %v2573, %v3110
        %v3112 = vpop.f32.mrf.mxu0
        %3113 = vmatprep.mubr.f32.mxu0 0.0
        %v3114 = vand.u32 %v1058, 4294901760
        %v3115 = vsub.f32 %v1058, %v3114
        %v3116 = vand.u32 %v3115, 4294901760
        %3117 = vmatmul.mubr.f32.gmra.mxu0 %v3116
        %v3118 = vpop.f32.mrf.mxu0
        %v3119 = vadd.f32 %v2580, %v3118
        %v3120 = vpop.f32.mrf.mxu0
        %3121 = vmatprep.mubr.f32.mxu0 0.0
        %v3122 = vand.u32 %v1061, 4294901760
        %v3123 = vsub.f32 %v1061, %v3122
        %v3124 = vand.u32 %v3123, 4294901760
        %3125 = vmatmul.mubr.f32.gmra.mxu0 %v3124
        %v3126 = vpop.f32.mrf.mxu0
        %v3127 = vadd.f32 %v2587, %v3126
        %v3128 = vpop.f32.mrf.mxu0
        %3129 = vmatprep.mubr.f32.mxu0 0.0
        %v3130 = vand.u32 %v1064, 4294901760
        %v3131 = vsub.f32 %v1064, %v3130
        %v3132 = vand.u32 %v3131, 4294901760
        %3133 = vmatmul.mubr.f32.gmra.mxu0 %v3132
        %v3134 = vpop.f32.mrf.mxu0
        %v3135 = vadd.f32 %v2594, %v3134
        %v3136 = vpop.f32.mrf.mxu0
        %3137 = vmatprep.mubr.f32.mxu0 0.0
        %v3138 = vand.u32 %v1067, 4294901760
        %v3139 = vsub.f32 %v1067, %v3138
        %v3140 = vand.u32 %v3139, 4294901760
        %3141 = vmatmul.mubr.f32.gmra.mxu0 %v3140
        %v3142 = vpop.f32.mrf.mxu0
        %v3143 = vadd.f32 %v2601, %v3142
        %v3144 = vpop.f32.mrf.mxu0
        %3145 = vmatprep.mubr.f32.mxu0 0.0
        %v3146 = vand.u32 %v1070, 4294901760
        %v3147 = vsub.f32 %v1070, %v3146
        %v3148 = vand.u32 %v3147, 4294901760
        %3149 = vmatmul.mubr.f32.gmra.mxu0 %v3148
        %v3150 = vpop.f32.mrf.mxu0
        %v3151 = vadd.f32 %v2608, %v3150
        %v3152 = vpop.f32.mrf.mxu0
        %3153 = vmatprep.mubr.f32.mxu0 0.0
        %v3154 = vand.u32 %v1073, 4294901760
        %v3155 = vsub.f32 %v1073, %v3154
        %v3156 = vand.u32 %v3155, 4294901760
        %3157 = vmatmul.mubr.f32.gmra.mxu0 %v3156
        %v3158 = vpop.f32.mrf.mxu0
        %v3159 = vadd.f32 %v2615, %v3158
        %v3160 = vpop.f32.mrf.mxu0
        %3161 = vmatprep.mubr.f32.mxu0 0.0
        %v3162 = vand.u32 %v1076, 4294901760
        %v3163 = vsub.f32 %v1076, %v3162
        %v3164 = vand.u32 %v3163, 4294901760
        %3165 = vmatmul.mubr.f32.gmra.mxu0 %v3164
        %v3166 = vpop.f32.mrf.mxu0
        %v3167 = vadd.f32 %v2622, %v3166
        %v3168 = vpop.f32.mrf.mxu0
        %3169 = vmatprep.mubr.f32.mxu0 0.0
        %v3170 = vand.u32 %v1079, 4294901760
        %v3171 = vsub.f32 %v1079, %v3170
        %v3172 = vand.u32 %v3171, 4294901760
        %3173 = vmatmul.mubr.f32.gmra.mxu0 %v3172
        %v3174 = vpop.f32.mrf.mxu0
        %v3175 = vadd.f32 %v2629, %v3174
        %v3176 = vpop.f32.mrf.mxu0
        %3177 = vmatprep.mubr.f32.mxu0 0.0
        %v3178 = vand.u32 %v1082, 4294901760
        %v3179 = vsub.f32 %v1082, %v3178
        %v3180 = vand.u32 %v3179, 4294901760
        %3181 = vmatmul.mubr.f32.gmra.mxu0 %v3180
        %v3182 = vpop.f32.mrf.mxu0
        %v3183 = vadd.f32 %v2636, %v3182
        %v3184 = vpop.f32.mrf.mxu0
        %3185 = vmatprep.mubr.f32.mxu0 0.0
        %v3186 = vand.u32 %v1085, 4294901760
        %v3187 = vsub.f32 %v1085, %v3186
        %v3188 = vand.u32 %v3187, 4294901760
        %3189 = vmatmul.mubr.f32.gmra.mxu0 %v3188
        %v3190 = vpop.f32.mrf.mxu0
        %v3191 = vadd.f32 %v2643, %v3190
        %v3192 = vpop.f32.mrf.mxu0
        %3193 = vmatprep.mubr.f32.mxu0 0.0
        %v3194 = vand.u32 %v1088, 4294901760
        %v3195 = vsub.f32 %v1088, %v3194
        %v3196 = vand.u32 %v3195, 4294901760
        %3197 = vmatmul.mubr.f32.gmra.mxu0 %v3196
        %v3198 = vpop.f32.mrf.mxu0
        %v3199 = vadd.f32 %v2650, %v3198
        %v3200 = vpop.f32.mrf.mxu0
        %3201 = vmatprep.mubr.f32.mxu0 0.0
        %v3202 = vand.u32 %v1091, 4294901760
        %v3203 = vsub.f32 %v1091, %v3202
        %v3204 = vand.u32 %v3203, 4294901760
        %3205 = vmatmul.mubr.f32.gmra.mxu0 %v3204
        %v3206 = vpop.f32.mrf.mxu0
        %v3207 = vadd.f32 %v2657, %v3206
        %v3208 = vpop.f32.mrf.mxu0
        %3209 = vmatprep.mubr.f32.mxu0 0.0
        %v3210 = vand.u32 %v1094, 4294901760
        %v3211 = vsub.f32 %v1094, %v3210
        %v3212 = vand.u32 %v3211, 4294901760
        %3213 = vmatmul.mubr.f32.gmra.mxu0 %v3212
        %v3214 = vpop.f32.mrf.mxu0
        %v3215 = vadd.f32 %v2664, %v3214
        %v3216 = vpop.f32.mrf.mxu0
        %3217 = vmatprep.mubr.f32.mxu0 0.0
        %v3218 = vand.u32 %v1097, 4294901760
        %v3219 = vsub.f32 %v1097, %v3218
        %v3220 = vand.u32 %v3219, 4294901760
        %3221 = vmatmul.mubr.f32.gmra.mxu0 %v3220
        %v3222 = vpop.f32.mrf.mxu0
        %v3223 = vadd.f32 %v2671, %v3222
        %v3224 = vpop.f32.mrf.mxu0
        %3225 = vmatprep.mubr.f32.mxu0 0.0
        %v3226 = vand.u32 %v1100, 4294901760
        %v3227 = vsub.f32 %v1100, %v3226
        %v3228 = vand.u32 %v3227, 4294901760
        %3229 = vmatmul.mubr.f32.gmra.mxu0 %v3228
        %v3230 = vpop.f32.mrf.mxu0
        %v3231 = vadd.f32 %v2678, %v3230
        %v3232 = vpop.f32.mrf.mxu0
        %3233 = vmatprep.mubr.f32.mxu0 0.0
        %v3234 = vand.u32 %v1103, 4294901760
        %v3235 = vsub.f32 %v1103, %v3234
        %v3236 = vand.u32 %v3235, 4294901760
        %3237 = vmatmul.mubr.f32.gmra.mxu0 %v3236
        %v3238 = vpop.f32.mrf.mxu0
        %v3239 = vadd.f32 %v2685, %v3238
        %v3240 = vpop.f32.mrf.mxu0
        %3241 = vmatprep.mubr.f32.mxu0 0.0
        %v3242 = vand.u32 %v1106, 4294901760
        %v3243 = vsub.f32 %v1106, %v3242
        %v3244 = vand.u32 %v3243, 4294901760
        %3245 = vmatmul.mubr.f32.gmra.mxu0 %v3244
        %v3246 = vpop.f32.mrf.mxu0
        %v3247 = vadd.f32 %v2692, %v3246
        %v3248 = vpop.f32.mrf.mxu0
        %3249 = vmatprep.mubr.f32.mxu0 0.0
        %v3250 = vand.u32 %v1109, 4294901760
        %v3251 = vsub.f32 %v1109, %v3250
        %v3252 = vand.u32 %v3251, 4294901760
        %3253 = vmatmul.mubr.f32.gmra.mxu0 %v3252
        %v3254 = vpop.f32.mrf.mxu0
        %v3255 = vadd.f32 %v2699, %v3254
        %v3256 = vpop.f32.mrf.mxu0
        %3257 = vmatprep.mubr.f32.mxu0 0.0
        %v3258 = vand.u32 %v1112, 4294901760
        %v3259 = vsub.f32 %v1112, %v3258
        %v3260 = vand.u32 %v3259, 4294901760
        %3261 = vmatmul.mubr.f32.gmra.mxu0 %v3260
        %v3262 = vpop.f32.mrf.mxu0
        %v3263 = vadd.f32 %v2706, %v3262
        %v3264 = vpop.f32.mrf.mxu0
        %3265 = vmatprep.mubr.f32.mxu0 0.0
        %v3266 = vand.u32 %v1115, 4294901760
        %v3267 = vsub.f32 %v1115, %v3266
        %v3268 = vand.u32 %v3267, 4294901760
        %3269 = vmatmul.mubr.f32.gmra.mxu0 %v3268
        %v3270 = vpop.f32.mrf.mxu0
        %v3271 = vadd.f32 %v2713, %v3270
        %v3272 = vpop.f32.mrf.mxu0
        %3273 = vmatprep.mubr.f32.mxu0 0.0
        %v3274 = vand.u32 %v1118, 4294901760
        %v3275 = vsub.f32 %v1118, %v3274
        %v3276 = vand.u32 %v3275, 4294901760
        %3277 = vmatmul.mubr.f32.gmra.mxu0 %v3276
        %v3278 = vpop.f32.mrf.mxu0
        %v3279 = vadd.f32 %v2720, %v3278
        %v3280 = vpop.f32.mrf.mxu0
        %3281 = vmatprep.mubr.f32.mxu0 0.0
        %v3282 = vand.u32 %v1121, 4294901760
        %v3283 = vsub.f32 %v1121, %v3282
        %v3284 = vand.u32 %v3283, 4294901760
        %3285 = vmatmul.mubr.f32.gmra.mxu0 %v3284
        %v3286 = vpop.f32.mrf.mxu0
        %v3287 = vadd.f32 %v2727, %v3286
        %v3288 = vpop.f32.mrf.mxu0
        %3289 = vmatprep.mubr.f32.mxu0 0.0
        %v3290 = vand.u32 %v1124, 4294901760
        %v3291 = vsub.f32 %v1124, %v3290
        %v3292 = vand.u32 %v3291, 4294901760
        %3293 = vmatmul.mubr.f32.gmra.mxu0 %v3292
        %v3294 = vpop.f32.mrf.mxu0
        %v3295 = vadd.f32 %v2734, %v3294
        %v3296 = vpop.f32.mrf.mxu0
        %3297 = vmatprep.mubr.f32.mxu0 0.0
        %v3298 = vand.u32 %v1127, 4294901760
        %v3299 = vsub.f32 %v1127, %v3298
        %v3300 = vand.u32 %v3299, 4294901760
        %3301 = vmatmul.mubr.f32.gmra.mxu0 %v3300
        %v3302 = vpop.f32.mrf.mxu0
        %v3303 = vadd.f32 %v2741, %v3302
        %v3304 = vpop.f32.mrf.mxu0
        %3305 = vmatprep.mubr.f32.mxu0 0.0
        %v3306 = vand.u32 %v1130, 4294901760
        %v3307 = vsub.f32 %v1130, %v3306
        %v3308 = vand.u32 %v3307, 4294901760
        %3309 = vmatmul.mubr.f32.gmra.mxu0 %v3308
        %v3310 = vpop.f32.mrf.mxu0
        %v3311 = vadd.f32 %v2748, %v3310
        %v3312 = vpop.f32.mrf.mxu0
        %3313 = vmatprep.mubr.f32.mxu0 0.0
        %v3314 = vand.u32 %v1133, 4294901760
        %v3315 = vsub.f32 %v1133, %v3314
        %v3316 = vand.u32 %v3315, 4294901760
        %3317 = vmatmul.mubr.f32.gmra.mxu0 %v3316
        %v3318 = vpop.f32.mrf.mxu0
        %v3319 = vadd.f32 %v2755, %v3318
        %v3320 = vpop.f32.mrf.mxu0
        %3321 = vmatprep.mubr.f32.mxu0 0.0
        %v3322 = vand.u32 %v1136, 4294901760
        %v3323 = vsub.f32 %v1136, %v3322
        %v3324 = vand.u32 %v3323, 4294901760
        %3325 = vmatmul.mubr.f32.gmra.mxu0 %v3324
        %v3326 = vpop.f32.mrf.mxu0
        %v3327 = vadd.f32 %v2762, %v3326
        %v3328 = vpop.f32.mrf.mxu0
        %3329 = vmatprep.mubr.f32.mxu0 0.0
        %v3330 = vand.u32 %v1139, 4294901760
        %v3331 = vsub.f32 %v1139, %v3330
        %v3332 = vand.u32 %v3331, 4294901760
        %3333 = vmatmul.mubr.f32.gmra.mxu0 %v3332
        %v3334 = vpop.f32.mrf.mxu0
        %v3335 = vadd.f32 %v2769, %v3334
        %v3336 = vpop.f32.mrf.mxu0
        %3337 = vmatprep.mubr.f32.mxu0 0.0
        %v3338 = vand.u32 %v1142, 4294901760
        %v3339 = vsub.f32 %v1142, %v3338
        %v3340 = vand.u32 %v3339, 4294901760
        %3341 = vmatmul.mubr.f32.gmra.mxu0 %v3340
        %v3342 = vpop.f32.mrf.mxu0
        %v3343 = vadd.f32 %v2776, %v3342
        %v3344 = vpop.f32.mrf.mxu0
        %3345 = vmatprep.mubr.f32.mxu0 0.0
        %v3346 = vand.u32 %v1145, 4294901760
        %v3347 = vsub.f32 %v1145, %v3346
        %v3348 = vand.u32 %v3347, 4294901760
        %3349 = vmatmul.mubr.f32.gmra.mxu0 %v3348
        %v3350 = vpop.f32.mrf.mxu0
        %v3351 = vadd.f32 %v2783, %v3350
        %v3352 = vpop.f32.mrf.mxu0
        %3353 = vmatprep.mubr.f32.mxu0 0.0
        %v3354 = vand.u32 %v1148, 4294901760
        %v3355 = vsub.f32 %v1148, %v3354
        %v3356 = vand.u32 %v3355, 4294901760
        %3357 = vmatmul.mubr.f32.gmra.mxu0 %v3356
        %v3358 = vpop.f32.mrf.mxu0
        %v3359 = vadd.f32 %v2790, %v3358
        %v3360 = vpop.f32.mrf.mxu0
        %3361 = vmatprep.mubr.f32.mxu0 0.0
        %v3362 = vand.u32 %v1151, 4294901760
        %v3363 = vsub.f32 %v1151, %v3362
        %v3364 = vand.u32 %v3363, 4294901760
        %3365 = vmatmul.mubr.f32.gmra.mxu0 %v3364
        %v3366 = vpop.f32.mrf.mxu0
        %v3367 = vadd.f32 %v2797, %v3366
        %v3368 = vpop.f32.mrf.mxu0
        %3369 = vmatprep.mubr.f32.mxu0 0.0
        %v3370 = vand.u32 %v1154, 4294901760
        %v3371 = vsub.f32 %v1154, %v3370
        %v3372 = vand.u32 %v3371, 4294901760
        %3373 = vmatmul.mubr.f32.gmra.mxu0 %v3372
        %v3374 = vpop.f32.mrf.mxu0
        %v3375 = vadd.f32 %v2804, %v3374
        %v3376 = vpop.f32.mrf.mxu0
        %3377 = vmatprep.mubr.f32.mxu0 0.0
        %v3378 = vand.u32 %v1157, 4294901760
        %v3379 = vsub.f32 %v1157, %v3378
        %v3380 = vand.u32 %v3379, 4294901760
        %3381 = vmatmul.mubr.f32.gmra.mxu0 %v3380
        %v3382 = vpop.f32.mrf.mxu0
        %v3383 = vadd.f32 %v2811, %v3382
        %v3384 = vpop.f32.mrf.mxu0
        %3385 = vmatprep.mubr.f32.mxu0 0.0
        %v3386 = vand.u32 %v1160, 4294901760
        %v3387 = vsub.f32 %v1160, %v3386
        %v3388 = vand.u32 %v3387, 4294901760
        %3389 = vmatmul.mubr.f32.gmra.mxu0 %v3388
        %v3390 = vpop.f32.mrf.mxu0
        %v3391 = vadd.f32 %v2818, %v3390
        %v3392 = vpop.f32.mrf.mxu0
        %3393 = vmatprep.mubr.f32.mxu0 0.0
        %v3394 = vand.u32 %v1163, 4294901760
        %v3395 = vsub.f32 %v1163, %v3394
        %v3396 = vand.u32 %v3395, 4294901760
        %3397 = vmatmul.mubr.f32.gmra.mxu0 %v3396
        %v3398 = vpop.f32.mrf.mxu0
        %v3399 = vadd.f32 %v2825, %v3398
        %v3400 = vpop.f32.mrf.mxu0
        %3401 = vmatprep.mubr.f32.mxu0 0.0
        %v3402 = vand.u32 %v1166, 4294901760
        %v3403 = vsub.f32 %v1166, %v3402
        %v3404 = vand.u32 %v3403, 4294901760
        %3405 = vmatmul.mubr.f32.gmra.mxu0 %v3404
        %v3406 = vpop.f32.mrf.mxu0
        %v3407 = vadd.f32 %v2832, %v3406
        %v3408 = vpop.f32.mrf.mxu0
        %3409 = vmatprep.mubr.f32.mxu0 0.0
        %v3410 = vand.u32 %v1169, 4294901760
        %v3411 = vsub.f32 %v1169, %v3410
        %v3412 = vand.u32 %v3411, 4294901760
        %3413 = vmatmul.mubr.f32.gmra.mxu0 %v3412
        %v3414 = vpop.f32.mrf.mxu0
        %v3415 = vadd.f32 %v2839, %v3414
        %v3416 = vpop.f32.mrf.mxu0
        %3417 = vmatprep.mubr.f32.mxu0 0.0
        %v3418 = vand.u32 %v1172, 4294901760
        %v3419 = vsub.f32 %v1172, %v3418
        %v3420 = vand.u32 %v3419, 4294901760
        %3421 = vmatmul.mubr.f32.gmra.mxu0 %v3420
        %v3422 = vpop.f32.mrf.mxu0
        %v3423 = vadd.f32 %v2846, %v3422
        %v3424 = vpop.f32.mrf.mxu0
        %3425 = vmatprep.mubr.f32.mxu0 0.0
        %v3426 = vand.u32 %v1175, 4294901760
        %v3427 = vsub.f32 %v1175, %v3426
        %v3428 = vand.u32 %v3427, 4294901760
        %3429 = vmatmul.mubr.f32.gmra.mxu0 %v3428
        %v3430 = vpop.f32.mrf.mxu0
        %v3431 = vadd.f32 %v2853, %v3430
        %v3432 = vpop.f32.mrf.mxu0
        %3433 = vmatprep.mubr.f32.mxu0 0.0
        %v3434 = vand.u32 %v1178, 4294901760
        %v3435 = vsub.f32 %v1178, %v3434
        %v3436 = vand.u32 %v3435, 4294901760
        %3437 = vmatmul.mubr.f32.gmra.mxu0 %v3436
        %v3438 = vpop.f32.mrf.mxu0
        %v3439 = vadd.f32 %v2860, %v3438
        %v3440 = vpop.f32.mrf.mxu0
        %3441 = vdwg.mxu0
        %3442 = vmatprep.subr.mxu0 0.0
        %3443 = vmatpush1.msra.mxu0 0.0
        %3444 = vmatprep.subr.mxu0 0.0
        %3445 = vmatpush1.msra.mxu0 0.0
        %3446 = vmatprep.subr.mxu0 0.0
        %3447 = vmatpush1.msra.mxu0 0.0
        %3448 = vmatprep.subr.mxu0 0.0
        %3449 = vmatpush1.msra.mxu0 0.0
        %3450 = vmatprep.subr.mxu0 0.0
        %3451 = vmatpush1.msra.mxu0 0.0
        %3452 = vmatprep.subr.mxu0 0.0
        %3453 = vmatpush1.msra.mxu0 0.0
        %3454 = vmatprep.subr.mxu0 0.0
        %3455 = vmatpush1.msra.mxu0 0.0
        %3456 = vmatprep.subr.mxu0 0.0
        %3457 = vmatpush1.msra.mxu0 0.0
        %3458 = vmatprep.subr.mxu0 0.0
        %3459 = vmatpush1.msra.mxu0 0.0
        %3460 = vmatprep.subr.mxu0 0.0
        %3461 = vmatpush1.msra.mxu0 0.0
        %3462 = vmatprep.subr.mxu0 0.0
        %3463 = vmatpush1.msra.mxu0 0.0
        %3464 = vmatprep.subr.mxu0 0.0
        %3465 = vmatpush1.msra.mxu0 0.0
        %3466 = vmatprep.subr.mxu0 0.0
        %3467 = vmatpush1.msra.mxu0 0.0
        %3468 = vmatprep.subr.mxu0 0.0
        %3469 = vmatpush1.msra.mxu0 0.0
        %3470 = vmatprep.subr.mxu0 0.0
        %v3471 = vand.u32 %v979, 4294901760
        %v3472 = vsub.f32 %v979, %v3471
        %v3473 = vand.u32 %v3472, 4294901760
        %3474 = vmatpush1.msra.mxu0 %v3473
        %3475 = vmatprep.subr.mxu0 0.0
        %v3476 = vand.u32 %v978, 4294901760
        %v3477 = vsub.f32 %v978, %v3476
        %v3478 = vand.u32 %v3477, 4294901760
        %3479 = vmatpush1.msra.mxu0 %v3478
        %3480 = vmatprep.subr.mxu0 0.0
        %3481 = vmatpush2.msra.mxu0 0.0
        %3482 = vmatprep.subr.mxu0 0.0
        %3483 = vmatpush2.msra.mxu0 0.0
        %3484 = vmatprep.subr.mxu0 0.0
        %3485 = vmatpush2.msra.mxu0 0.0
        %3486 = vmatprep.subr.mxu0 0.0
        %3487 = vmatpush2.msra.mxu0 0.0
        %3488 = vmatprep.subr.mxu0 0.0
        %3489 = vmatpush2.msra.mxu0 0.0
        %3490 = vmatprep.subr.mxu0 0.0
        %3491 = vmatpush2.msra.mxu0 0.0
        %3492 = vmatprep.subr.mxu0 0.0
        %3493 = vmatpush2.msra.mxu0 0.0
        %3494 = vmatprep.subr.mxu0 0.0
        %3495 = vmatpush2.msra.mxu0 0.0
        %3496 = vmatprep.subr.mxu0 0.0
        %3497 = vmatpush2.msra.mxu0 0.0
        %3498 = vmatprep.subr.mxu0 0.0
        %3499 = vmatpush2.msra.mxu0 0.0
        %3500 = vmatprep.subr.mxu0 0.0
        %3501 = vmatpush2.msra.mxu0 0.0
        %3502 = vmatprep.subr.mxu0 0.0
        %3503 = vmatpush2.msra.mxu0 0.0
        %3504 = vmatprep.subr.mxu0 0.0
        %3505 = vmatpush2.msra.mxu0 0.0
        %3506 = vmatprep.subr.mxu0 0.0
        %3507 = vmatpush2.msra.mxu0 0.0
        %3508 = vmatprep.subr.mxu0 0.0
        %3509 = vmatpush2.msra.mxu0 0.0
        %3510 = vmatprep.subr.mxu0 0.0
        %3511 = vmatpush2.msra.mxu0 0.0
        %3512 = vmatprep.mubr.f32.mxu0 0.0
        %v3513 = vand.u32 %v989, 4294901760
        %3514 = vmatmul.mubr.f32.gmra.mxu0 %v3513
        %v3515 = vpop.f32.mrf.mxu0
        %v3516 = vadd.f32 %v2935, %v3515
        %v3517 = vpop.f32.mrf.mxu0
        %3518 = vmatprep.mubr.f32.mxu0 0.0
        %v3519 = vand.u32 %v992, 4294901760
        %3520 = vmatmul.mubr.f32.gmra.mxu0 %v3519
        %v3521 = vpop.f32.mrf.mxu0
        %v3522 = vadd.f32 %v2943, %v3521
        %v3523 = vpop.f32.mrf.mxu0
        %3524 = vmatprep.mubr.f32.mxu0 0.0
        %v3525 = vand.u32 %v995, 4294901760
        %3526 = vmatmul.mubr.f32.gmra.mxu0 %v3525
        %v3527 = vpop.f32.mrf.mxu0
        %v3528 = vadd.f32 %v2951, %v3527
        %v3529 = vpop.f32.mrf.mxu0
        %3530 = vmatprep.mubr.f32.mxu0 0.0
        %v3531 = vand.u32 %v998, 4294901760
        %3532 = vmatmul.mubr.f32.gmra.mxu0 %v3531
        %v3533 = vpop.f32.mrf.mxu0
        %v3534 = vadd.f32 %v2959, %v3533
        %v3535 = vpop.f32.mrf.mxu0
        %3536 = vmatprep.mubr.f32.mxu0 0.0
        %v3537 = vand.u32 %v1001, 4294901760
        %3538 = vmatmul.mubr.f32.gmra.mxu0 %v3537
        %v3539 = vpop.f32.mrf.mxu0
        %v3540 = vadd.f32 %v2967, %v3539
        %v3541 = vpop.f32.mrf.mxu0
        %3542 = vmatprep.mubr.f32.mxu0 0.0
        %v3543 = vand.u32 %v1004, 4294901760
        %3544 = vmatmul.mubr.f32.gmra.mxu0 %v3543
        %v3545 = vpop.f32.mrf.mxu0
        %v3546 = vadd.f32 %v2975, %v3545
        %v3547 = vpop.f32.mrf.mxu0
        %3548 = vmatprep.mubr.f32.mxu0 0.0
        %v3549 = vand.u32 %v1007, 4294901760
        %3550 = vmatmul.mubr.f32.gmra.mxu0 %v3549
        %v3551 = vpop.f32.mrf.mxu0
        %v3552 = vadd.f32 %v2983, %v3551
        %v3553 = vpop.f32.mrf.mxu0
        %3554 = vmatprep.mubr.f32.mxu0 0.0
        %v3555 = vand.u32 %v1010, 4294901760
        %3556 = vmatmul.mubr.f32.gmra.mxu0 %v3555
        %v3557 = vpop.f32.mrf.mxu0
        %v3558 = vadd.f32 %v2991, %v3557
        %v3559 = vpop.f32.mrf.mxu0
        %3560 = vmatprep.mubr.f32.mxu0 0.0
        %v3561 = vand.u32 %v1013, 4294901760
        %3562 = vmatmul.mubr.f32.gmra.mxu0 %v3561
        %v3563 = vpop.f32.mrf.mxu0
        %v3564 = vadd.f32 %v2999, %v3563
        %v3565 = vpop.f32.mrf.mxu0
        %3566 = vmatprep.mubr.f32.mxu0 0.0
        %v3567 = vand.u32 %v1016, 4294901760
        %3568 = vmatmul.mubr.f32.gmra.mxu0 %v3567
        %v3569 = vpop.f32.mrf.mxu0
        %v3570 = vadd.f32 %v3007, %v3569
        %v3571 = vpop.f32.mrf.mxu0
        %3572 = vmatprep.mubr.f32.mxu0 0.0
        %v3573 = vand.u32 %v1019, 4294901760
        %3574 = vmatmul.mubr.f32.gmra.mxu0 %v3573
        %v3575 = vpop.f32.mrf.mxu0
        %v3576 = vadd.f32 %v3015, %v3575
        %v3577 = vpop.f32.mrf.mxu0
        %3578 = vmatprep.mubr.f32.mxu0 0.0
        %v3579 = vand.u32 %v1022, 4294901760
        %3580 = vmatmul.mubr.f32.gmra.mxu0 %v3579
        %v3581 = vpop.f32.mrf.mxu0
        %v3582 = vadd.f32 %v3023, %v3581
        %v3583 = vpop.f32.mrf.mxu0
        %3584 = vmatprep.mubr.f32.mxu0 0.0
        %v3585 = vand.u32 %v1025, 4294901760
        %3586 = vmatmul.mubr.f32.gmra.mxu0 %v3585
        %v3587 = vpop.f32.mrf.mxu0
        %v3588 = vadd.f32 %v3031, %v3587
        %v3589 = vpop.f32.mrf.mxu0
        %3590 = vmatprep.mubr.f32.mxu0 0.0
        %v3591 = vand.u32 %v1028, 4294901760
        %3592 = vmatmul.mubr.f32.gmra.mxu0 %v3591
        %v3593 = vpop.f32.mrf.mxu0
        %v3594 = vadd.f32 %v3039, %v3593
        %v3595 = vpop.f32.mrf.mxu0
        %3596 = vmatprep.mubr.f32.mxu0 0.0
        %v3597 = vand.u32 %v1031, 4294901760
        %3598 = vmatmul.mubr.f32.gmra.mxu0 %v3597
        %v3599 = vpop.f32.mrf.mxu0
        %v3600 = vadd.f32 %v3047, %v3599
        %v3601 = vpop.f32.mrf.mxu0
        %3602 = vmatprep.mubr.f32.mxu0 0.0
        %v3603 = vand.u32 %v1034, 4294901760
        %3604 = vmatmul.mubr.f32.gmra.mxu0 %v3603
        %v3605 = vpop.f32.mrf.mxu0
        %v3606 = vadd.f32 %v3055, %v3605
        %v3607 = vpop.f32.mrf.mxu0
        %3608 = vmatprep.mubr.f32.mxu0 0.0
        %v3609 = vand.u32 %v1037, 4294901760
        %3610 = vmatmul.mubr.f32.gmra.mxu0 %v3609
        %v3611 = vpop.f32.mrf.mxu0
        %v3612 = vadd.f32 %v3063, %v3611
        %v3613 = vpop.f32.mrf.mxu0
        %3614 = vmatprep.mubr.f32.mxu0 0.0
        %v3615 = vand.u32 %v1040, 4294901760
        %3616 = vmatmul.mubr.f32.gmra.mxu0 %v3615
        %v3617 = vpop.f32.mrf.mxu0
        %v3618 = vadd.f32 %v3071, %v3617
        %v3619 = vpop.f32.mrf.mxu0
        %3620 = vmatprep.mubr.f32.mxu0 0.0
        %v3621 = vand.u32 %v1043, 4294901760
        %3622 = vmatmul.mubr.f32.gmra.mxu0 %v3621
        %v3623 = vpop.f32.mrf.mxu0
        %v3624 = vadd.f32 %v3079, %v3623
        %v3625 = vpop.f32.mrf.mxu0
        %3626 = vmatprep.mubr.f32.mxu0 0.0
        %v3627 = vand.u32 %v1046, 4294901760
        %3628 = vmatmul.mubr.f32.gmra.mxu0 %v3627
        %v3629 = vpop.f32.mrf.mxu0
        %v3630 = vadd.f32 %v3087, %v3629
        %v3631 = vpop.f32.mrf.mxu0
        %3632 = vmatprep.mubr.f32.mxu0 0.0
        %v3633 = vand.u32 %v1049, 4294901760
        %3634 = vmatmul.mubr.f32.gmra.mxu0 %v3633
        %v3635 = vpop.f32.mrf.mxu0
        %v3636 = vadd.f32 %v3095, %v3635
        %v3637 = vpop.f32.mrf.mxu0
        %3638 = vmatprep.mubr.f32.mxu0 0.0
        %v3639 = vand.u32 %v1052, 4294901760
        %3640 = vmatmul.mubr.f32.gmra.mxu0 %v3639
        %v3641 = vpop.f32.mrf.mxu0
        %v3642 = vadd.f32 %v3103, %v3641
        %v3643 = vpop.f32.mrf.mxu0
        %3644 = vmatprep.mubr.f32.mxu0 0.0
        %v3645 = vand.u32 %v1055, 4294901760
        %3646 = vmatmul.mubr.f32.gmra.mxu0 %v3645
        %v3647 = vpop.f32.mrf.mxu0
        %v3648 = vadd.f32 %v3111, %v3647
        %v3649 = vpop.f32.mrf.mxu0
        %3650 = vmatprep.mubr.f32.mxu0 0.0
        %v3651 = vand.u32 %v1058, 4294901760
        %3652 = vmatmul.mubr.f32.gmra.mxu0 %v3651
        %v3653 = vpop.f32.mrf.mxu0
        %v3654 = vadd.f32 %v3119, %v3653
        %v3655 = vpop.f32.mrf.mxu0
        %3656 = vmatprep.mubr.f32.mxu0 0.0
        %v3657 = vand.u32 %v1061, 4294901760
        %3658 = vmatmul.mubr.f32.gmra.mxu0 %v3657
        %v3659 = vpop.f32.mrf.mxu0
        %v3660 = vadd.f32 %v3127, %v3659
        %v3661 = vpop.f32.mrf.mxu0
        %3662 = vmatprep.mubr.f32.mxu0 0.0
        %v3663 = vand.u32 %v1064, 4294901760
        %3664 = vmatmul.mubr.f32.gmra.mxu0 %v3663
        %v3665 = vpop.f32.mrf.mxu0
        %v3666 = vadd.f32 %v3135, %v3665
        %v3667 = vpop.f32.mrf.mxu0
        %3668 = vmatprep.mubr.f32.mxu0 0.0
        %v3669 = vand.u32 %v1067, 4294901760
        %3670 = vmatmul.mubr.f32.gmra.mxu0 %v3669
        %v3671 = vpop.f32.mrf.mxu0
        %v3672 = vadd.f32 %v3143, %v3671
        %v3673 = vpop.f32.mrf.mxu0
        %3674 = vmatprep.mubr.f32.mxu0 0.0
        %v3675 = vand.u32 %v1070, 4294901760
        %3676 = vmatmul.mubr.f32.gmra.mxu0 %v3675
        %v3677 = vpop.f32.mrf.mxu0
        %v3678 = vadd.f32 %v3151, %v3677
        %v3679 = vpop.f32.mrf.mxu0
        %3680 = vmatprep.mubr.f32.mxu0 0.0
        %v3681 = vand.u32 %v1073, 4294901760
        %3682 = vmatmul.mubr.f32.gmra.mxu0 %v3681
        %v3683 = vpop.f32.mrf.mxu0
        %v3684 = vadd.f32 %v3159, %v3683
        %v3685 = vpop.f32.mrf.mxu0
        %3686 = vmatprep.mubr.f32.mxu0 0.0
        %v3687 = vand.u32 %v1076, 4294901760
        %3688 = vmatmul.mubr.f32.gmra.mxu0 %v3687
        %v3689 = vpop.f32.mrf.mxu0
        %v3690 = vadd.f32 %v3167, %v3689
        %v3691 = vpop.f32.mrf.mxu0
        %3692 = vmatprep.mubr.f32.mxu0 0.0
        %v3693 = vand.u32 %v1079, 4294901760
        %3694 = vmatmul.mubr.f32.gmra.mxu0 %v3693
        %v3695 = vpop.f32.mrf.mxu0
        %v3696 = vadd.f32 %v3175, %v3695
        %v3697 = vpop.f32.mrf.mxu0
        %3698 = vmatprep.mubr.f32.mxu0 0.0
        %v3699 = vand.u32 %v1082, 4294901760
        %3700 = vmatmul.mubr.f32.gmra.mxu0 %v3699
        %v3701 = vpop.f32.mrf.mxu0
        %v3702 = vadd.f32 %v3183, %v3701
        %v3703 = vpop.f32.mrf.mxu0
        %3704 = vmatprep.mubr.f32.mxu0 0.0
        %v3705 = vand.u32 %v1085, 4294901760
        %3706 = vmatmul.mubr.f32.gmra.mxu0 %v3705
        %v3707 = vpop.f32.mrf.mxu0
        %v3708 = vadd.f32 %v3191, %v3707
        %v3709 = vpop.f32.mrf.mxu0
        %3710 = vmatprep.mubr.f32.mxu0 0.0
        %v3711 = vand.u32 %v1088, 4294901760
        %3712 = vmatmul.mubr.f32.gmra.mxu0 %v3711
        %v3713 = vpop.f32.mrf.mxu0
        %v3714 = vadd.f32 %v3199, %v3713
        %v3715 = vpop.f32.mrf.mxu0
        %3716 = vmatprep.mubr.f32.mxu0 0.0
        %v3717 = vand.u32 %v1091, 4294901760
        %3718 = vmatmul.mubr.f32.gmra.mxu0 %v3717
        %v3719 = vpop.f32.mrf.mxu0
        %v3720 = vadd.f32 %v3207, %v3719
        %v3721 = vpop.f32.mrf.mxu0
        %3722 = vmatprep.mubr.f32.mxu0 0.0
        %v3723 = vand.u32 %v1094, 4294901760
        %3724 = vmatmul.mubr.f32.gmra.mxu0 %v3723
        %v3725 = vpop.f32.mrf.mxu0
        %v3726 = vadd.f32 %v3215, %v3725
        %v3727 = vpop.f32.mrf.mxu0
        %3728 = vmatprep.mubr.f32.mxu0 0.0
        %v3729 = vand.u32 %v1097, 4294901760
        %3730 = vmatmul.mubr.f32.gmra.mxu0 %v3729
        %v3731 = vpop.f32.mrf.mxu0
        %v3732 = vadd.f32 %v3223, %v3731
        %v3733 = vpop.f32.mrf.mxu0
        %3734 = vmatprep.mubr.f32.mxu0 0.0
        %v3735 = vand.u32 %v1100, 4294901760
        %3736 = vmatmul.mubr.f32.gmra.mxu0 %v3735
        %v3737 = vpop.f32.mrf.mxu0
        %v3738 = vadd.f32 %v3231, %v3737
        %v3739 = vpop.f32.mrf.mxu0
        %3740 = vmatprep.mubr.f32.mxu0 0.0
        %v3741 = vand.u32 %v1103, 4294901760
        %3742 = vmatmul.mubr.f32.gmra.mxu0 %v3741
        %v3743 = vpop.f32.mrf.mxu0
        %v3744 = vadd.f32 %v3239, %v3743
        %v3745 = vpop.f32.mrf.mxu0
        %3746 = vmatprep.mubr.f32.mxu0 0.0
        %v3747 = vand.u32 %v1106, 4294901760
        %3748 = vmatmul.mubr.f32.gmra.mxu0 %v3747
        %v3749 = vpop.f32.mrf.mxu0
        %v3750 = vadd.f32 %v3247, %v3749
        %v3751 = vpop.f32.mrf.mxu0
        %3752 = vmatprep.mubr.f32.mxu0 0.0
        %v3753 = vand.u32 %v1109, 4294901760
        %3754 = vmatmul.mubr.f32.gmra.mxu0 %v3753
        %v3755 = vpop.f32.mrf.mxu0
        %v3756 = vadd.f32 %v3255, %v3755
        %v3757 = vpop.f32.mrf.mxu0
        %3758 = vmatprep.mubr.f32.mxu0 0.0
        %v3759 = vand.u32 %v1112, 4294901760
        %3760 = vmatmul.mubr.f32.gmra.mxu0 %v3759
        %v3761 = vpop.f32.mrf.mxu0
        %v3762 = vadd.f32 %v3263, %v3761
        %v3763 = vpop.f32.mrf.mxu0
        %3764 = vmatprep.mubr.f32.mxu0 0.0
        %v3765 = vand.u32 %v1115, 4294901760
        %3766 = vmatmul.mubr.f32.gmra.mxu0 %v3765
        %v3767 = vpop.f32.mrf.mxu0
        %v3768 = vadd.f32 %v3271, %v3767
        %v3769 = vpop.f32.mrf.mxu0
        %3770 = vmatprep.mubr.f32.mxu0 0.0
        %v3771 = vand.u32 %v1118, 4294901760
        %3772 = vmatmul.mubr.f32.gmra.mxu0 %v3771
        %v3773 = vpop.f32.mrf.mxu0
        %v3774 = vadd.f32 %v3279, %v3773
        %v3775 = vpop.f32.mrf.mxu0
        %3776 = vmatprep.mubr.f32.mxu0 0.0
        %v3777 = vand.u32 %v1121, 4294901760
        %3778 = vmatmul.mubr.f32.gmra.mxu0 %v3777
        %v3779 = vpop.f32.mrf.mxu0
        %v3780 = vadd.f32 %v3287, %v3779
        %v3781 = vpop.f32.mrf.mxu0
        %3782 = vmatprep.mubr.f32.mxu0 0.0
        %v3783 = vand.u32 %v1124, 4294901760
        %3784 = vmatmul.mubr.f32.gmra.mxu0 %v3783
        %v3785 = vpop.f32.mrf.mxu0
        %v3786 = vadd.f32 %v3295, %v3785
        %v3787 = vpop.f32.mrf.mxu0
        %3788 = vmatprep.mubr.f32.mxu0 0.0
        %v3789 = vand.u32 %v1127, 4294901760
        %3790 = vmatmul.mubr.f32.gmra.mxu0 %v3789
        %v3791 = vpop.f32.mrf.mxu0
        %v3792 = vadd.f32 %v3303, %v3791
        %v3793 = vpop.f32.mrf.mxu0
        %3794 = vmatprep.mubr.f32.mxu0 0.0
        %v3795 = vand.u32 %v1130, 4294901760
        %3796 = vmatmul.mubr.f32.gmra.mxu0 %v3795
        %v3797 = vpop.f32.mrf.mxu0
        %v3798 = vadd.f32 %v3311, %v3797
        %v3799 = vpop.f32.mrf.mxu0
        %3800 = vmatprep.mubr.f32.mxu0 0.0
        %v3801 = vand.u32 %v1133, 4294901760
        %3802 = vmatmul.mubr.f32.gmra.mxu0 %v3801
        %v3803 = vpop.f32.mrf.mxu0
        %v3804 = vadd.f32 %v3319, %v3803
        %v3805 = vpop.f32.mrf.mxu0
        %3806 = vmatprep.mubr.f32.mxu0 0.0
        %v3807 = vand.u32 %v1136, 4294901760
        %3808 = vmatmul.mubr.f32.gmra.mxu0 %v3807
        %v3809 = vpop.f32.mrf.mxu0
        %v3810 = vadd.f32 %v3327, %v3809
        %v3811 = vpop.f32.mrf.mxu0
        %3812 = vmatprep.mubr.f32.mxu0 0.0
        %v3813 = vand.u32 %v1139, 4294901760
        %3814 = vmatmul.mubr.f32.gmra.mxu0 %v3813
        %v3815 = vpop.f32.mrf.mxu0
        %v3816 = vadd.f32 %v3335, %v3815
        %v3817 = vpop.f32.mrf.mxu0
        %3818 = vmatprep.mubr.f32.mxu0 0.0
        %v3819 = vand.u32 %v1142, 4294901760
        %3820 = vmatmul.mubr.f32.gmra.mxu0 %v3819
        %v3821 = vpop.f32.mrf.mxu0
        %v3822 = vadd.f32 %v3343, %v3821
        %v3823 = vpop.f32.mrf.mxu0
        %3824 = vmatprep.mubr.f32.mxu0 0.0
        %v3825 = vand.u32 %v1145, 4294901760
        %3826 = vmatmul.mubr.f32.gmra.mxu0 %v3825
        %v3827 = vpop.f32.mrf.mxu0
        %v3828 = vadd.f32 %v3351, %v3827
        %v3829 = vpop.f32.mrf.mxu0
        %3830 = vmatprep.mubr.f32.mxu0 0.0
        %v3831 = vand.u32 %v1148, 4294901760
        %3832 = vmatmul.mubr.f32.gmra.mxu0 %v3831
        %v3833 = vpop.f32.mrf.mxu0
        %v3834 = vadd.f32 %v3359, %v3833
        %v3835 = vpop.f32.mrf.mxu0
        %3836 = vmatprep.mubr.f32.mxu0 0.0
        %v3837 = vand.u32 %v1151, 4294901760
        %3838 = vmatmul.mubr.f32.gmra.mxu0 %v3837
        %v3839 = vpop.f32.mrf.mxu0
        %v3840 = vadd.f32 %v3367, %v3839
        %v3841 = vpop.f32.mrf.mxu0
        %3842 = vmatprep.mubr.f32.mxu0 0.0
        %v3843 = vand.u32 %v1154, 4294901760
        %3844 = vmatmul.mubr.f32.gmra.mxu0 %v3843
        %v3845 = vpop.f32.mrf.mxu0
        %v3846 = vadd.f32 %v3375, %v3845
        %v3847 = vpop.f32.mrf.mxu0
        %3848 = vmatprep.mubr.f32.mxu0 0.0
        %v3849 = vand.u32 %v1157, 4294901760
        %3850 = vmatmul.mubr.f32.gmra.mxu0 %v3849
        %v3851 = vpop.f32.mrf.mxu0
        %v3852 = vadd.f32 %v3383, %v3851
        %v3853 = vpop.f32.mrf.mxu0
        %3854 = vmatprep.mubr.f32.mxu0 0.0
        %v3855 = vand.u32 %v1160, 4294901760
        %3856 = vmatmul.mubr.f32.gmra.mxu0 %v3855
        %v3857 = vpop.f32.mrf.mxu0
        %v3858 = vadd.f32 %v3391, %v3857
        %v3859 = vpop.f32.mrf.mxu0
        %3860 = vmatprep.mubr.f32.mxu0 0.0
        %v3861 = vand.u32 %v1163, 4294901760
        %3862 = vmatmul.mubr.f32.gmra.mxu0 %v3861
        %v3863 = vpop.f32.mrf.mxu0
        %v3864 = vadd.f32 %v3399, %v3863
        %v3865 = vpop.f32.mrf.mxu0
        %3866 = vmatprep.mubr.f32.mxu0 0.0
        %v3867 = vand.u32 %v1166, 4294901760
        %3868 = vmatmul.mubr.f32.gmra.mxu0 %v3867
        %v3869 = vpop.f32.mrf.mxu0
        %v3870 = vadd.f32 %v3407, %v3869
        %v3871 = vpop.f32.mrf.mxu0
        %3872 = vmatprep.mubr.f32.mxu0 0.0
        %v3873 = vand.u32 %v1169, 4294901760
        %3874 = vmatmul.mubr.f32.gmra.mxu0 %v3873
        %v3875 = vpop.f32.mrf.mxu0
        %v3876 = vadd.f32 %v3415, %v3875
        %v3877 = vpop.f32.mrf.mxu0
        %3878 = vmatprep.mubr.f32.mxu0 0.0
        %v3879 = vand.u32 %v1172, 4294901760
        %3880 = vmatmul.mubr.f32.gmra.mxu0 %v3879
        %v3881 = vpop.f32.mrf.mxu0
        %v3882 = vadd.f32 %v3423, %v3881
        %v3883 = vpop.f32.mrf.mxu0
        %3884 = vmatprep.mubr.f32.mxu0 0.0
        %v3885 = vand.u32 %v1175, 4294901760
        %3886 = vmatmul.mubr.f32.gmra.mxu0 %v3885
        %v3887 = vpop.f32.mrf.mxu0
        %v3888 = vadd.f32 %v3431, %v3887
        %v3889 = vpop.f32.mrf.mxu0
        %3890 = vmatprep.mubr.f32.mxu0 0.0
        %v3891 = vand.u32 %v1178, 4294901760
        %3892 = vmatmul.mubr.f32.gmra.mxu0 %v3891
        %v3893 = vpop.f32.mrf.mxu0
        %v3894 = vadd.f32 %v3439, %v3893
        %v3895 = vpop.f32.mrf.mxu0
        %3896 = vdwg.mxu0
        %3897 = vmatprep.subr.mxu0 0.0
        %3898 = vmatpush1.msra.mxu0 0.0
        %3899 = vmatprep.subr.mxu0 0.0
        %3900 = vmatpush1.msra.mxu0 0.0
        %3901 = vmatprep.subr.mxu0 0.0
        %3902 = vmatpush1.msra.mxu0 0.0
        %3903 = vmatprep.subr.mxu0 0.0
        %3904 = vmatpush1.msra.mxu0 0.0
        %3905 = vmatprep.subr.mxu0 0.0
        %3906 = vmatpush1.msra.mxu0 0.0
        %3907 = vmatprep.subr.mxu0 0.0
        %3908 = vmatpush1.msra.mxu0 0.0
        %3909 = vmatprep.subr.mxu0 0.0
        %3910 = vmatpush1.msra.mxu0 0.0
        %3911 = vmatprep.subr.mxu0 0.0
        %3912 = vmatpush1.msra.mxu0 0.0
        %3913 = vmatprep.subr.mxu0 0.0
        %3914 = vmatpush1.msra.mxu0 0.0
        %3915 = vmatprep.subr.mxu0 0.0
        %3916 = vmatpush1.msra.mxu0 0.0
        %3917 = vmatprep.subr.mxu0 0.0
        %3918 = vmatpush1.msra.mxu0 0.0
        %3919 = vmatprep.subr.mxu0 0.0
        %3920 = vmatpush1.msra.mxu0 0.0
        %3921 = vmatprep.subr.mxu0 0.0
        %3922 = vmatpush1.msra.mxu0 0.0
        %3923 = vmatprep.subr.mxu0 0.0
        %3924 = vmatpush1.msra.mxu0 0.0
        %3925 = vmatprep.subr.mxu0 0.0
        %v3926 = vand.u32 %v979, 4294901760
        %3927 = vmatpush1.msra.mxu0 %v3926
        %3928 = vmatprep.subr.mxu0 0.0
        %v3929 = vand.u32 %v978, 4294901760
        %3930 = vmatpush1.msra.mxu0 %v3929
        %3931 = vmatprep.subr.mxu0 0.0
        %3932 = vmatpush2.msra.mxu0 0.0
        %3933 = vmatprep.subr.mxu0 0.0
        %3934 = vmatpush2.msra.mxu0 0.0
        %3935 = vmatprep.subr.mxu0 0.0
        %3936 = vmatpush2.msra.mxu0 0.0
        %3937 = vmatprep.subr.mxu0 0.0
        %3938 = vmatpush2.msra.mxu0 0.0
        %3939 = vmatprep.subr.mxu0 0.0
        %3940 = vmatpush2.msra.mxu0 0.0
        %3941 = vmatprep.subr.mxu0 0.0
        %3942 = vmatpush2.msra.mxu0 0.0
        %3943 = vmatprep.subr.mxu0 0.0
        %3944 = vmatpush2.msra.mxu0 0.0
        %3945 = vmatprep.subr.mxu0 0.0
        %3946 = vmatpush2.msra.mxu0 0.0
        %3947 = vmatprep.subr.mxu0 0.0
        %3948 = vmatpush2.msra.mxu0 0.0
        %3949 = vmatprep.subr.mxu0 0.0
        %3950 = vmatpush2.msra.mxu0 0.0
        %3951 = vmatprep.subr.mxu0 0.0
        %3952 = vmatpush2.msra.mxu0 0.0
        %3953 = vmatprep.subr.mxu0 0.0
        %3954 = vmatpush2.msra.mxu0 0.0
        %3955 = vmatprep.subr.mxu0 0.0
        %3956 = vmatpush2.msra.mxu0 0.0
        %3957 = vmatprep.subr.mxu0 0.0
        %3958 = vmatpush2.msra.mxu0 0.0
        %3959 = vmatprep.subr.mxu0 0.0
        %3960 = vmatpush2.msra.mxu0 0.0
        %3961 = vmatprep.subr.mxu0 0.0
        %3962 = vmatpush2.msra.mxu0 0.0
        %3963 = vmatprep.mubr.f32.mxu0 0.0
        %v3964 = vand.u32 %v989, 4294901760
        %3965 = vmatmul.mubr.f32.gmra.mxu0 %v3964
        %v3966 = vpop.f32.mrf.mxu0
        %v3967 = vadd.f32 %v3516, %v3966
        %v3968 = vpop.f32.mrf.mxu0
        %3969 = vmatprep.mubr.f32.mxu0 0.0
        %v3970 = vand.u32 %v992, 4294901760
        %3971 = vmatmul.mubr.f32.gmra.mxu0 %v3970
        %v3972 = vpop.f32.mrf.mxu0
        %v3973 = vadd.f32 %v3522, %v3972
        %v3974 = vpop.f32.mrf.mxu0
        %3975 = vmatprep.mubr.f32.mxu0 0.0
        %v3976 = vand.u32 %v995, 4294901760
        %3977 = vmatmul.mubr.f32.gmra.mxu0 %v3976
        %v3978 = vpop.f32.mrf.mxu0
        %v3979 = vadd.f32 %v3528, %v3978
        %v3980 = vpop.f32.mrf.mxu0
        %3981 = vmatprep.mubr.f32.mxu0 0.0
        %v3982 = vand.u32 %v998, 4294901760
        %3983 = vmatmul.mubr.f32.gmra.mxu0 %v3982
        %v3984 = vpop.f32.mrf.mxu0
        %v3985 = vadd.f32 %v3534, %v3984
        %v3986 = vpop.f32.mrf.mxu0
        %3987 = vmatprep.mubr.f32.mxu0 0.0
        %v3988 = vand.u32 %v1001, 4294901760
        %3989 = vmatmul.mubr.f32.gmra.mxu0 %v3988
        %v3990 = vpop.f32.mrf.mxu0
        %v3991 = vadd.f32 %v3540, %v3990
        %v3992 = vpop.f32.mrf.mxu0
        %3993 = vmatprep.mubr.f32.mxu0 0.0
        %v3994 = vand.u32 %v1004, 4294901760
        %3995 = vmatmul.mubr.f32.gmra.mxu0 %v3994
        %v3996 = vpop.f32.mrf.mxu0
        %v3997 = vadd.f32 %v3546, %v3996
        %v3998 = vpop.f32.mrf.mxu0
        %3999 = vmatprep.mubr.f32.mxu0 0.0
        %v4000 = vand.u32 %v1007, 4294901760
        %4001 = vmatmul.mubr.f32.gmra.mxu0 %v4000
        %v4002 = vpop.f32.mrf.mxu0
        %v4003 = vadd.f32 %v3552, %v4002
        %v4004 = vpop.f32.mrf.mxu0
        %4005 = vmatprep.mubr.f32.mxu0 0.0
        %v4006 = vand.u32 %v1010, 4294901760
        %4007 = vmatmul.mubr.f32.gmra.mxu0 %v4006
        %v4008 = vpop.f32.mrf.mxu0
        %v4009 = vadd.f32 %v3558, %v4008
        %v4010 = vpop.f32.mrf.mxu0
        %4011 = vmatprep.mubr.f32.mxu0 0.0
        %v4012 = vand.u32 %v1013, 4294901760
        %4013 = vmatmul.mubr.f32.gmra.mxu0 %v4012
        %v4014 = vpop.f32.mrf.mxu0
        %v4015 = vadd.f32 %v3564, %v4014
        %v4016 = vpop.f32.mrf.mxu0
        %4017 = vmatprep.mubr.f32.mxu0 0.0
        %v4018 = vand.u32 %v1016, 4294901760
        %4019 = vmatmul.mubr.f32.gmra.mxu0 %v4018
        %v4020 = vpop.f32.mrf.mxu0
        %v4021 = vadd.f32 %v3570, %v4020
        %v4022 = vpop.f32.mrf.mxu0
        %4023 = vmatprep.mubr.f32.mxu0 0.0
        %v4024 = vand.u32 %v1019, 4294901760
        %4025 = vmatmul.mubr.f32.gmra.mxu0 %v4024
        %v4026 = vpop.f32.mrf.mxu0
        %v4027 = vadd.f32 %v3576, %v4026
        %v4028 = vpop.f32.mrf.mxu0
        %4029 = vmatprep.mubr.f32.mxu0 0.0
        %v4030 = vand.u32 %v1022, 4294901760
        %4031 = vmatmul.mubr.f32.gmra.mxu0 %v4030
        %v4032 = vpop.f32.mrf.mxu0
        %v4033 = vadd.f32 %v3582, %v4032
        %v4034 = vpop.f32.mrf.mxu0
        %4035 = vmatprep.mubr.f32.mxu0 0.0
        %v4036 = vand.u32 %v1025, 4294901760
        %4037 = vmatmul.mubr.f32.gmra.mxu0 %v4036
        %v4038 = vpop.f32.mrf.mxu0
        %v4039 = vadd.f32 %v3588, %v4038
        %v4040 = vpop.f32.mrf.mxu0
        %4041 = vmatprep.mubr.f32.mxu0 0.0
        %v4042 = vand.u32 %v1028, 4294901760
        %4043 = vmatmul.mubr.f32.gmra.mxu0 %v4042
        %v4044 = vpop.f32.mrf.mxu0
        %v4045 = vadd.f32 %v3594, %v4044
        %v4046 = vpop.f32.mrf.mxu0
        %4047 = vmatprep.mubr.f32.mxu0 0.0
        %v4048 = vand.u32 %v1031, 4294901760
        %4049 = vmatmul.mubr.f32.gmra.mxu0 %v4048
        %v4050 = vpop.f32.mrf.mxu0
        %v4051 = vadd.f32 %v3600, %v4050
        %v4052 = vpop.f32.mrf.mxu0
        %4053 = vmatprep.mubr.f32.mxu0 0.0
        %v4054 = vand.u32 %v1034, 4294901760
        %4055 = vmatmul.mubr.f32.gmra.mxu0 %v4054
        %v4056 = vpop.f32.mrf.mxu0
        %v4057 = vadd.f32 %v3606, %v4056
        %v4058 = vpop.f32.mrf.mxu0
        %4059 = vmatprep.mubr.f32.mxu0 0.0
        %v4060 = vand.u32 %v1037, 4294901760
        %4061 = vmatmul.mubr.f32.gmra.mxu0 %v4060
        %v4062 = vpop.f32.mrf.mxu0
        %v4063 = vadd.f32 %v3612, %v4062
        %v4064 = vpop.f32.mrf.mxu0
        %4065 = vmatprep.mubr.f32.mxu0 0.0
        %v4066 = vand.u32 %v1040, 4294901760
        %4067 = vmatmul.mubr.f32.gmra.mxu0 %v4066
        %v4068 = vpop.f32.mrf.mxu0
        %v4069 = vadd.f32 %v3618, %v4068
        %v4070 = vpop.f32.mrf.mxu0
        %4071 = vmatprep.mubr.f32.mxu0 0.0
        %v4072 = vand.u32 %v1043, 4294901760
        %4073 = vmatmul.mubr.f32.gmra.mxu0 %v4072
        %v4074 = vpop.f32.mrf.mxu0
        %v4075 = vadd.f32 %v3624, %v4074
        %v4076 = vpop.f32.mrf.mxu0
        %4077 = vmatprep.mubr.f32.mxu0 0.0
        %v4078 = vand.u32 %v1046, 4294901760
        %4079 = vmatmul.mubr.f32.gmra.mxu0 %v4078
        %v4080 = vpop.f32.mrf.mxu0
        %v4081 = vadd.f32 %v3630, %v4080
        %v4082 = vpop.f32.mrf.mxu0
        %4083 = vmatprep.mubr.f32.mxu0 0.0
        %v4084 = vand.u32 %v1049, 4294901760
        %4085 = vmatmul.mubr.f32.gmra.mxu0 %v4084
        %v4086 = vpop.f32.mrf.mxu0
        %v4087 = vadd.f32 %v3636, %v4086
        %v4088 = vpop.f32.mrf.mxu0
        %4089 = vmatprep.mubr.f32.mxu0 0.0
        %v4090 = vand.u32 %v1052, 4294901760
        %4091 = vmatmul.mubr.f32.gmra.mxu0 %v4090
        %v4092 = vpop.f32.mrf.mxu0
        %v4093 = vadd.f32 %v3642, %v4092
        %v4094 = vpop.f32.mrf.mxu0
        %4095 = vmatprep.mubr.f32.mxu0 0.0
        %v4096 = vand.u32 %v1055, 4294901760
        %4097 = vmatmul.mubr.f32.gmra.mxu0 %v4096
        %v4098 = vpop.f32.mrf.mxu0
        %v4099 = vadd.f32 %v3648, %v4098
        %v4100 = vpop.f32.mrf.mxu0
        %4101 = vmatprep.mubr.f32.mxu0 0.0
        %v4102 = vand.u32 %v1058, 4294901760
        %4103 = vmatmul.mubr.f32.gmra.mxu0 %v4102
        %v4104 = vpop.f32.mrf.mxu0
        %v4105 = vadd.f32 %v3654, %v4104
        %v4106 = vpop.f32.mrf.mxu0
        %4107 = vmatprep.mubr.f32.mxu0 0.0
        %v4108 = vand.u32 %v1061, 4294901760
        %4109 = vmatmul.mubr.f32.gmra.mxu0 %v4108
        %v4110 = vpop.f32.mrf.mxu0
        %v4111 = vadd.f32 %v3660, %v4110
        %v4112 = vpop.f32.mrf.mxu0
        %4113 = vmatprep.mubr.f32.mxu0 0.0
        %v4114 = vand.u32 %v1064, 4294901760
        %4115 = vmatmul.mubr.f32.gmra.mxu0 %v4114
        %v4116 = vpop.f32.mrf.mxu0
        %v4117 = vadd.f32 %v3666, %v4116
        %v4118 = vpop.f32.mrf.mxu0
        %4119 = vmatprep.mubr.f32.mxu0 0.0
        %v4120 = vand.u32 %v1067, 4294901760
        %4121 = vmatmul.mubr.f32.gmra.mxu0 %v4120
        %v4122 = vpop.f32.mrf.mxu0
        %v4123 = vadd.f32 %v3672, %v4122
        %v4124 = vpop.f32.mrf.mxu0
        %4125 = vmatprep.mubr.f32.mxu0 0.0
        %v4126 = vand.u32 %v1070, 4294901760
        %4127 = vmatmul.mubr.f32.gmra.mxu0 %v4126
        %v4128 = vpop.f32.mrf.mxu0
        %v4129 = vadd.f32 %v3678, %v4128
        %v4130 = vpop.f32.mrf.mxu0
        %4131 = vmatprep.mubr.f32.mxu0 0.0
        %v4132 = vand.u32 %v1073, 4294901760
        %4133 = vmatmul.mubr.f32.gmra.mxu0 %v4132
        %v4134 = vpop.f32.mrf.mxu0
        %v4135 = vadd.f32 %v3684, %v4134
        %v4136 = vpop.f32.mrf.mxu0
        %4137 = vmatprep.mubr.f32.mxu0 0.0
        %v4138 = vand.u32 %v1076, 4294901760
        %4139 = vmatmul.mubr.f32.gmra.mxu0 %v4138
        %v4140 = vpop.f32.mrf.mxu0
        %v4141 = vadd.f32 %v3690, %v4140
        %v4142 = vpop.f32.mrf.mxu0
        %4143 = vmatprep.mubr.f32.mxu0 0.0
        %v4144 = vand.u32 %v1079, 4294901760
        %4145 = vmatmul.mubr.f32.gmra.mxu0 %v4144
        %v4146 = vpop.f32.mrf.mxu0
        %v4147 = vadd.f32 %v3696, %v4146
        %v4148 = vpop.f32.mrf.mxu0
        %4149 = vmatprep.mubr.f32.mxu0 0.0
        %v4150 = vand.u32 %v1082, 4294901760
        %4151 = vmatmul.mubr.f32.gmra.mxu0 %v4150
        %v4152 = vpop.f32.mrf.mxu0
        %v4153 = vadd.f32 %v3702, %v4152
        %v4154 = vpop.f32.mrf.mxu0
        %4155 = vmatprep.mubr.f32.mxu0 0.0
        %v4156 = vand.u32 %v1085, 4294901760
        %4157 = vmatmul.mubr.f32.gmra.mxu0 %v4156
        %v4158 = vpop.f32.mrf.mxu0
        %v4159 = vadd.f32 %v3708, %v4158
        %v4160 = vpop.f32.mrf.mxu0
        %4161 = vmatprep.mubr.f32.mxu0 0.0
        %v4162 = vand.u32 %v1088, 4294901760
        %4163 = vmatmul.mubr.f32.gmra.mxu0 %v4162
        %v4164 = vpop.f32.mrf.mxu0
        %v4165 = vadd.f32 %v3714, %v4164
        %v4166 = vpop.f32.mrf.mxu0
        %4167 = vmatprep.mubr.f32.mxu0 0.0
        %v4168 = vand.u32 %v1091, 4294901760
        %4169 = vmatmul.mubr.f32.gmra.mxu0 %v4168
        %v4170 = vpop.f32.mrf.mxu0
        %v4171 = vadd.f32 %v3720, %v4170
        %v4172 = vpop.f32.mrf.mxu0
        %4173 = vmatprep.mubr.f32.mxu0 0.0
        %v4174 = vand.u32 %v1094, 4294901760
        %4175 = vmatmul.mubr.f32.gmra.mxu0 %v4174
        %v4176 = vpop.f32.mrf.mxu0
        %v4177 = vadd.f32 %v3726, %v4176
        %v4178 = vpop.f32.mrf.mxu0
        %4179 = vmatprep.mubr.f32.mxu0 0.0
        %v4180 = vand.u32 %v1097, 4294901760
        %4181 = vmatmul.mubr.f32.gmra.mxu0 %v4180
        %v4182 = vpop.f32.mrf.mxu0
        %v4183 = vadd.f32 %v3732, %v4182
        %v4184 = vpop.f32.mrf.mxu0
        %4185 = vmatprep.mubr.f32.mxu0 0.0
        %v4186 = vand.u32 %v1100, 4294901760
        %4187 = vmatmul.mubr.f32.gmra.mxu0 %v4186
        %v4188 = vpop.f32.mrf.mxu0
        %v4189 = vadd.f32 %v3738, %v4188
        %v4190 = vpop.f32.mrf.mxu0
        %4191 = vmatprep.mubr.f32.mxu0 0.0
        %v4192 = vand.u32 %v1103, 4294901760
        %4193 = vmatmul.mubr.f32.gmra.mxu0 %v4192
        %v4194 = vpop.f32.mrf.mxu0
        %v4195 = vadd.f32 %v3744, %v4194
        %v4196 = vpop.f32.mrf.mxu0
        %4197 = vmatprep.mubr.f32.mxu0 0.0
        %v4198 = vand.u32 %v1106, 4294901760
        %4199 = vmatmul.mubr.f32.gmra.mxu0 %v4198
        %v4200 = vpop.f32.mrf.mxu0
        %v4201 = vadd.f32 %v3750, %v4200
        %v4202 = vpop.f32.mrf.mxu0
        %4203 = vmatprep.mubr.f32.mxu0 0.0
        %v4204 = vand.u32 %v1109, 4294901760
        %4205 = vmatmul.mubr.f32.gmra.mxu0 %v4204
        %v4206 = vpop.f32.mrf.mxu0
        %v4207 = vadd.f32 %v3756, %v4206
        %v4208 = vpop.f32.mrf.mxu0
        %4209 = vmatprep.mubr.f32.mxu0 0.0
        %v4210 = vand.u32 %v1112, 4294901760
        %4211 = vmatmul.mubr.f32.gmra.mxu0 %v4210
        %v4212 = vpop.f32.mrf.mxu0
        %v4213 = vadd.f32 %v3762, %v4212
        %v4214 = vpop.f32.mrf.mxu0
        %4215 = vmatprep.mubr.f32.mxu0 0.0
        %v4216 = vand.u32 %v1115, 4294901760
        %4217 = vmatmul.mubr.f32.gmra.mxu0 %v4216
        %v4218 = vpop.f32.mrf.mxu0
        %v4219 = vadd.f32 %v3768, %v4218
        %v4220 = vpop.f32.mrf.mxu0
        %4221 = vmatprep.mubr.f32.mxu0 0.0
        %v4222 = vand.u32 %v1118, 4294901760
        %4223 = vmatmul.mubr.f32.gmra.mxu0 %v4222
        %v4224 = vpop.f32.mrf.mxu0
        %v4225 = vadd.f32 %v3774, %v4224
        %v4226 = vpop.f32.mrf.mxu0
        %4227 = vmatprep.mubr.f32.mxu0 0.0
        %v4228 = vand.u32 %v1121, 4294901760
        %4229 = vmatmul.mubr.f32.gmra.mxu0 %v4228
        %v4230 = vpop.f32.mrf.mxu0
        %v4231 = vadd.f32 %v3780, %v4230
        %v4232 = vpop.f32.mrf.mxu0
        %4233 = vmatprep.mubr.f32.mxu0 0.0
        %v4234 = vand.u32 %v1124, 4294901760
        %4235 = vmatmul.mubr.f32.gmra.mxu0 %v4234
        %v4236 = vpop.f32.mrf.mxu0
        %v4237 = vadd.f32 %v3786, %v4236
        %v4238 = vpop.f32.mrf.mxu0
        %4239 = vmatprep.mubr.f32.mxu0 0.0
        %v4240 = vand.u32 %v1127, 4294901760
        %4241 = vmatmul.mubr.f32.gmra.mxu0 %v4240
        %v4242 = vpop.f32.mrf.mxu0
        %v4243 = vadd.f32 %v3792, %v4242
        %v4244 = vpop.f32.mrf.mxu0
        %4245 = vmatprep.mubr.f32.mxu0 0.0
        %v4246 = vand.u32 %v1130, 4294901760
        %4247 = vmatmul.mubr.f32.gmra.mxu0 %v4246
        %v4248 = vpop.f32.mrf.mxu0
        %v4249 = vadd.f32 %v3798, %v4248
        %v4250 = vpop.f32.mrf.mxu0
        %4251 = vmatprep.mubr.f32.mxu0 0.0
        %v4252 = vand.u32 %v1133, 4294901760
        %4253 = vmatmul.mubr.f32.gmra.mxu0 %v4252
        %v4254 = vpop.f32.mrf.mxu0
        %v4255 = vadd.f32 %v3804, %v4254
        %v4256 = vpop.f32.mrf.mxu0
        %4257 = vmatprep.mubr.f32.mxu0 0.0
        %v4258 = vand.u32 %v1136, 4294901760
        %4259 = vmatmul.mubr.f32.gmra.mxu0 %v4258
        %v4260 = vpop.f32.mrf.mxu0
        %v4261 = vadd.f32 %v3810, %v4260
        %v4262 = vpop.f32.mrf.mxu0
        %4263 = vmatprep.mubr.f32.mxu0 0.0
        %v4264 = vand.u32 %v1139, 4294901760
        %4265 = vmatmul.mubr.f32.gmra.mxu0 %v4264
        %v4266 = vpop.f32.mrf.mxu0
        %v4267 = vadd.f32 %v3816, %v4266
        %v4268 = vpop.f32.mrf.mxu0
        %4269 = vmatprep.mubr.f32.mxu0 0.0
        %v4270 = vand.u32 %v1142, 4294901760
        %4271 = vmatmul.mubr.f32.gmra.mxu0 %v4270
        %v4272 = vpop.f32.mrf.mxu0
        %v4273 = vadd.f32 %v3822, %v4272
        %v4274 = vpop.f32.mrf.mxu0
        %4275 = vmatprep.mubr.f32.mxu0 0.0
        %v4276 = vand.u32 %v1145, 4294901760
        %4277 = vmatmul.mubr.f32.gmra.mxu0 %v4276
        %v4278 = vpop.f32.mrf.mxu0
        %v4279 = vadd.f32 %v3828, %v4278
        %v4280 = vpop.f32.mrf.mxu0
        %4281 = vmatprep.mubr.f32.mxu0 0.0
        %v4282 = vand.u32 %v1148, 4294901760
        %4283 = vmatmul.mubr.f32.gmra.mxu0 %v4282
        %v4284 = vpop.f32.mrf.mxu0
        %v4285 = vadd.f32 %v3834, %v4284
        %v4286 = vpop.f32.mrf.mxu0
        %4287 = vmatprep.mubr.f32.mxu0 0.0
        %v4288 = vand.u32 %v1151, 4294901760
        %4289 = vmatmul.mubr.f32.gmra.mxu0 %v4288
        %v4290 = vpop.f32.mrf.mxu0
        %v4291 = vadd.f32 %v3840, %v4290
        %v4292 = vpop.f32.mrf.mxu0
        %4293 = vmatprep.mubr.f32.mxu0 0.0
        %v4294 = vand.u32 %v1154, 4294901760
        %4295 = vmatmul.mubr.f32.gmra.mxu0 %v4294
        %v4296 = vpop.f32.mrf.mxu0
        %v4297 = vadd.f32 %v3846, %v4296
        %v4298 = vpop.f32.mrf.mxu0
        %4299 = vmatprep.mubr.f32.mxu0 0.0
        %v4300 = vand.u32 %v1157, 4294901760
        %4301 = vmatmul.mubr.f32.gmra.mxu0 %v4300
        %v4302 = vpop.f32.mrf.mxu0
        %v4303 = vadd.f32 %v3852, %v4302
        %v4304 = vpop.f32.mrf.mxu0
        %4305 = vmatprep.mubr.f32.mxu0 0.0
        %v4306 = vand.u32 %v1160, 4294901760
        %4307 = vmatmul.mubr.f32.gmra.mxu0 %v4306
        %v4308 = vpop.f32.mrf.mxu0
        %v4309 = vadd.f32 %v3858, %v4308
        %v4310 = vpop.f32.mrf.mxu0
        %4311 = vmatprep.mubr.f32.mxu0 0.0
        %v4312 = vand.u32 %v1163, 4294901760
        %4313 = vmatmul.mubr.f32.gmra.mxu0 %v4312
        %v4314 = vpop.f32.mrf.mxu0
        %v4315 = vadd.f32 %v3864, %v4314
        %v4316 = vpop.f32.mrf.mxu0
        %4317 = vmatprep.mubr.f32.mxu0 0.0
        %v4318 = vand.u32 %v1166, 4294901760
        %4319 = vmatmul.mubr.f32.gmra.mxu0 %v4318
        %v4320 = vpop.f32.mrf.mxu0
        %v4321 = vadd.f32 %v3870, %v4320
        %v4322 = vpop.f32.mrf.mxu0
        %4323 = vmatprep.mubr.f32.mxu0 0.0
        %v4324 = vand.u32 %v1169, 4294901760
        %4325 = vmatmul.mubr.f32.gmra.mxu0 %v4324
        %v4326 = vpop.f32.mrf.mxu0
        %v4327 = vadd.f32 %v3876, %v4326
        %v4328 = vpop.f32.mrf.mxu0
        %4329 = vmatprep.mubr.f32.mxu0 0.0
        %v4330 = vand.u32 %v1172, 4294901760
        %4331 = vmatmul.mubr.f32.gmra.mxu0 %v4330
        %v4332 = vpop.f32.mrf.mxu0
        %v4333 = vadd.f32 %v3882, %v4332
        %v4334 = vpop.f32.mrf.mxu0
        %4335 = vmatprep.mubr.f32.mxu0 0.0
        %v4336 = vand.u32 %v1175, 4294901760
        %4337 = vmatmul.mubr.f32.gmra.mxu0 %v4336
        %v4338 = vpop.f32.mrf.mxu0
        %v4339 = vadd.f32 %v3888, %v4338
        %v4340 = vpop.f32.mrf.mxu0
        %4341 = vmatprep.mubr.f32.mxu0 0.0
        %v4342 = vand.u32 %v1178, 4294901760
        %4343 = vmatmul.mubr.f32.gmra.mxu0 %v4342
        %v4344 = vpop.f32.mrf.mxu0
        %v4345 = vadd.f32 %v3894, %v4344
        %v4346 = vpop.f32.mrf.mxu0
        %4347 = vdwg.mxu0
        %v4348 = vtanh.pop %v3967
        %v4349 = vtanh.pop %v3973
        %v4350 = vtanh.pop %v3979
        %v4351 = vtanh.pop %v3985
        %v4352 = vtanh.pop %v3991
        %v4353 = vtanh.pop %v3997
        %v4354 = vtanh.pop %v4003
        %v4355 = vtanh.pop %v4009
        %v4356 = vtanh.pop %v4015
        %v4357 = vtanh.pop %v4021
        %v4358 = vtanh.pop %v4027
        %v4359 = vtanh.pop %v4033
        %v4360 = vtanh.pop %v4039
        %v4361 = vtanh.pop %v4045
        %v4362 = vtanh.pop %v4051
        %v4363 = vtanh.pop %v4057
        %v4364 = vtanh.pop %v4063
        %v4365 = vtanh.pop %v4069
        %v4366 = vtanh.pop %v4075
        %v4367 = vtanh.pop %v4081
        %v4368 = vtanh.pop %v4087
        %v4369 = vtanh.pop %v4093
        %v4370 = vtanh.pop %v4099
        %v4371 = vtanh.pop %v4105
        %v4372 = vtanh.pop %v4111
        %v4373 = vtanh.pop %v4117
        %v4374 = vtanh.pop %v4123
        %v4375 = vtanh.pop %v4129
        %v4376 = vtanh.pop %v4135
        %v4377 = vtanh.pop %v4141
        %v4378 = vtanh.pop %v4147
        %v4379 = vtanh.pop %v4153
        %v4380 = vtanh.pop %v4159
        %v4381 = vtanh.pop %v4165
        %v4382 = vtanh.pop %v4171
        %v4383 = vtanh.pop %v4177
        %v4384 = vtanh.pop %v4183
        %v4385 = vtanh.pop %v4189
        %v4386 = vtanh.pop %v4195
        %v4387 = vtanh.pop %v4201
        %v4388 = vtanh.pop %v4207
        %v4389 = vtanh.pop %v4213
        %v4390 = vtanh.pop %v4219
        %v4391 = vtanh.pop %v4225
        %v4392 = vtanh.pop %v4231
        %v4393 = vtanh.pop %v4237
        %v4394 = vtanh.pop %v4243
        %v4395 = vtanh.pop %v4249
        %v4396 = vtanh.pop %v4255
        %v4397 = vtanh.pop %v4261
        %v4398 = vtanh.pop %v4267
        %v4399 = vtanh.pop %v4273
        %v4400 = vtanh.pop %v4279
        %v4401 = vtanh.pop %v4285
        %v4402 = vtanh.pop %v4291
        %v4403 = vtanh.pop %v4297
        %v4404 = vtanh.pop %v4303
        %v4405 = vtanh.pop %v4309
        %v4406 = vtanh.pop %v4315
        %v4407 = vtanh.pop %v4321
        %v4408 = vtanh.pop %v4327
        %v4409 = vtanh.pop %v4333
        %v4410 = vtanh.pop %v4339
        %v4411 = vtanh.pop %v4345
        %v4412 = vld [vmem:[%s5] sm:$0x1]
        %s4413 = sld [smem:[#allocation2]]
        %v4414 = vstv %s4413
        %vm4415 = vcmask 64512
        %v4417 = vsel %vm4415, %v4412, 0
        %v4420 = vsel %vm4415, %v4348, 0
        %v4423 = vsel %vm4415, %v4349, 0
        %v4426 = vsel %vm4415, %v4350, 0
        %v4429 = vsel %vm4415, %v4351, 0
        %v4432 = vsel %vm4415, %v4352, 0
        %v4435 = vsel %vm4415, %v4353, 0
        %v4438 = vsel %vm4415, %v4354, 0
        %v4441 = vsel %vm4415, %v4355, 0
        %v4444 = vsel %vm4415, %v4356, 0
        %v4447 = vsel %vm4415, %v4357, 0
        %v4450 = vsel %vm4415, %v4358, 0
        %v4453 = vsel %vm4415, %v4359, 0
        %v4456 = vsel %vm4415, %v4360, 0
        %v4459 = vsel %vm4415, %v4361, 0
        %v4462 = vsel %vm4415, %v4362, 0
        %v4465 = vsel %vm4415, %v4363, 0
        %v4468 = vsel %vm4415, %v4364, 0
        %v4471 = vsel %vm4415, %v4365, 0
        %v4474 = vsel %vm4415, %v4366, 0
        %v4477 = vsel %vm4415, %v4367, 0
        %v4480 = vsel %vm4415, %v4368, 0
        %v4483 = vsel %vm4415, %v4369, 0
        %v4486 = vsel %vm4415, %v4370, 0
        %v4489 = vsel %vm4415, %v4371, 0
        %v4492 = vsel %vm4415, %v4372, 0
        %v4495 = vsel %vm4415, %v4373, 0
        %v4498 = vsel %vm4415, %v4374, 0
        %v4501 = vsel %vm4415, %v4375, 0
        %v4504 = vsel %vm4415, %v4376, 0
        %v4507 = vsel %vm4415, %v4377, 0
        %v4510 = vsel %vm4415, %v4378, 0
        %v4513 = vsel %vm4415, %v4379, 0
        %v4516 = vsel %vm4415, %v4380, 0
        %v4519 = vsel %vm4415, %v4381, 0
        %v4522 = vsel %vm4415, %v4382, 0
        %v4525 = vsel %vm4415, %v4383, 0
        %v4528 = vsel %vm4415, %v4384, 0
        %v4531 = vsel %vm4415, %v4385, 0
        %v4534 = vsel %vm4415, %v4386, 0
        %v4537 = vsel %vm4415, %v4387, 0
        %v4540 = vsel %vm4415, %v4388, 0
        %v4543 = vsel %vm4415, %v4389, 0
        %v4546 = vsel %vm4415, %v4390, 0
        %v4549 = vsel %vm4415, %v4391, 0
        %v4552 = vsel %vm4415, %v4392, 0
        %v4555 = vsel %vm4415, %v4393, 0
        %v4558 = vsel %vm4415, %v4394, 0
        %v4561 = vsel %vm4415, %v4395, 0
        %v4564 = vsel %vm4415, %v4396, 0
        %v4567 = vsel %vm4415, %v4397, 0
        %v4570 = vsel %vm4415, %v4398, 0
        %v4573 = vsel %vm4415, %v4399, 0
        %v4576 = vsel %vm4415, %v4400, 0
        %v4579 = vsel %vm4415, %v4401, 0
        %v4582 = vsel %vm4415, %v4402, 0
        %v4585 = vsel %vm4415, %v4403, 0
        %v4588 = vsel %vm4415, %v4404, 0
        %v4591 = vsel %vm4415, %v4405, 0
        %v4594 = vsel %vm4415, %v4406, 0
        %v4597 = vsel %vm4415, %v4407, 0
        %v4600 = vsel %vm4415, %v4408, 0
        %v4603 = vsel %vm4415, %v4409, 0
        %v4606 = vsel %vm4415, %v4410, 0
        %v4609 = vsel %vm4415, %v4411, 0
        %4611 = vmatprep.subr.mxu0 0.0
        %v4612 = vand.u32 %v4465, 4294901760
        %4613 = vmatpush1.xpose.msra.mxu0 %v4612
        %4614 = vmatprep.subr.mxu0 0.0
        %v4615 = vand.u32 %v4462, 4294901760
        %4616 = vmatpush1.xpose.msra.mxu0 %v4615
        %4617 = vmatprep.subr.mxu0 0.0
        %v4618 = vand.u32 %v4459, 4294901760
        %4619 = vmatpush1.xpose.msra.mxu0 %v4618
        %4620 = vmatprep.subr.mxu0 0.0
        %v4621 = vand.u32 %v4456, 4294901760
        %4622 = vmatpush1.xpose.msra.mxu0 %v4621
        %4623 = vmatprep.subr.mxu0 0.0
        %v4624 = vand.u32 %v4453, 4294901760
        %4625 = vmatpush1.xpose.msra.mxu0 %v4624
        %4626 = vmatprep.subr.mxu0 0.0
        %v4627 = vand.u32 %v4450, 4294901760
        %4628 = vmatpush1.xpose.msra.mxu0 %v4627
        %4629 = vmatprep.subr.mxu0 0.0
        %v4630 = vand.u32 %v4447, 4294901760
        %4631 = vmatpush1.xpose.msra.mxu0 %v4630
        %4632 = vmatprep.subr.mxu0 0.0
        %v4633 = vand.u32 %v4444, 4294901760
        %4634 = vmatpush1.xpose.msra.mxu0 %v4633
        %4635 = vmatprep.subr.mxu0 0.0
        %v4636 = vand.u32 %v4441, 4294901760
        %4637 = vmatpush1.xpose.msra.mxu0 %v4636
        %4638 = vmatprep.subr.mxu0 0.0
        %v4639 = vand.u32 %v4438, 4294901760
        %4640 = vmatpush1.xpose.msra.mxu0 %v4639
        %4641 = vmatprep.subr.mxu0 0.0
        %v4642 = vand.u32 %v4435, 4294901760
        %4643 = vmatpush1.xpose.msra.mxu0 %v4642
        %4644 = vmatprep.subr.mxu0 0.0
        %v4645 = vand.u32 %v4432, 4294901760
        %4646 = vmatpush1.xpose.msra.mxu0 %v4645
        %4647 = vmatprep.subr.mxu0 0.0
        %v4648 = vand.u32 %v4429, 4294901760
        %4649 = vmatpush1.xpose.msra.mxu0 %v4648
        %4650 = vmatprep.subr.mxu0 0.0
        %v4651 = vand.u32 %v4426, 4294901760
        %4652 = vmatpush1.xpose.msra.mxu0 %v4651
        %4653 = vmatprep.subr.mxu0 0.0
        %v4654 = vand.u32 %v4423, 4294901760
        %4655 = vmatpush1.xpose.msra.mxu0 %v4654
        %4656 = vmatprep.subr.mxu0 0.0
        %v4657 = vand.u32 %v4420, 4294901760
        %4658 = vmatpush1.xpose.msra.mxu0 %v4657
        %4659 = vmatprep.subr.mxu0 0.0
        %v4660 = vand.u32 %v4513, 4294901760
        %4661 = vmatpush2.xpose.msra.mxu0 %v4660
        %4662 = vmatprep.subr.mxu0 0.0
        %v4663 = vand.u32 %v4510, 4294901760
        %4664 = vmatpush2.xpose.msra.mxu0 %v4663
        %4665 = vmatprep.subr.mxu0 0.0
        %v4666 = vand.u32 %v4507, 4294901760
        %4667 = vmatpush2.xpose.msra.mxu0 %v4666
        %4668 = vmatprep.subr.mxu0 0.0
        %v4669 = vand.u32 %v4504, 4294901760
        %4670 = vmatpush2.xpose.msra.mxu0 %v4669
        %4671 = vmatprep.subr.mxu0 0.0
        %v4672 = vand.u32 %v4501, 4294901760
        %4673 = vmatpush2.xpose.msra.mxu0 %v4672
        %4674 = vmatprep.subr.mxu0 0.0
        %v4675 = vand.u32 %v4498, 4294901760
        %4676 = vmatpush2.xpose.msra.mxu0 %v4675
        %4677 = vmatprep.subr.mxu0 0.0
        %v4678 = vand.u32 %v4495, 4294901760
        %4679 = vmatpush2.xpose.msra.mxu0 %v4678
        %4680 = vmatprep.subr.mxu0 0.0
        %v4681 = vand.u32 %v4492, 4294901760
        %4682 = vmatpush2.xpose.msra.mxu0 %v4681
        %4683 = vmatprep.subr.mxu0 0.0
        %v4684 = vand.u32 %v4489, 4294901760
        %4685 = vmatpush2.xpose.msra.mxu0 %v4684
        %4686 = vmatprep.subr.mxu0 0.0
        %v4687 = vand.u32 %v4486, 4294901760
        %4688 = vmatpush2.xpose.msra.mxu0 %v4687
        %4689 = vmatprep.subr.mxu0 0.0
        %v4690 = vand.u32 %v4483, 4294901760
        %4691 = vmatpush2.xpose.msra.mxu0 %v4690
        %4692 = vmatprep.subr.mxu0 0.0
        %v4693 = vand.u32 %v4480, 4294901760
        %4694 = vmatpush2.xpose.msra.mxu0 %v4693
        %4695 = vmatprep.subr.mxu0 0.0
        %v4696 = vand.u32 %v4477, 4294901760
        %4697 = vmatpush2.xpose.msra.mxu0 %v4696
        %4698 = vmatprep.subr.mxu0 0.0
        %v4699 = vand.u32 %v4474, 4294901760
        %4700 = vmatpush2.xpose.msra.mxu0 %v4699
        %4701 = vmatprep.subr.mxu0 0.0
        %v4702 = vand.u32 %v4471, 4294901760
        %4703 = vmatpush2.xpose.msra.mxu0 %v4702
        %4704 = vmatprep.subr.mxu0 0.0
        %v4705 = vand.u32 %v4468, 4294901760
        %4706 = vmatpush2.xpose.msra.mxu0 %v4705
        %4707 = vmatprep.mubr.f32.mxu0 0.0
        %v4708 = vand.u32 %v4417, 4294901760
        %v4709 = vsub.f32 %v4417, %v4708
        %v4710 = vand.u32 %v4709, 4294901760
        %v4711 = vsub.f32 %v4709, %v4710
        %v4712 = vand.u32 %v4711, 4294901760
        %4713 = vmatmul.mubr.f32.gmra.mxu0 %v4712
        %v4714 = vpop.f32.mrf.mxu0
        %v4715 = vadd.f32 %v4414, %v4714
        %v4716 = vpop.f32.mrf.mxu0
        %v4717 = vadd.f32 %v4414, %v4716
        %4718 = vdwg.mxu0
        %4719 = vmatprep.subr.mxu0 0.0
        %v4720 = vand.u32 %v4465, 4294901760
        %v4721 = vsub.f32 %v4465, %v4720
        %v4722 = vand.u32 %v4721, 4294901760
        %v4723 = vsub.f32 %v4721, %v4722
        %v4724 = vand.u32 %v4723, 4294901760
        %4725 = vmatpush1.xpose.msra.mxu0 %v4724
        %4726 = vmatprep.subr.mxu0 0.0
        %v4727 = vand.u32 %v4462, 4294901760
        %v4728 = vsub.f32 %v4462, %v4727
        %v4729 = vand.u32 %v4728, 4294901760
        %v4730 = vsub.f32 %v4728, %v4729
        %v4731 = vand.u32 %v4730, 4294901760
        %4732 = vmatpush1.xpose.msra.mxu0 %v4731
        %4733 = vmatprep.subr.mxu0 0.0
        %v4734 = vand.u32 %v4459, 4294901760
        %v4735 = vsub.f32 %v4459, %v4734
        %v4736 = vand.u32 %v4735, 4294901760
        %v4737 = vsub.f32 %v4735, %v4736
        %v4738 = vand.u32 %v4737, 4294901760
        %4739 = vmatpush1.xpose.msra.mxu0 %v4738
        %4740 = vmatprep.subr.mxu0 0.0
        %v4741 = vand.u32 %v4456, 4294901760
        %v4742 = vsub.f32 %v4456, %v4741
        %v4743 = vand.u32 %v4742, 4294901760
        %v4744 = vsub.f32 %v4742, %v4743
        %v4745 = vand.u32 %v4744, 4294901760
        %4746 = vmatpush1.xpose.msra.mxu0 %v4745
        %4747 = vmatprep.subr.mxu0 0.0
        %v4748 = vand.u32 %v4453, 4294901760
        %v4749 = vsub.f32 %v4453, %v4748
        %v4750 = vand.u32 %v4749, 4294901760
        %v4751 = vsub.f32 %v4749, %v4750
        %v4752 = vand.u32 %v4751, 4294901760
        %4753 = vmatpush1.xpose.msra.mxu0 %v4752
        %4754 = vmatprep.subr.mxu0 0.0
        %v4755 = vand.u32 %v4450, 4294901760
        %v4756 = vsub.f32 %v4450, %v4755
        %v4757 = vand.u32 %v4756, 4294901760
        %v4758 = vsub.f32 %v4756, %v4757
        %v4759 = vand.u32 %v4758, 4294901760
        %4760 = vmatpush1.xpose.msra.mxu0 %v4759
        %4761 = vmatprep.subr.mxu0 0.0
        %v4762 = vand.u32 %v4447, 4294901760
        %v4763 = vsub.f32 %v4447, %v4762
        %v4764 = vand.u32 %v4763, 4294901760
        %v4765 = vsub.f32 %v4763, %v4764
        %v4766 = vand.u32 %v4765, 4294901760
        %4767 = vmatpush1.xpose.msra.mxu0 %v4766
        %4768 = vmatprep.subr.mxu0 0.0
        %v4769 = vand.u32 %v4444, 4294901760
        %v4770 = vsub.f32 %v4444, %v4769
        %v4771 = vand.u32 %v4770, 4294901760
        %v4772 = vsub.f32 %v4770, %v4771
        %v4773 = vand.u32 %v4772, 4294901760
        %4774 = vmatpush1.xpose.msra.mxu0 %v4773
        %4775 = vmatprep.subr.mxu0 0.0
        %v4776 = vand.u32 %v4441, 4294901760
        %v4777 = vsub.f32 %v4441, %v4776
        %v4778 = vand.u32 %v4777, 4294901760
        %v4779 = vsub.f32 %v4777, %v4778
        %v4780 = vand.u32 %v4779, 4294901760
        %4781 = vmatpush1.xpose.msra.mxu0 %v4780
        %4782 = vmatprep.subr.mxu0 0.0
        %v4783 = vand.u32 %v4438, 4294901760
        %v4784 = vsub.f32 %v4438, %v4783
        %v4785 = vand.u32 %v4784, 4294901760
        %v4786 = vsub.f32 %v4784, %v4785
        %v4787 = vand.u32 %v4786, 4294901760
        %4788 = vmatpush1.xpose.msra.mxu0 %v4787
        %4789 = vmatprep.subr.mxu0 0.0
        %v4790 = vand.u32 %v4435, 4294901760
        %v4791 = vsub.f32 %v4435, %v4790
        %v4792 = vand.u32 %v4791, 4294901760
        %v4793 = vsub.f32 %v4791, %v4792
        %v4794 = vand.u32 %v4793, 4294901760
        %4795 = vmatpush1.xpose.msra.mxu0 %v4794
        %4796 = vmatprep.subr.mxu0 0.0
        %v4797 = vand.u32 %v4432, 4294901760
        %v4798 = vsub.f32 %v4432, %v4797
        %v4799 = vand.u32 %v4798, 4294901760
        %v4800 = vsub.f32 %v4798, %v4799
        %v4801 = vand.u32 %v4800, 4294901760
        %4802 = vmatpush1.xpose.msra.mxu0 %v4801
        %4803 = vmatprep.subr.mxu0 0.0
        %v4804 = vand.u32 %v4429, 4294901760
        %v4805 = vsub.f32 %v4429, %v4804
        %v4806 = vand.u32 %v4805, 4294901760
        %v4807 = vsub.f32 %v4805, %v4806
        %v4808 = vand.u32 %v4807, 4294901760
        %4809 = vmatpush1.xpose.msra.mxu0 %v4808
        %4810 = vmatprep.subr.mxu0 0.0
        %v4811 = vand.u32 %v4426, 4294901760
        %v4812 = vsub.f32 %v4426, %v4811
        %v4813 = vand.u32 %v4812, 4294901760
        %v4814 = vsub.f32 %v4812, %v4813
        %v4815 = vand.u32 %v4814, 4294901760
        %4816 = vmatpush1.xpose.msra.mxu0 %v4815
        %4817 = vmatprep.subr.mxu0 0.0
        %v4818 = vand.u32 %v4423, 4294901760
        %v4819 = vsub.f32 %v4423, %v4818
        %v4820 = vand.u32 %v4819, 4294901760
        %v4821 = vsub.f32 %v4819, %v4820
        %v4822 = vand.u32 %v4821, 4294901760
        %4823 = vmatpush1.xpose.msra.mxu0 %v4822
        %4824 = vmatprep.subr.mxu0 0.0
        %v4825 = vand.u32 %v4420, 4294901760
        %v4826 = vsub.f32 %v4420, %v4825
        %v4827 = vand.u32 %v4826, 4294901760
        %v4828 = vsub.f32 %v4826, %v4827
        %v4829 = vand.u32 %v4828, 4294901760
        %4830 = vmatpush1.xpose.msra.mxu0 %v4829
        %4831 = vmatprep.subr.mxu0 0.0
        %v4832 = vand.u32 %v4513, 4294901760
        %v4833 = vsub.f32 %v4513, %v4832
        %v4834 = vand.u32 %v4833, 4294901760
        %v4835 = vsub.f32 %v4833, %v4834
        %v4836 = vand.u32 %v4835, 4294901760
        %4837 = vmatpush2.xpose.msra.mxu0 %v4836
        %4838 = vmatprep.subr.mxu0 0.0
        %v4839 = vand.u32 %v4510, 4294901760
        %v4840 = vsub.f32 %v4510, %v4839
        %v4841 = vand.u32 %v4840, 4294901760
        %v4842 = vsub.f32 %v4840, %v4841
        %v4843 = vand.u32 %v4842, 4294901760
        %4844 = vmatpush2.xpose.msra.mxu0 %v4843
        %4845 = vmatprep.subr.mxu0 0.0
        %v4846 = vand.u32 %v4507, 4294901760
        %v4847 = vsub.f32 %v4507, %v4846
        %v4848 = vand.u32 %v4847, 4294901760
        %v4849 = vsub.f32 %v4847, %v4848
        %v4850 = vand.u32 %v4849, 4294901760
        %4851 = vmatpush2.xpose.msra.mxu0 %v4850
        %4852 = vmatprep.subr.mxu0 0.0
        %v4853 = vand.u32 %v4504, 4294901760
        %v4854 = vsub.f32 %v4504, %v4853
        %v4855 = vand.u32 %v4854, 4294901760
        %v4856 = vsub.f32 %v4854, %v4855
        %v4857 = vand.u32 %v4856, 4294901760
        %4858 = vmatpush2.xpose.msra.mxu0 %v4857
        %4859 = vmatprep.subr.mxu0 0.0
        %v4860 = vand.u32 %v4501, 4294901760
        %v4861 = vsub.f32 %v4501, %v4860
        %v4862 = vand.u32 %v4861, 4294901760
        %v4863 = vsub.f32 %v4861, %v4862
        %v4864 = vand.u32 %v4863, 4294901760
        %4865 = vmatpush2.xpose.msra.mxu0 %v4864
        %4866 = vmatprep.subr.mxu0 0.0
        %v4867 = vand.u32 %v4498, 4294901760
        %v4868 = vsub.f32 %v4498, %v4867
        %v4869 = vand.u32 %v4868, 4294901760
        %v4870 = vsub.f32 %v4868, %v4869
        %v4871 = vand.u32 %v4870, 4294901760
        %4872 = vmatpush2.xpose.msra.mxu0 %v4871
        %4873 = vmatprep.subr.mxu0 0.0
        %v4874 = vand.u32 %v4495, 4294901760
        %v4875 = vsub.f32 %v4495, %v4874
        %v4876 = vand.u32 %v4875, 4294901760
        %v4877 = vsub.f32 %v4875, %v4876
        %v4878 = vand.u32 %v4877, 4294901760
        %4879 = vmatpush2.xpose.msra.mxu0 %v4878
        %4880 = vmatprep.subr.mxu0 0.0
        %v4881 = vand.u32 %v4492, 4294901760
        %v4882 = vsub.f32 %v4492, %v4881
        %v4883 = vand.u32 %v4882, 4294901760
        %v4884 = vsub.f32 %v4882, %v4883
        %v4885 = vand.u32 %v4884, 4294901760
        %4886 = vmatpush2.xpose.msra.mxu0 %v4885
        %4887 = vmatprep.subr.mxu0 0.0
        %v4888 = vand.u32 %v4489, 4294901760
        %v4889 = vsub.f32 %v4489, %v4888
        %v4890 = vand.u32 %v4889, 4294901760
        %v4891 = vsub.f32 %v4889, %v4890
        %v4892 = vand.u32 %v4891, 4294901760
        %4893 = vmatpush2.xpose.msra.mxu0 %v4892
        %4894 = vmatprep.subr.mxu0 0.0
        %v4895 = vand.u32 %v4486, 4294901760
        %v4896 = vsub.f32 %v4486, %v4895
        %v4897 = vand.u32 %v4896, 4294901760
        %v4898 = vsub.f32 %v4896, %v4897
        %v4899 = vand.u32 %v4898, 4294901760
        %4900 = vmatpush2.xpose.msra.mxu0 %v4899
        %4901 = vmatprep.subr.mxu0 0.0
        %v4902 = vand.u32 %v4483, 4294901760
        %v4903 = vsub.f32 %v4483, %v4902
        %v4904 = vand.u32 %v4903, 4294901760
        %v4905 = vsub.f32 %v4903, %v4904
        %v4906 = vand.u32 %v4905, 4294901760
        %4907 = vmatpush2.xpose.msra.mxu0 %v4906
        %4908 = vmatprep.subr.mxu0 0.0
        %v4909 = vand.u32 %v4480, 4294901760
        %v4910 = vsub.f32 %v4480, %v4909
        %v4911 = vand.u32 %v4910, 4294901760
        %v4912 = vsub.f32 %v4910, %v4911
        %v4913 = vand.u32 %v4912, 4294901760
        %4914 = vmatpush2.xpose.msra.mxu0 %v4913
        %4915 = vmatprep.subr.mxu0 0.0
        %v4916 = vand.u32 %v4477, 4294901760
        %v4917 = vsub.f32 %v4477, %v4916
        %v4918 = vand.u32 %v4917, 4294901760
        %v4919 = vsub.f32 %v4917, %v4918
        %v4920 = vand.u32 %v4919, 4294901760
        %4921 = vmatpush2.xpose.msra.mxu0 %v4920
        %4922 = vmatprep.subr.mxu0 0.0
        %v4923 = vand.u32 %v4474, 4294901760
        %v4924 = vsub.f32 %v4474, %v4923
        %v4925 = vand.u32 %v4924, 4294901760
        %v4926 = vsub.f32 %v4924, %v4925
        %v4927 = vand.u32 %v4926, 4294901760
        %4928 = vmatpush2.xpose.msra.mxu0 %v4927
        %4929 = vmatprep.subr.mxu0 0.0
        %v4930 = vand.u32 %v4471, 4294901760
        %v4931 = vsub.f32 %v4471, %v4930
        %v4932 = vand.u32 %v4931, 4294901760
        %v4933 = vsub.f32 %v4931, %v4932
        %v4934 = vand.u32 %v4933, 4294901760
        %4935 = vmatpush2.xpose.msra.mxu0 %v4934
        %4936 = vmatprep.subr.mxu0 0.0
        %v4937 = vand.u32 %v4468, 4294901760
        %v4938 = vsub.f32 %v4468, %v4937
        %v4939 = vand.u32 %v4938, 4294901760
        %v4940 = vsub.f32 %v4938, %v4939
        %v4941 = vand.u32 %v4940, 4294901760
        %4942 = vmatpush2.xpose.msra.mxu0 %v4941
        %4943 = vmatprep.mubr.f32.mxu0 0.0
        %v4944 = vand.u32 %v4417, 4294901760
        %4945 = vmatmul.mubr.f32.gmra.mxu0 %v4944
        %v4946 = vpop.f32.mrf.mxu0
        %v4947 = vadd.f32 %v4715, %v4946
        %v4948 = vpop.f32.mrf.mxu0
        %v4949 = vadd.f32 %v4717, %v4948
        %4950 = vdwg.mxu0
        %4951 = vmatprep.subr.mxu0 0.0
        %v4952 = vand.u32 %v4465, 4294901760
        %v4953 = vsub.f32 %v4465, %v4952
        %4954 = vmatpush1.xpose.msra.mxu0 %v4953
        %4955 = vmatprep.subr.mxu0 0.0
        %v4956 = vand.u32 %v4462, 4294901760
        %v4957 = vsub.f32 %v4462, %v4956
        %4958 = vmatpush1.xpose.msra.mxu0 %v4957
        %4959 = vmatprep.subr.mxu0 0.0
        %v4960 = vand.u32 %v4459, 4294901760
        %v4961 = vsub.f32 %v4459, %v4960
        %4962 = vmatpush1.xpose.msra.mxu0 %v4961
        %4963 = vmatprep.subr.mxu0 0.0
        %v4964 = vand.u32 %v4456, 4294901760
        %v4965 = vsub.f32 %v4456, %v4964
        %4966 = vmatpush1.xpose.msra.mxu0 %v4965
        %4967 = vmatprep.subr.mxu0 0.0
        %v4968 = vand.u32 %v4453, 4294901760
        %v4969 = vsub.f32 %v4453, %v4968
        %4970 = vmatpush1.xpose.msra.mxu0 %v4969
        %4971 = vmatprep.subr.mxu0 0.0
        %v4972 = vand.u32 %v4450, 4294901760
        %v4973 = vsub.f32 %v4450, %v4972
        %4974 = vmatpush1.xpose.msra.mxu0 %v4973
        %4975 = vmatprep.subr.mxu0 0.0
        %v4976 = vand.u32 %v4447, 4294901760
        %v4977 = vsub.f32 %v4447, %v4976
        %4978 = vmatpush1.xpose.msra.mxu0 %v4977
        %4979 = vmatprep.subr.mxu0 0.0
        %v4980 = vand.u32 %v4444, 4294901760
        %v4981 = vsub.f32 %v4444, %v4980
        %4982 = vmatpush1.xpose.msra.mxu0 %v4981
        %4983 = vmatprep.subr.mxu0 0.0
        %v4984 = vand.u32 %v4441, 4294901760
        %v4985 = vsub.f32 %v4441, %v4984
        %4986 = vmatpush1.xpose.msra.mxu0 %v4985
        %4987 = vmatprep.subr.mxu0 0.0
        %v4988 = vand.u32 %v4438, 4294901760
        %v4989 = vsub.f32 %v4438, %v4988
        %4990 = vmatpush1.xpose.msra.mxu0 %v4989
        %4991 = vmatprep.subr.mxu0 0.0
        %v4992 = vand.u32 %v4435, 4294901760
        %v4993 = vsub.f32 %v4435, %v4992
        %4994 = vmatpush1.xpose.msra.mxu0 %v4993
        %4995 = vmatprep.subr.mxu0 0.0
        %v4996 = vand.u32 %v4432, 4294901760
        %v4997 = vsub.f32 %v4432, %v4996
        %4998 = vmatpush1.xpose.msra.mxu0 %v4997
        %4999 = vmatprep.subr.mxu0 0.0
        %v5000 = vand.u32 %v4429, 4294901760
        %v5001 = vsub.f32 %v4429, %v5000
        %5002 = vmatpush1.xpose.msra.mxu0 %v5001
        %5003 = vmatprep.subr.mxu0 0.0
        %v5004 = vand.u32 %v4426, 4294901760
        %v5005 = vsub.f32 %v4426, %v5004
        %5006 = vmatpush1.xpose.msra.mxu0 %v5005
        %5007 = vmatprep.subr.mxu0 0.0
        %v5008 = vand.u32 %v4423, 4294901760
        %v5009 = vsub.f32 %v4423, %v5008
        %5010 = vmatpush1.xpose.msra.mxu0 %v5009
        %5011 = vmatprep.subr.mxu0 0.0
        %v5012 = vand.u32 %v4420, 4294901760
        %v5013 = vsub.f32 %v4420, %v5012
        %5014 = vmatpush1.xpose.msra.mxu0 %v5013
        %5015 = vmatprep.subr.mxu0 0.0
        %v5016 = vand.u32 %v4513, 4294901760
        %v5017 = vsub.f32 %v4513, %v5016
        %5018 = vmatpush2.xpose.msra.mxu0 %v5017
        %5019 = vmatprep.subr.mxu0 0.0
        %v5020 = vand.u32 %v4510, 4294901760
        %v5021 = vsub.f32 %v4510, %v5020
        %5022 = vmatpush2.xpose.msra.mxu0 %v5021
        %5023 = vmatprep.subr.mxu0 0.0
        %v5024 = vand.u32 %v4507, 4294901760
        %v5025 = vsub.f32 %v4507, %v5024
        %5026 = vmatpush2.xpose.msra.mxu0 %v5025
        %5027 = vmatprep.subr.mxu0 0.0
        %v5028 = vand.u32 %v4504, 4294901760
        %v5029 = vsub.f32 %v4504, %v5028
        %5030 = vmatpush2.xpose.msra.mxu0 %v5029
        %5031 = vmatprep.subr.mxu0 0.0
        %v5032 = vand.u32 %v4501, 4294901760
        %v5033 = vsub.f32 %v4501, %v5032
        %5034 = vmatpush2.xpose.msra.mxu0 %v5033
        %5035 = vmatprep.subr.mxu0 0.0
        %v5036 = vand.u32 %v4498, 4294901760
        %v5037 = vsub.f32 %v4498, %v5036
        %5038 = vmatpush2.xpose.msra.mxu0 %v5037
        %5039 = vmatprep.subr.mxu0 0.0
        %v5040 = vand.u32 %v4495, 4294901760
        %v5041 = vsub.f32 %v4495, %v5040
        %5042 = vmatpush2.xpose.msra.mxu0 %v5041
        %5043 = vmatprep.subr.mxu0 0.0
        %v5044 = vand.u32 %v4492, 4294901760
        %v5045 = vsub.f32 %v4492, %v5044
        %5046 = vmatpush2.xpose.msra.mxu0 %v5045
        %5047 = vmatprep.subr.mxu0 0.0
        %v5048 = vand.u32 %v4489, 4294901760
        %v5049 = vsub.f32 %v4489, %v5048
        %5050 = vmatpush2.xpose.msra.mxu0 %v5049
        %5051 = vmatprep.subr.mxu0 0.0
        %v5052 = vand.u32 %v4486, 4294901760
        %v5053 = vsub.f32 %v4486, %v5052
        %5054 = vmatpush2.xpose.msra.mxu0 %v5053
        %5055 = vmatprep.subr.mxu0 0.0
        %v5056 = vand.u32 %v4483, 4294901760
        %v5057 = vsub.f32 %v4483, %v5056
        %5058 = vmatpush2.xpose.msra.mxu0 %v5057
        %5059 = vmatprep.subr.mxu0 0.0
        %v5060 = vand.u32 %v4480, 4294901760
        %v5061 = vsub.f32 %v4480, %v5060
        %5062 = vmatpush2.xpose.msra.mxu0 %v5061
        %5063 = vmatprep.subr.mxu0 0.0
        %v5064 = vand.u32 %v4477, 4294901760
        %v5065 = vsub.f32 %v4477, %v5064
        %5066 = vmatpush2.xpose.msra.mxu0 %v5065
        %5067 = vmatprep.subr.mxu0 0.0
        %v5068 = vand.u32 %v4474, 4294901760
        %v5069 = vsub.f32 %v4474, %v5068
        %5070 = vmatpush2.xpose.msra.mxu0 %v5069
        %5071 = vmatprep.subr.mxu0 0.0
        %v5072 = vand.u32 %v4471, 4294901760
        %v5073 = vsub.f32 %v4471, %v5072
        %5074 = vmatpush2.xpose.msra.mxu0 %v5073
        %5075 = vmatprep.subr.mxu0 0.0
        %v5076 = vand.u32 %v4468, 4294901760
        %v5077 = vsub.f32 %v4468, %v5076
        %5078 = vmatpush2.xpose.msra.mxu0 %v5077
        %5079 = vmatprep.mubr.f32.mxu0 0.0
        %v5080 = vand.u32 %v4417, 4294901760
        %v5081 = vsub.f32 %v4417, %v5080
        %5082 = vmatmul.mubr.f32.gmra.mxu0 %v5081
        %v5083 = vpop.f32.mrf.mxu0
        %v5084 = vadd.f32 %v4947, %v5083
        %v5085 = vpop.f32.mrf.mxu0
        %v5086 = vadd.f32 %v4949, %v5085
        %5087 = vdwg.mxu0
        %5088 = vmatprep.subr.mxu0 0.0
        %v5089 = vand.u32 %v4465, 4294901760
        %5090 = vmatpush1.xpose.msra.mxu0 %v5089
        %5091 = vmatprep.subr.mxu0 0.0
        %v5092 = vand.u32 %v4462, 4294901760
        %5093 = vmatpush1.xpose.msra.mxu0 %v5092
        %5094 = vmatprep.subr.mxu0 0.0
        %v5095 = vand.u32 %v4459, 4294901760
        %5096 = vmatpush1.xpose.msra.mxu0 %v5095
        %5097 = vmatprep.subr.mxu0 0.0
        %v5098 = vand.u32 %v4456, 4294901760
        %5099 = vmatpush1.xpose.msra.mxu0 %v5098
        %5100 = vmatprep.subr.mxu0 0.0
        %v5101 = vand.u32 %v4453, 4294901760
        %5102 = vmatpush1.xpose.msra.mxu0 %v5101
        %5103 = vmatprep.subr.mxu0 0.0
        %v5104 = vand.u32 %v4450, 4294901760
        %5105 = vmatpush1.xpose.msra.mxu0 %v5104
        %5106 = vmatprep.subr.mxu0 0.0
        %v5107 = vand.u32 %v4447, 4294901760
        %5108 = vmatpush1.xpose.msra.mxu0 %v5107
        %5109 = vmatprep.subr.mxu0 0.0
        %v5110 = vand.u32 %v4444, 4294901760
        %5111 = vmatpush1.xpose.msra.mxu0 %v5110
        %5112 = vmatprep.subr.mxu0 0.0
        %v5113 = vand.u32 %v4441, 4294901760
        %5114 = vmatpush1.xpose.msra.mxu0 %v5113
        %5115 = vmatprep.subr.mxu0 0.0
        %v5116 = vand.u32 %v4438, 4294901760
        %5117 = vmatpush1.xpose.msra.mxu0 %v5116
        %5118 = vmatprep.subr.mxu0 0.0
        %v5119 = vand.u32 %v4435, 4294901760
        %5120 = vmatpush1.xpose.msra.mxu0 %v5119
        %5121 = vmatprep.subr.mxu0 0.0
        %v5122 = vand.u32 %v4432, 4294901760
        %5123 = vmatpush1.xpose.msra.mxu0 %v5122
        %5124 = vmatprep.subr.mxu0 0.0
        %v5125 = vand.u32 %v4429, 4294901760
        %5126 = vmatpush1.xpose.msra.mxu0 %v5125
        %5127 = vmatprep.subr.mxu0 0.0
        %v5128 = vand.u32 %v4426, 4294901760
        %5129 = vmatpush1.xpose.msra.mxu0 %v5128
        %5130 = vmatprep.subr.mxu0 0.0
        %v5131 = vand.u32 %v4423, 4294901760
        %5132 = vmatpush1.xpose.msra.mxu0 %v5131
        %5133 = vmatprep.subr.mxu0 0.0
        %v5134 = vand.u32 %v4420, 4294901760
        %5135 = vmatpush1.xpose.msra.mxu0 %v5134
        %5136 = vmatprep.subr.mxu0 0.0
        %v5137 = vand.u32 %v4513, 4294901760
        %5138 = vmatpush2.xpose.msra.mxu0 %v5137
        %5139 = vmatprep.subr.mxu0 0.0
        %v5140 = vand.u32 %v4510, 4294901760
        %5141 = vmatpush2.xpose.msra.mxu0 %v5140
        %5142 = vmatprep.subr.mxu0 0.0
        %v5143 = vand.u32 %v4507, 4294901760
        %5144 = vmatpush2.xpose.msra.mxu0 %v5143
        %5145 = vmatprep.subr.mxu0 0.0
        %v5146 = vand.u32 %v4504, 4294901760
        %5147 = vmatpush2.xpose.msra.mxu0 %v5146
        %5148 = vmatprep.subr.mxu0 0.0
        %v5149 = vand.u32 %v4501, 4294901760
        %5150 = vmatpush2.xpose.msra.mxu0 %v5149
        %5151 = vmatprep.subr.mxu0 0.0
        %v5152 = vand.u32 %v4498, 4294901760
        %5153 = vmatpush2.xpose.msra.mxu0 %v5152
        %5154 = vmatprep.subr.mxu0 0.0
        %v5155 = vand.u32 %v4495, 4294901760
        %5156 = vmatpush2.xpose.msra.mxu0 %v5155
        %5157 = vmatprep.subr.mxu0 0.0
        %v5158 = vand.u32 %v4492, 4294901760
        %5159 = vmatpush2.xpose.msra.mxu0 %v5158
        %5160 = vmatprep.subr.mxu0 0.0
        %v5161 = vand.u32 %v4489, 4294901760
        %5162 = vmatpush2.xpose.msra.mxu0 %v5161
        %5163 = vmatprep.subr.mxu0 0.0
        %v5164 = vand.u32 %v4486, 4294901760
        %5165 = vmatpush2.xpose.msra.mxu0 %v5164
        %5166 = vmatprep.subr.mxu0 0.0
        %v5167 = vand.u32 %v4483, 4294901760
        %5168 = vmatpush2.xpose.msra.mxu0 %v5167
        %5169 = vmatprep.subr.mxu0 0.0
        %v5170 = vand.u32 %v4480, 4294901760
        %5171 = vmatpush2.xpose.msra.mxu0 %v5170
        %5172 = vmatprep.subr.mxu0 0.0
        %v5173 = vand.u32 %v4477, 4294901760
        %5174 = vmatpush2.xpose.msra.mxu0 %v5173
        %5175 = vmatprep.subr.mxu0 0.0
        %v5176 = vand.u32 %v4474, 4294901760
        %5177 = vmatpush2.xpose.msra.mxu0 %v5176
        %5178 = vmatprep.subr.mxu0 0.0
        %v5179 = vand.u32 %v4471, 4294901760
        %5180 = vmatpush2.xpose.msra.mxu0 %v5179
        %5181 = vmatprep.subr.mxu0 0.0
        %v5182 = vand.u32 %v4468, 4294901760
        %5183 = vmatpush2.xpose.msra.mxu0 %v5182
        %5184 = vmatprep.mubr.f32.mxu0 0.0
        %v5185 = vand.u32 %v4417, 4294901760
        %v5186 = vsub.f32 %v4417, %v5185
        %v5187 = vand.u32 %v5186, 4294901760
        %5188 = vmatmul.mubr.f32.gmra.mxu0 %v5187
        %v5189 = vpop.f32.mrf.mxu0
        %v5190 = vadd.f32 %v5084, %v5189
        %v5191 = vpop.f32.mrf.mxu0
        %v5192 = vadd.f32 %v5086, %v5191
        %5193 = vdwg.mxu0
        %5194 = vmatprep.subr.mxu0 0.0
        %v5195 = vand.u32 %v4465, 4294901760
        %v5196 = vsub.f32 %v4465, %v5195
        %v5197 = vand.u32 %v5196, 4294901760
        %5198 = vmatpush1.xpose.msra.mxu0 %v5197
        %5199 = vmatprep.subr.mxu0 0.0
        %v5200 = vand.u32 %v4462, 4294901760
        %v5201 = vsub.f32 %v4462, %v5200
        %v5202 = vand.u32 %v5201, 4294901760
        %5203 = vmatpush1.xpose.msra.mxu0 %v5202
        %5204 = vmatprep.subr.mxu0 0.0
        %v5205 = vand.u32 %v4459, 4294901760
        %v5206 = vsub.f32 %v4459, %v5205
        %v5207 = vand.u32 %v5206, 4294901760
        %5208 = vmatpush1.xpose.msra.mxu0 %v5207
        %5209 = vmatprep.subr.mxu0 0.0
        %v5210 = vand.u32 %v4456, 4294901760
        %v5211 = vsub.f32 %v4456, %v5210
        %v5212 = vand.u32 %v5211, 4294901760
        %5213 = vmatpush1.xpose.msra.mxu0 %v5212
        %5214 = vmatprep.subr.mxu0 0.0
        %v5215 = vand.u32 %v4453, 4294901760
        %v5216 = vsub.f32 %v4453, %v5215
        %v5217 = vand.u32 %v5216, 4294901760
        %5218 = vmatpush1.xpose.msra.mxu0 %v5217
        %5219 = vmatprep.subr.mxu0 0.0
        %v5220 = vand.u32 %v4450, 4294901760
        %v5221 = vsub.f32 %v4450, %v5220
        %v5222 = vand.u32 %v5221, 4294901760
        %5223 = vmatpush1.xpose.msra.mxu0 %v5222
        %5224 = vmatprep.subr.mxu0 0.0
        %v5225 = vand.u32 %v4447, 4294901760
        %v5226 = vsub.f32 %v4447, %v5225
        %v5227 = vand.u32 %v5226, 4294901760
        %5228 = vmatpush1.xpose.msra.mxu0 %v5227
        %5229 = vmatprep.subr.mxu0 0.0
        %v5230 = vand.u32 %v4444, 4294901760
        %v5231 = vsub.f32 %v4444, %v5230
        %v5232 = vand.u32 %v5231, 4294901760
        %5233 = vmatpush1.xpose.msra.mxu0 %v5232
        %5234 = vmatprep.subr.mxu0 0.0
        %v5235 = vand.u32 %v4441, 4294901760
        %v5236 = vsub.f32 %v4441, %v5235
        %v5237 = vand.u32 %v5236, 4294901760
        %5238 = vmatpush1.xpose.msra.mxu0 %v5237
        %5239 = vmatprep.subr.mxu0 0.0
        %v5240 = vand.u32 %v4438, 4294901760
        %v5241 = vsub.f32 %v4438, %v5240
        %v5242 = vand.u32 %v5241, 4294901760
        %5243 = vmatpush1.xpose.msra.mxu0 %v5242
        %5244 = vmatprep.subr.mxu0 0.0
        %v5245 = vand.u32 %v4435, 4294901760
        %v5246 = vsub.f32 %v4435, %v5245
        %v5247 = vand.u32 %v5246, 4294901760
        %5248 = vmatpush1.xpose.msra.mxu0 %v5247
        %5249 = vmatprep.subr.mxu0 0.0
        %v5250 = vand.u32 %v4432, 4294901760
        %v5251 = vsub.f32 %v4432, %v5250
        %v5252 = vand.u32 %v5251, 4294901760
        %5253 = vmatpush1.xpose.msra.mxu0 %v5252
        %5254 = vmatprep.subr.mxu0 0.0
        %v5255 = vand.u32 %v4429, 4294901760
        %v5256 = vsub.f32 %v4429, %v5255
        %v5257 = vand.u32 %v5256, 4294901760
        %5258 = vmatpush1.xpose.msra.mxu0 %v5257
        %5259 = vmatprep.subr.mxu0 0.0
        %v5260 = vand.u32 %v4426, 4294901760
        %v5261 = vsub.f32 %v4426, %v5260
        %v5262 = vand.u32 %v5261, 4294901760
        %5263 = vmatpush1.xpose.msra.mxu0 %v5262
        %5264 = vmatprep.subr.mxu0 0.0
        %v5265 = vand.u32 %v4423, 4294901760
        %v5266 = vsub.f32 %v4423, %v5265
        %v5267 = vand.u32 %v5266, 4294901760
        %5268 = vmatpush1.xpose.msra.mxu0 %v5267
        %5269 = vmatprep.subr.mxu0 0.0
        %v5270 = vand.u32 %v4420, 4294901760
        %v5271 = vsub.f32 %v4420, %v5270
        %v5272 = vand.u32 %v5271, 4294901760
        %5273 = vmatpush1.xpose.msra.mxu0 %v5272
        %5274 = vmatprep.subr.mxu0 0.0
        %v5275 = vand.u32 %v4513, 4294901760
        %v5276 = vsub.f32 %v4513, %v5275
        %v5277 = vand.u32 %v5276, 4294901760
        %5278 = vmatpush2.xpose.msra.mxu0 %v5277
        %5279 = vmatprep.subr.mxu0 0.0
        %v5280 = vand.u32 %v4510, 4294901760
        %v5281 = vsub.f32 %v4510, %v5280
        %v5282 = vand.u32 %v5281, 4294901760
        %5283 = vmatpush2.xpose.msra.mxu0 %v5282
        %5284 = vmatprep.subr.mxu0 0.0
        %v5285 = vand.u32 %v4507, 4294901760
        %v5286 = vsub.f32 %v4507, %v5285
        %v5287 = vand.u32 %v5286, 4294901760
        %5288 = vmatpush2.xpose.msra.mxu0 %v5287
        %5289 = vmatprep.subr.mxu0 0.0
        %v5290 = vand.u32 %v4504, 4294901760
        %v5291 = vsub.f32 %v4504, %v5290
        %v5292 = vand.u32 %v5291, 4294901760
        %5293 = vmatpush2.xpose.msra.mxu0 %v5292
        %5294 = vmatprep.subr.mxu0 0.0
        %v5295 = vand.u32 %v4501, 4294901760
        %v5296 = vsub.f32 %v4501, %v5295
        %v5297 = vand.u32 %v5296, 4294901760
        %5298 = vmatpush2.xpose.msra.mxu0 %v5297
        %5299 = vmatprep.subr.mxu0 0.0
        %v5300 = vand.u32 %v4498, 4294901760
        %v5301 = vsub.f32 %v4498, %v5300
        %v5302 = vand.u32 %v5301, 4294901760
        %5303 = vmatpush2.xpose.msra.mxu0 %v5302
        %5304 = vmatprep.subr.mxu0 0.0
        %v5305 = vand.u32 %v4495, 4294901760
        %v5306 = vsub.f32 %v4495, %v5305
        %v5307 = vand.u32 %v5306, 4294901760
        %5308 = vmatpush2.xpose.msra.mxu0 %v5307
        %5309 = vmatprep.subr.mxu0 0.0
        %v5310 = vand.u32 %v4492, 4294901760
        %v5311 = vsub.f32 %v4492, %v5310
        %v5312 = vand.u32 %v5311, 4294901760
        %5313 = vmatpush2.xpose.msra.mxu0 %v5312
        %5314 = vmatprep.subr.mxu0 0.0
        %v5315 = vand.u32 %v4489, 4294901760
        %v5316 = vsub.f32 %v4489, %v5315
        %v5317 = vand.u32 %v5316, 4294901760
        %5318 = vmatpush2.xpose.msra.mxu0 %v5317
        %5319 = vmatprep.subr.mxu0 0.0
        %v5320 = vand.u32 %v4486, 4294901760
        %v5321 = vsub.f32 %v4486, %v5320
        %v5322 = vand.u32 %v5321, 4294901760
        %5323 = vmatpush2.xpose.msra.mxu0 %v5322
        %5324 = vmatprep.subr.mxu0 0.0
        %v5325 = vand.u32 %v4483, 4294901760
        %v5326 = vsub.f32 %v4483, %v5325
        %v5327 = vand.u32 %v5326, 4294901760
        %5328 = vmatpush2.xpose.msra.mxu0 %v5327
        %5329 = vmatprep.subr.mxu0 0.0
        %v5330 = vand.u32 %v4480, 4294901760
        %v5331 = vsub.f32 %v4480, %v5330
        %v5332 = vand.u32 %v5331, 4294901760
        %5333 = vmatpush2.xpose.msra.mxu0 %v5332
        %5334 = vmatprep.subr.mxu0 0.0
        %v5335 = vand.u32 %v4477, 4294901760
        %v5336 = vsub.f32 %v4477, %v5335
        %v5337 = vand.u32 %v5336, 4294901760
        %5338 = vmatpush2.xpose.msra.mxu0 %v5337
        %5339 = vmatprep.subr.mxu0 0.0
        %v5340 = vand.u32 %v4474, 4294901760
        %v5341 = vsub.f32 %v4474, %v5340
        %v5342 = vand.u32 %v5341, 4294901760
        %5343 = vmatpush2.xpose.msra.mxu0 %v5342
        %5344 = vmatprep.subr.mxu0 0.0
        %v5345 = vand.u32 %v4471, 4294901760
        %v5346 = vsub.f32 %v4471, %v5345
        %v5347 = vand.u32 %v5346, 4294901760
        %5348 = vmatpush2.xpose.msra.mxu0 %v5347
        %5349 = vmatprep.subr.mxu0 0.0
        %v5350 = vand.u32 %v4468, 4294901760
        %v5351 = vsub.f32 %v4468, %v5350
        %v5352 = vand.u32 %v5351, 4294901760
        %5353 = vmatpush2.xpose.msra.mxu0 %v5352
        %5354 = vmatprep.mubr.f32.mxu0 0.0
        %v5355 = vand.u32 %v4417, 4294901760
        %5356 = vmatmul.mubr.f32.gmra.mxu0 %v5355
        %v5357 = vpop.f32.mrf.mxu0
        %v5358 = vadd.f32 %v5190, %v5357
        %v5359 = vpop.f32.mrf.mxu0
        %v5360 = vadd.f32 %v5192, %v5359
        %5361 = vdwg.mxu0
        %5362 = vmatprep.subr.mxu0 0.0
        %v5363 = vand.u32 %v4465, 4294901760
        %5364 = vmatpush1.xpose.msra.mxu0 %v5363
        %5365 = vmatprep.subr.mxu0 0.0
        %v5366 = vand.u32 %v4462, 4294901760
        %5367 = vmatpush1.xpose.msra.mxu0 %v5366
        %5368 = vmatprep.subr.mxu0 0.0
        %v5369 = vand.u32 %v4459, 4294901760
        %5370 = vmatpush1.xpose.msra.mxu0 %v5369
        %5371 = vmatprep.subr.mxu0 0.0
        %v5372 = vand.u32 %v4456, 4294901760
        %5373 = vmatpush1.xpose.msra.mxu0 %v5372
        %5374 = vmatprep.subr.mxu0 0.0
        %v5375 = vand.u32 %v4453, 4294901760
        %5376 = vmatpush1.xpose.msra.mxu0 %v5375
        %5377 = vmatprep.subr.mxu0 0.0
        %v5378 = vand.u32 %v4450, 4294901760
        %5379 = vmatpush1.xpose.msra.mxu0 %v5378
        %5380 = vmatprep.subr.mxu0 0.0
        %v5381 = vand.u32 %v4447, 4294901760
        %5382 = vmatpush1.xpose.msra.mxu0 %v5381
        %5383 = vmatprep.subr.mxu0 0.0
        %v5384 = vand.u32 %v4444, 4294901760
        %5385 = vmatpush1.xpose.msra.mxu0 %v5384
        %5386 = vmatprep.subr.mxu0 0.0
        %v5387 = vand.u32 %v4441, 4294901760
        %5388 = vmatpush1.xpose.msra.mxu0 %v5387
        %5389 = vmatprep.subr.mxu0 0.0
        %v5390 = vand.u32 %v4438, 4294901760
        %5391 = vmatpush1.xpose.msra.mxu0 %v5390
        %5392 = vmatprep.subr.mxu0 0.0
        %v5393 = vand.u32 %v4435, 4294901760
        %5394 = vmatpush1.xpose.msra.mxu0 %v5393
        %5395 = vmatprep.subr.mxu0 0.0
        %v5396 = vand.u32 %v4432, 4294901760
        %5397 = vmatpush1.xpose.msra.mxu0 %v5396
        %5398 = vmatprep.subr.mxu0 0.0
        %v5399 = vand.u32 %v4429, 4294901760
        %5400 = vmatpush1.xpose.msra.mxu0 %v5399
        %5401 = vmatprep.subr.mxu0 0.0
        %v5402 = vand.u32 %v4426, 4294901760
        %5403 = vmatpush1.xpose.msra.mxu0 %v5402
        %5404 = vmatprep.subr.mxu0 0.0
        %v5405 = vand.u32 %v4423, 4294901760
        %5406 = vmatpush1.xpose.msra.mxu0 %v5405
        %5407 = vmatprep.subr.mxu0 0.0
        %v5408 = vand.u32 %v4420, 4294901760
        %5409 = vmatpush1.xpose.msra.mxu0 %v5408
        %5410 = vmatprep.subr.mxu0 0.0
        %v5411 = vand.u32 %v4513, 4294901760
        %5412 = vmatpush2.xpose.msra.mxu0 %v5411
        %5413 = vmatprep.subr.mxu0 0.0
        %v5414 = vand.u32 %v4510, 4294901760
        %5415 = vmatpush2.xpose.msra.mxu0 %v5414
        %5416 = vmatprep.subr.mxu0 0.0
        %v5417 = vand.u32 %v4507, 4294901760
        %5418 = vmatpush2.xpose.msra.mxu0 %v5417
        %5419 = vmatprep.subr.mxu0 0.0
        %v5420 = vand.u32 %v4504, 4294901760
        %5421 = vmatpush2.xpose.msra.mxu0 %v5420
        %5422 = vmatprep.subr.mxu0 0.0
        %v5423 = vand.u32 %v4501, 4294901760
        %5424 = vmatpush2.xpose.msra.mxu0 %v5423
        %5425 = vmatprep.subr.mxu0 0.0
        %v5426 = vand.u32 %v4498, 4294901760
        %5427 = vmatpush2.xpose.msra.mxu0 %v5426
        %5428 = vmatprep.subr.mxu0 0.0
        %v5429 = vand.u32 %v4495, 4294901760
        %5430 = vmatpush2.xpose.msra.mxu0 %v5429
        %5431 = vmatprep.subr.mxu0 0.0
        %v5432 = vand.u32 %v4492, 4294901760
        %5433 = vmatpush2.xpose.msra.mxu0 %v5432
        %5434 = vmatprep.subr.mxu0 0.0
        %v5435 = vand.u32 %v4489, 4294901760
        %5436 = vmatpush2.xpose.msra.mxu0 %v5435
        %5437 = vmatprep.subr.mxu0 0.0
        %v5438 = vand.u32 %v4486, 4294901760
        %5439 = vmatpush2.xpose.msra.mxu0 %v5438
        %5440 = vmatprep.subr.mxu0 0.0
        %v5441 = vand.u32 %v4483, 4294901760
        %5442 = vmatpush2.xpose.msra.mxu0 %v5441
        %5443 = vmatprep.subr.mxu0 0.0
        %v5444 = vand.u32 %v4480, 4294901760
        %5445 = vmatpush2.xpose.msra.mxu0 %v5444
        %5446 = vmatprep.subr.mxu0 0.0
        %v5447 = vand.u32 %v4477, 4294901760
        %5448 = vmatpush2.xpose.msra.mxu0 %v5447
        %5449 = vmatprep.subr.mxu0 0.0
        %v5450 = vand.u32 %v4474, 4294901760
        %5451 = vmatpush2.xpose.msra.mxu0 %v5450
        %5452 = vmatprep.subr.mxu0 0.0
        %v5453 = vand.u32 %v4471, 4294901760
        %5454 = vmatpush2.xpose.msra.mxu0 %v5453
        %5455 = vmatprep.subr.mxu0 0.0
        %v5456 = vand.u32 %v4468, 4294901760
        %5457 = vmatpush2.xpose.msra.mxu0 %v5456
        %5458 = vmatprep.mubr.f32.mxu0 0.0
        %v5459 = vand.u32 %v4417, 4294901760
        %5460 = vmatmul.mubr.f32.gmra.mxu0 %v5459
        %v5461 = vpop.f32.mrf.mxu0
        %v5462 = vadd.f32 %v5358, %v5461
        %v5463 = vpop.f32.mrf.mxu0
        %v5464 = vadd.f32 %v5360, %v5463
        %5465 = vdwg.mxu0
        %5466 = vmatprep.subr.mxu0 0.0
        %v5467 = vand.u32 %v4561, 4294901760
        %5468 = vmatpush1.xpose.msra.mxu0 %v5467
        %5469 = vmatprep.subr.mxu0 0.0
        %v5470 = vand.u32 %v4558, 4294901760
        %5471 = vmatpush1.xpose.msra.mxu0 %v5470
        %5472 = vmatprep.subr.mxu0 0.0
        %v5473 = vand.u32 %v4555, 4294901760
        %5474 = vmatpush1.xpose.msra.mxu0 %v5473
        %5475 = vmatprep.subr.mxu0 0.0
        %v5476 = vand.u32 %v4552, 4294901760
        %5477 = vmatpush1.xpose.msra.mxu0 %v5476
        %5478 = vmatprep.subr.mxu0 0.0
        %v5479 = vand.u32 %v4549, 4294901760
        %5480 = vmatpush1.xpose.msra.mxu0 %v5479
        %5481 = vmatprep.subr.mxu0 0.0
        %v5482 = vand.u32 %v4546, 4294901760
        %5483 = vmatpush1.xpose.msra.mxu0 %v5482
        %5484 = vmatprep.subr.mxu0 0.0
        %v5485 = vand.u32 %v4543, 4294901760
        %5486 = vmatpush1.xpose.msra.mxu0 %v5485
        %5487 = vmatprep.subr.mxu0 0.0
        %v5488 = vand.u32 %v4540, 4294901760
        %5489 = vmatpush1.xpose.msra.mxu0 %v5488
        %5490 = vmatprep.subr.mxu0 0.0
        %v5491 = vand.u32 %v4537, 4294901760
        %5492 = vmatpush1.xpose.msra.mxu0 %v5491
        %5493 = vmatprep.subr.mxu0 0.0
        %v5494 = vand.u32 %v4534, 4294901760
        %5495 = vmatpush1.xpose.msra.mxu0 %v5494
        %5496 = vmatprep.subr.mxu0 0.0
        %v5497 = vand.u32 %v4531, 4294901760
        %5498 = vmatpush1.xpose.msra.mxu0 %v5497
        %5499 = vmatprep.subr.mxu0 0.0
        %v5500 = vand.u32 %v4528, 4294901760
        %5501 = vmatpush1.xpose.msra.mxu0 %v5500
        %5502 = vmatprep.subr.mxu0 0.0
        %v5503 = vand.u32 %v4525, 4294901760
        %5504 = vmatpush1.xpose.msra.mxu0 %v5503
        %5505 = vmatprep.subr.mxu0 0.0
        %v5506 = vand.u32 %v4522, 4294901760
        %5507 = vmatpush1.xpose.msra.mxu0 %v5506
        %5508 = vmatprep.subr.mxu0 0.0
        %v5509 = vand.u32 %v4519, 4294901760
        %5510 = vmatpush1.xpose.msra.mxu0 %v5509
        %5511 = vmatprep.subr.mxu0 0.0
        %v5512 = vand.u32 %v4516, 4294901760
        %5513 = vmatpush1.xpose.msra.mxu0 %v5512
        %5514 = vmatprep.subr.mxu0 0.0
        %v5515 = vand.u32 %v4609, 4294901760
        %5516 = vmatpush2.xpose.msra.mxu0 %v5515
        %5517 = vmatprep.subr.mxu0 0.0
        %v5518 = vand.u32 %v4606, 4294901760
        %5519 = vmatpush2.xpose.msra.mxu0 %v5518
        %5520 = vmatprep.subr.mxu0 0.0
        %v5521 = vand.u32 %v4603, 4294901760
        %5522 = vmatpush2.xpose.msra.mxu0 %v5521
        %5523 = vmatprep.subr.mxu0 0.0
        %v5524 = vand.u32 %v4600, 4294901760
        %5525 = vmatpush2.xpose.msra.mxu0 %v5524
        %5526 = vmatprep.subr.mxu0 0.0
        %v5527 = vand.u32 %v4597, 4294901760
        %5528 = vmatpush2.xpose.msra.mxu0 %v5527
        %5529 = vmatprep.subr.mxu0 0.0
        %v5530 = vand.u32 %v4594, 4294901760
        %5531 = vmatpush2.xpose.msra.mxu0 %v5530
        %5532 = vmatprep.subr.mxu0 0.0
        %v5533 = vand.u32 %v4591, 4294901760
        %5534 = vmatpush2.xpose.msra.mxu0 %v5533
        %5535 = vmatprep.subr.mxu0 0.0
        %v5536 = vand.u32 %v4588, 4294901760
        %5537 = vmatpush2.xpose.msra.mxu0 %v5536
        %5538 = vmatprep.subr.mxu0 0.0
        %v5539 = vand.u32 %v4585, 4294901760
        %5540 = vmatpush2.xpose.msra.mxu0 %v5539
        %5541 = vmatprep.subr.mxu0 0.0
        %v5542 = vand.u32 %v4582, 4294901760
        %5543 = vmatpush2.xpose.msra.mxu0 %v5542
        %5544 = vmatprep.subr.mxu0 0.0
        %v5545 = vand.u32 %v4579, 4294901760
        %5546 = vmatpush2.xpose.msra.mxu0 %v5545
        %5547 = vmatprep.subr.mxu0 0.0
        %v5548 = vand.u32 %v4576, 4294901760
        %5549 = vmatpush2.xpose.msra.mxu0 %v5548
        %5550 = vmatprep.subr.mxu0 0.0
        %v5551 = vand.u32 %v4573, 4294901760
        %5552 = vmatpush2.xpose.msra.mxu0 %v5551
        %5553 = vmatprep.subr.mxu0 0.0
        %v5554 = vand.u32 %v4570, 4294901760
        %5555 = vmatpush2.xpose.msra.mxu0 %v5554
        %5556 = vmatprep.subr.mxu0 0.0
        %v5557 = vand.u32 %v4567, 4294901760
        %5558 = vmatpush2.xpose.msra.mxu0 %v5557
        %5559 = vmatprep.subr.mxu0 0.0
        %v5560 = vand.u32 %v4564, 4294901760
        %5561 = vmatpush2.xpose.msra.mxu0 %v5560
        %5562 = vmatprep.mubr.f32.mxu0 0.0
        %v5563 = vand.u32 %v4417, 4294901760
        %v5564 = vsub.f32 %v4417, %v5563
        %v5565 = vand.u32 %v5564, 4294901760
        %v5566 = vsub.f32 %v5564, %v5565
        %v5567 = vand.u32 %v5566, 4294901760
        %5568 = vmatmul.mubr.f32.gmra.mxu0 %v5567
        %v5569 = vpop.f32.mrf.mxu0
        %v5570 = vadd.f32 %v4414, %v5569
        %v5571 = vpop.f32.mrf.mxu0
        %v5572 = vadd.f32 %v4414, %v5571
        %5573 = vdwg.mxu0
        %5574 = vmatprep.subr.mxu0 0.0
        %v5575 = vand.u32 %v4561, 4294901760
        %v5576 = vsub.f32 %v4561, %v5575
        %v5577 = vand.u32 %v5576, 4294901760
        %v5578 = vsub.f32 %v5576, %v5577
        %v5579 = vand.u32 %v5578, 4294901760
        %5580 = vmatpush1.xpose.msra.mxu0 %v5579
        %5581 = vmatprep.subr.mxu0 0.0
        %v5582 = vand.u32 %v4558, 4294901760
        %v5583 = vsub.f32 %v4558, %v5582
        %v5584 = vand.u32 %v5583, 4294901760
        %v5585 = vsub.f32 %v5583, %v5584
        %v5586 = vand.u32 %v5585, 4294901760
        %5587 = vmatpush1.xpose.msra.mxu0 %v5586
        %5588 = vmatprep.subr.mxu0 0.0
        %v5589 = vand.u32 %v4555, 4294901760
        %v5590 = vsub.f32 %v4555, %v5589
        %v5591 = vand.u32 %v5590, 4294901760
        %v5592 = vsub.f32 %v5590, %v5591
        %v5593 = vand.u32 %v5592, 4294901760
        %5594 = vmatpush1.xpose.msra.mxu0 %v5593
        %5595 = vmatprep.subr.mxu0 0.0
        %v5596 = vand.u32 %v4552, 4294901760
        %v5597 = vsub.f32 %v4552, %v5596
        %v5598 = vand.u32 %v5597, 4294901760
        %v5599 = vsub.f32 %v5597, %v5598
        %v5600 = vand.u32 %v5599, 4294901760
        %5601 = vmatpush1.xpose.msra.mxu0 %v5600
        %5602 = vmatprep.subr.mxu0 0.0
        %v5603 = vand.u32 %v4549, 4294901760
        %v5604 = vsub.f32 %v4549, %v5603
        %v5605 = vand.u32 %v5604, 4294901760
        %v5606 = vsub.f32 %v5604, %v5605
        %v5607 = vand.u32 %v5606, 4294901760
        %5608 = vmatpush1.xpose.msra.mxu0 %v5607
        %5609 = vmatprep.subr.mxu0 0.0
        %v5610 = vand.u32 %v4546, 4294901760
        %v5611 = vsub.f32 %v4546, %v5610
        %v5612 = vand.u32 %v5611, 4294901760
        %v5613 = vsub.f32 %v5611, %v5612
        %v5614 = vand.u32 %v5613, 4294901760
        %5615 = vmatpush1.xpose.msra.mxu0 %v5614
        %5616 = vmatprep.subr.mxu0 0.0
        %v5617 = vand.u32 %v4543, 4294901760
        %v5618 = vsub.f32 %v4543, %v5617
        %v5619 = vand.u32 %v5618, 4294901760
        %v5620 = vsub.f32 %v5618, %v5619
        %v5621 = vand.u32 %v5620, 4294901760
        %5622 = vmatpush1.xpose.msra.mxu0 %v5621
        %5623 = vmatprep.subr.mxu0 0.0
        %v5624 = vand.u32 %v4540, 4294901760
        %v5625 = vsub.f32 %v4540, %v5624
        %v5626 = vand.u32 %v5625, 4294901760
        %v5627 = vsub.f32 %v5625, %v5626
        %v5628 = vand.u32 %v5627, 4294901760
        %5629 = vmatpush1.xpose.msra.mxu0 %v5628
        %5630 = vmatprep.subr.mxu0 0.0
        %v5631 = vand.u32 %v4537, 4294901760
        %v5632 = vsub.f32 %v4537, %v5631
        %v5633 = vand.u32 %v5632, 4294901760
        %v5634 = vsub.f32 %v5632, %v5633
        %v5635 = vand.u32 %v5634, 4294901760
        %5636 = vmatpush1.xpose.msra.mxu0 %v5635
        %5637 = vmatprep.subr.mxu0 0.0
        %v5638 = vand.u32 %v4534, 4294901760
        %v5639 = vsub.f32 %v4534, %v5638
        %v5640 = vand.u32 %v5639, 4294901760
        %v5641 = vsub.f32 %v5639, %v5640
        %v5642 = vand.u32 %v5641, 4294901760
        %5643 = vmatpush1.xpose.msra.mxu0 %v5642
        %5644 = vmatprep.subr.mxu0 0.0
        %v5645 = vand.u32 %v4531, 4294901760
        %v5646 = vsub.f32 %v4531, %v5645
        %v5647 = vand.u32 %v5646, 4294901760
        %v5648 = vsub.f32 %v5646, %v5647
        %v5649 = vand.u32 %v5648, 4294901760
        %5650 = vmatpush1.xpose.msra.mxu0 %v5649
        %5651 = vmatprep.subr.mxu0 0.0
        %v5652 = vand.u32 %v4528, 4294901760
        %v5653 = vsub.f32 %v4528, %v5652
        %v5654 = vand.u32 %v5653, 4294901760
        %v5655 = vsub.f32 %v5653, %v5654
        %v5656 = vand.u32 %v5655, 4294901760
        %5657 = vmatpush1.xpose.msra.mxu0 %v5656
        %5658 = vmatprep.subr.mxu0 0.0
        %v5659 = vand.u32 %v4525, 4294901760
        %v5660 = vsub.f32 %v4525, %v5659
        %v5661 = vand.u32 %v5660, 4294901760
        %v5662 = vsub.f32 %v5660, %v5661
        %v5663 = vand.u32 %v5662, 4294901760
        %5664 = vmatpush1.xpose.msra.mxu0 %v5663
        %5665 = vmatprep.subr.mxu0 0.0
        %v5666 = vand.u32 %v4522, 4294901760
        %v5667 = vsub.f32 %v4522, %v5666
        %v5668 = vand.u32 %v5667, 4294901760
        %v5669 = vsub.f32 %v5667, %v5668
        %v5670 = vand.u32 %v5669, 4294901760
        %5671 = vmatpush1.xpose.msra.mxu0 %v5670
        %5672 = vmatprep.subr.mxu0 0.0
        %v5673 = vand.u32 %v4519, 4294901760
        %v5674 = vsub.f32 %v4519, %v5673
        %v5675 = vand.u32 %v5674, 4294901760
        %v5676 = vsub.f32 %v5674, %v5675
        %v5677 = vand.u32 %v5676, 4294901760
        %5678 = vmatpush1.xpose.msra.mxu0 %v5677
        %5679 = vmatprep.subr.mxu0 0.0
        %v5680 = vand.u32 %v4516, 4294901760
        %v5681 = vsub.f32 %v4516, %v5680
        %v5682 = vand.u32 %v5681, 4294901760
        %v5683 = vsub.f32 %v5681, %v5682
        %v5684 = vand.u32 %v5683, 4294901760
        %5685 = vmatpush1.xpose.msra.mxu0 %v5684
        %5686 = vmatprep.subr.mxu0 0.0
        %v5687 = vand.u32 %v4609, 4294901760
        %v5688 = vsub.f32 %v4609, %v5687
        %v5689 = vand.u32 %v5688, 4294901760
        %v5690 = vsub.f32 %v5688, %v5689
        %v5691 = vand.u32 %v5690, 4294901760
        %5692 = vmatpush2.xpose.msra.mxu0 %v5691
        %5693 = vmatprep.subr.mxu0 0.0
        %v5694 = vand.u32 %v4606, 4294901760
        %v5695 = vsub.f32 %v4606, %v5694
        %v5696 = vand.u32 %v5695, 4294901760
        %v5697 = vsub.f32 %v5695, %v5696
        %v5698 = vand.u32 %v5697, 4294901760
        %5699 = vmatpush2.xpose.msra.mxu0 %v5698
        %5700 = vmatprep.subr.mxu0 0.0
        %v5701 = vand.u32 %v4603, 4294901760
        %v5702 = vsub.f32 %v4603, %v5701
        %v5703 = vand.u32 %v5702, 4294901760
        %v5704 = vsub.f32 %v5702, %v5703
        %v5705 = vand.u32 %v5704, 4294901760
        %5706 = vmatpush2.xpose.msra.mxu0 %v5705
        %5707 = vmatprep.subr.mxu0 0.0
        %v5708 = vand.u32 %v4600, 4294901760
        %v5709 = vsub.f32 %v4600, %v5708
        %v5710 = vand.u32 %v5709, 4294901760
        %v5711 = vsub.f32 %v5709, %v5710
        %v5712 = vand.u32 %v5711, 4294901760
        %5713 = vmatpush2.xpose.msra.mxu0 %v5712
        %5714 = vmatprep.subr.mxu0 0.0
        %v5715 = vand.u32 %v4597, 4294901760
        %v5716 = vsub.f32 %v4597, %v5715
        %v5717 = vand.u32 %v5716, 4294901760
        %v5718 = vsub.f32 %v5716, %v5717
        %v5719 = vand.u32 %v5718, 4294901760
        %5720 = vmatpush2.xpose.msra.mxu0 %v5719
        %5721 = vmatprep.subr.mxu0 0.0
        %v5722 = vand.u32 %v4594, 4294901760
        %v5723 = vsub.f32 %v4594, %v5722
        %v5724 = vand.u32 %v5723, 4294901760
        %v5725 = vsub.f32 %v5723, %v5724
        %v5726 = vand.u32 %v5725, 4294901760
        %5727 = vmatpush2.xpose.msra.mxu0 %v5726
        %5728 = vmatprep.subr.mxu0 0.0
        %v5729 = vand.u32 %v4591, 4294901760
        %v5730 = vsub.f32 %v4591, %v5729
        %v5731 = vand.u32 %v5730, 4294901760
        %v5732 = vsub.f32 %v5730, %v5731
        %v5733 = vand.u32 %v5732, 4294901760
        %5734 = vmatpush2.xpose.msra.mxu0 %v5733
        %5735 = vmatprep.subr.mxu0 0.0
        %v5736 = vand.u32 %v4588, 4294901760
        %v5737 = vsub.f32 %v4588, %v5736
        %v5738 = vand.u32 %v5737, 4294901760
        %v5739 = vsub.f32 %v5737, %v5738
        %v5740 = vand.u32 %v5739, 4294901760
        %5741 = vmatpush2.xpose.msra.mxu0 %v5740
        %5742 = vmatprep.subr.mxu0 0.0
        %v5743 = vand.u32 %v4585, 4294901760
        %v5744 = vsub.f32 %v4585, %v5743
        %v5745 = vand.u32 %v5744, 4294901760
        %v5746 = vsub.f32 %v5744, %v5745
        %v5747 = vand.u32 %v5746, 4294901760
        %5748 = vmatpush2.xpose.msra.mxu0 %v5747
        %5749 = vmatprep.subr.mxu0 0.0
        %v5750 = vand.u32 %v4582, 4294901760
        %v5751 = vsub.f32 %v4582, %v5750
        %v5752 = vand.u32 %v5751, 4294901760
        %v5753 = vsub.f32 %v5751, %v5752
        %v5754 = vand.u32 %v5753, 4294901760
        %5755 = vmatpush2.xpose.msra.mxu0 %v5754
        %5756 = vmatprep.subr.mxu0 0.0
        %v5757 = vand.u32 %v4579, 4294901760
        %v5758 = vsub.f32 %v4579, %v5757
        %v5759 = vand.u32 %v5758, 4294901760
        %v5760 = vsub.f32 %v5758, %v5759
        %v5761 = vand.u32 %v5760, 4294901760
        %5762 = vmatpush2.xpose.msra.mxu0 %v5761
        %5763 = vmatprep.subr.mxu0 0.0
        %v5764 = vand.u32 %v4576, 4294901760
        %v5765 = vsub.f32 %v4576, %v5764
        %v5766 = vand.u32 %v5765, 4294901760
        %v5767 = vsub.f32 %v5765, %v5766
        %v5768 = vand.u32 %v5767, 4294901760
        %5769 = vmatpush2.xpose.msra.mxu0 %v5768
        %5770 = vmatprep.subr.mxu0 0.0
        %v5771 = vand.u32 %v4573, 4294901760
        %v5772 = vsub.f32 %v4573, %v5771
        %v5773 = vand.u32 %v5772, 4294901760
        %v5774 = vsub.f32 %v5772, %v5773
        %v5775 = vand.u32 %v5774, 4294901760
        %5776 = vmatpush2.xpose.msra.mxu0 %v5775
        %5777 = vmatprep.subr.mxu0 0.0
        %v5778 = vand.u32 %v4570, 4294901760
        %v5779 = vsub.f32 %v4570, %v5778
        %v5780 = vand.u32 %v5779, 4294901760
        %v5781 = vsub.f32 %v5779, %v5780
        %v5782 = vand.u32 %v5781, 4294901760
        %5783 = vmatpush2.xpose.msra.mxu0 %v5782
        %5784 = vmatprep.subr.mxu0 0.0
        %v5785 = vand.u32 %v4567, 4294901760
        %v5786 = vsub.f32 %v4567, %v5785
        %v5787 = vand.u32 %v5786, 4294901760
        %v5788 = vsub.f32 %v5786, %v5787
        %v5789 = vand.u32 %v5788, 4294901760
        %5790 = vmatpush2.xpose.msra.mxu0 %v5789
        %5791 = vmatprep.subr.mxu0 0.0
        %v5792 = vand.u32 %v4564, 4294901760
        %v5793 = vsub.f32 %v4564, %v5792
        %v5794 = vand.u32 %v5793, 4294901760
        %v5795 = vsub.f32 %v5793, %v5794
        %v5796 = vand.u32 %v5795, 4294901760
        %5797 = vmatpush2.xpose.msra.mxu0 %v5796
        %5798 = vmatprep.mubr.f32.mxu0 0.0
        %v5799 = vand.u32 %v4417, 4294901760
        %5800 = vmatmul.mubr.f32.gmra.mxu0 %v5799
        %v5801 = vpop.f32.mrf.mxu0
        %v5802 = vadd.f32 %v5570, %v5801
        %v5803 = vpop.f32.mrf.mxu0
        %v5804 = vadd.f32 %v5572, %v5803
        %5805 = vdwg.mxu0
        %5806 = vmatprep.subr.mxu0 0.0
        %v5807 = vand.u32 %v4561, 4294901760
        %v5808 = vsub.f32 %v4561, %v5807
        %5809 = vmatpush1.xpose.msra.mxu0 %v5808
        %5810 = vmatprep.subr.mxu0 0.0
        %v5811 = vand.u32 %v4558, 4294901760
        %v5812 = vsub.f32 %v4558, %v5811
        %5813 = vmatpush1.xpose.msra.mxu0 %v5812
        %5814 = vmatprep.subr.mxu0 0.0
        %v5815 = vand.u32 %v4555, 4294901760
        %v5816 = vsub.f32 %v4555, %v5815
        %5817 = vmatpush1.xpose.msra.mxu0 %v5816
        %5818 = vmatprep.subr.mxu0 0.0
        %v5819 = vand.u32 %v4552, 4294901760
        %v5820 = vsub.f32 %v4552, %v5819
        %5821 = vmatpush1.xpose.msra.mxu0 %v5820
        %5822 = vmatprep.subr.mxu0 0.0
        %v5823 = vand.u32 %v4549, 4294901760
        %v5824 = vsub.f32 %v4549, %v5823
        %5825 = vmatpush1.xpose.msra.mxu0 %v5824
        %5826 = vmatprep.subr.mxu0 0.0
        %v5827 = vand.u32 %v4546, 4294901760
        %v5828 = vsub.f32 %v4546, %v5827
        %5829 = vmatpush1.xpose.msra.mxu0 %v5828
        %5830 = vmatprep.subr.mxu0 0.0
        %v5831 = vand.u32 %v4543, 4294901760
        %v5832 = vsub.f32 %v4543, %v5831
        %5833 = vmatpush1.xpose.msra.mxu0 %v5832
        %5834 = vmatprep.subr.mxu0 0.0
        %v5835 = vand.u32 %v4540, 4294901760
        %v5836 = vsub.f32 %v4540, %v5835
        %5837 = vmatpush1.xpose.msra.mxu0 %v5836
        %5838 = vmatprep.subr.mxu0 0.0
        %v5839 = vand.u32 %v4537, 4294901760
        %v5840 = vsub.f32 %v4537, %v5839
        %5841 = vmatpush1.xpose.msra.mxu0 %v5840
        %5842 = vmatprep.subr.mxu0 0.0
        %v5843 = vand.u32 %v4534, 4294901760
        %v5844 = vsub.f32 %v4534, %v5843
        %5845 = vmatpush1.xpose.msra.mxu0 %v5844
        %5846 = vmatprep.subr.mxu0 0.0
        %v5847 = vand.u32 %v4531, 4294901760
        %v5848 = vsub.f32 %v4531, %v5847
        %5849 = vmatpush1.xpose.msra.mxu0 %v5848
        %5850 = vmatprep.subr.mxu0 0.0
        %v5851 = vand.u32 %v4528, 4294901760
        %v5852 = vsub.f32 %v4528, %v5851
        %5853 = vmatpush1.xpose.msra.mxu0 %v5852
        %5854 = vmatprep.subr.mxu0 0.0
        %v5855 = vand.u32 %v4525, 4294901760
        %v5856 = vsub.f32 %v4525, %v5855
        %5857 = vmatpush1.xpose.msra.mxu0 %v5856
        %5858 = vmatprep.subr.mxu0 0.0
        %v5859 = vand.u32 %v4522, 4294901760
        %v5860 = vsub.f32 %v4522, %v5859
        %5861 = vmatpush1.xpose.msra.mxu0 %v5860
        %5862 = vmatprep.subr.mxu0 0.0
        %v5863 = vand.u32 %v4519, 4294901760
        %v5864 = vsub.f32 %v4519, %v5863
        %5865 = vmatpush1.xpose.msra.mxu0 %v5864
        %5866 = vmatprep.subr.mxu0 0.0
        %v5867 = vand.u32 %v4516, 4294901760
        %v5868 = vsub.f32 %v4516, %v5867
        %5869 = vmatpush1.xpose.msra.mxu0 %v5868
        %5870 = vmatprep.subr.mxu0 0.0
        %v5871 = vand.u32 %v4609, 4294901760
        %v5872 = vsub.f32 %v4609, %v5871
        %5873 = vmatpush2.xpose.msra.mxu0 %v5872
        %5874 = vmatprep.subr.mxu0 0.0
        %v5875 = vand.u32 %v4606, 4294901760
        %v5876 = vsub.f32 %v4606, %v5875
        %5877 = vmatpush2.xpose.msra.mxu0 %v5876
        %5878 = vmatprep.subr.mxu0 0.0
        %v5879 = vand.u32 %v4603, 4294901760
        %v5880 = vsub.f32 %v4603, %v5879
        %5881 = vmatpush2.xpose.msra.mxu0 %v5880
        %5882 = vmatprep.subr.mxu0 0.0
        %v5883 = vand.u32 %v4600, 4294901760
        %v5884 = vsub.f32 %v4600, %v5883
        %5885 = vmatpush2.xpose.msra.mxu0 %v5884
        %5886 = vmatprep.subr.mxu0 0.0
        %v5887 = vand.u32 %v4597, 4294901760
        %v5888 = vsub.f32 %v4597, %v5887
        %5889 = vmatpush2.xpose.msra.mxu0 %v5888
        %5890 = vmatprep.subr.mxu0 0.0
        %v5891 = vand.u32 %v4594, 4294901760
        %v5892 = vsub.f32 %v4594, %v5891
        %5893 = vmatpush2.xpose.msra.mxu0 %v5892
        %5894 = vmatprep.subr.mxu0 0.0
        %v5895 = vand.u32 %v4591, 4294901760
        %v5896 = vsub.f32 %v4591, %v5895
        %5897 = vmatpush2.xpose.msra.mxu0 %v5896
        %5898 = vmatprep.subr.mxu0 0.0
        %v5899 = vand.u32 %v4588, 4294901760
        %v5900 = vsub.f32 %v4588, %v5899
        %5901 = vmatpush2.xpose.msra.mxu0 %v5900
        %5902 = vmatprep.subr.mxu0 0.0
        %v5903 = vand.u32 %v4585, 4294901760
        %v5904 = vsub.f32 %v4585, %v5903
        %5905 = vmatpush2.xpose.msra.mxu0 %v5904
        %5906 = vmatprep.subr.mxu0 0.0
        %v5907 = vand.u32 %v4582, 4294901760
        %v5908 = vsub.f32 %v4582, %v5907
        %5909 = vmatpush2.xpose.msra.mxu0 %v5908
        %5910 = vmatprep.subr.mxu0 0.0
        %v5911 = vand.u32 %v4579, 4294901760
        %v5912 = vsub.f32 %v4579, %v5911
        %5913 = vmatpush2.xpose.msra.mxu0 %v5912
        %5914 = vmatprep.subr.mxu0 0.0
        %v5915 = vand.u32 %v4576, 4294901760
        %v5916 = vsub.f32 %v4576, %v5915
        %5917 = vmatpush2.xpose.msra.mxu0 %v5916
        %5918 = vmatprep.subr.mxu0 0.0
        %v5919 = vand.u32 %v4573, 4294901760
        %v5920 = vsub.f32 %v4573, %v5919
        %5921 = vmatpush2.xpose.msra.mxu0 %v5920
        %5922 = vmatprep.subr.mxu0 0.0
        %v5923 = vand.u32 %v4570, 4294901760
        %v5924 = vsub.f32 %v4570, %v5923
        %5925 = vmatpush2.xpose.msra.mxu0 %v5924
        %5926 = vmatprep.subr.mxu0 0.0
        %v5927 = vand.u32 %v4567, 4294901760
        %v5928 = vsub.f32 %v4567, %v5927
        %5929 = vmatpush2.xpose.msra.mxu0 %v5928
        %5930 = vmatprep.subr.mxu0 0.0
        %v5931 = vand.u32 %v4564, 4294901760
        %v5932 = vsub.f32 %v4564, %v5931
        %5933 = vmatpush2.xpose.msra.mxu0 %v5932
        %5934 = vmatprep.mubr.f32.mxu0 0.0
        %v5935 = vand.u32 %v4417, 4294901760
        %v5936 = vsub.f32 %v4417, %v5935
        %5937 = vmatmul.mubr.f32.gmra.mxu0 %v5936
        %v5938 = vpop.f32.mrf.mxu0
        %v5939 = vadd.f32 %v5802, %v5938
        %v5940 = vpop.f32.mrf.mxu0
        %v5941 = vadd.f32 %v5804, %v5940
        %5942 = vdwg.mxu0
        %5943 = vmatprep.subr.mxu0 0.0
        %v5944 = vand.u32 %v4561, 4294901760
        %5945 = vmatpush1.xpose.msra.mxu0 %v5944
        %5946 = vmatprep.subr.mxu0 0.0
        %v5947 = vand.u32 %v4558, 4294901760
        %5948 = vmatpush1.xpose.msra.mxu0 %v5947
        %5949 = vmatprep.subr.mxu0 0.0
        %v5950 = vand.u32 %v4555, 4294901760
        %5951 = vmatpush1.xpose.msra.mxu0 %v5950
        %5952 = vmatprep.subr.mxu0 0.0
        %v5953 = vand.u32 %v4552, 4294901760
        %5954 = vmatpush1.xpose.msra.mxu0 %v5953
        %5955 = vmatprep.subr.mxu0 0.0
        %v5956 = vand.u32 %v4549, 4294901760
        %5957 = vmatpush1.xpose.msra.mxu0 %v5956
        %5958 = vmatprep.subr.mxu0 0.0
        %v5959 = vand.u32 %v4546, 4294901760
        %5960 = vmatpush1.xpose.msra.mxu0 %v5959
        %5961 = vmatprep.subr.mxu0 0.0
        %v5962 = vand.u32 %v4543, 4294901760
        %5963 = vmatpush1.xpose.msra.mxu0 %v5962
        %5964 = vmatprep.subr.mxu0 0.0
        %v5965 = vand.u32 %v4540, 4294901760
        %5966 = vmatpush1.xpose.msra.mxu0 %v5965
        %5967 = vmatprep.subr.mxu0 0.0
        %v5968 = vand.u32 %v4537, 4294901760
        %5969 = vmatpush1.xpose.msra.mxu0 %v5968
        %5970 = vmatprep.subr.mxu0 0.0
        %v5971 = vand.u32 %v4534, 4294901760
        %5972 = vmatpush1.xpose.msra.mxu0 %v5971
        %5973 = vmatprep.subr.mxu0 0.0
        %v5974 = vand.u32 %v4531, 4294901760
        %5975 = vmatpush1.xpose.msra.mxu0 %v5974
        %5976 = vmatprep.subr.mxu0 0.0
        %v5977 = vand.u32 %v4528, 4294901760
        %5978 = vmatpush1.xpose.msra.mxu0 %v5977
        %5979 = vmatprep.subr.mxu0 0.0
        %v5980 = vand.u32 %v4525, 4294901760
        %5981 = vmatpush1.xpose.msra.mxu0 %v5980
        %5982 = vmatprep.subr.mxu0 0.0
        %v5983 = vand.u32 %v4522, 4294901760
        %5984 = vmatpush1.xpose.msra.mxu0 %v5983
        %5985 = vmatprep.subr.mxu0 0.0
        %v5986 = vand.u32 %v4519, 4294901760
        %5987 = vmatpush1.xpose.msra.mxu0 %v5986
        %5988 = vmatprep.subr.mxu0 0.0
        %v5989 = vand.u32 %v4516, 4294901760
        %5990 = vmatpush1.xpose.msra.mxu0 %v5989
        %5991 = vmatprep.subr.mxu0 0.0
        %v5992 = vand.u32 %v4609, 4294901760
        %5993 = vmatpush2.xpose.msra.mxu0 %v5992
        %5994 = vmatprep.subr.mxu0 0.0
        %v5995 = vand.u32 %v4606, 4294901760
        %5996 = vmatpush2.xpose.msra.mxu0 %v5995
        %5997 = vmatprep.subr.mxu0 0.0
        %v5998 = vand.u32 %v4603, 4294901760
        %5999 = vmatpush2.xpose.msra.mxu0 %v5998
        %6000 = vmatprep.subr.mxu0 0.0
        %v6001 = vand.u32 %v4600, 4294901760
        %6002 = vmatpush2.xpose.msra.mxu0 %v6001
        %6003 = vmatprep.subr.mxu0 0.0
        %v6004 = vand.u32 %v4597, 4294901760
        %6005 = vmatpush2.xpose.msra.mxu0 %v6004
        %6006 = vmatprep.subr.mxu0 0.0
        %v6007 = vand.u32 %v4594, 4294901760
        %6008 = vmatpush2.xpose.msra.mxu0 %v6007
        %6009 = vmatprep.subr.mxu0 0.0
        %v6010 = vand.u32 %v4591, 4294901760
        %6011 = vmatpush2.xpose.msra.mxu0 %v6010
        %6012 = vmatprep.subr.mxu0 0.0
        %v6013 = vand.u32 %v4588, 4294901760
        %6014 = vmatpush2.xpose.msra.mxu0 %v6013
        %6015 = vmatprep.subr.mxu0 0.0
        %v6016 = vand.u32 %v4585, 4294901760
        %6017 = vmatpush2.xpose.msra.mxu0 %v6016
        %6018 = vmatprep.subr.mxu0 0.0
        %v6019 = vand.u32 %v4582, 4294901760
        %6020 = vmatpush2.xpose.msra.mxu0 %v6019
        %6021 = vmatprep.subr.mxu0 0.0
        %v6022 = vand.u32 %v4579, 4294901760
        %6023 = vmatpush2.xpose.msra.mxu0 %v6022
        %6024 = vmatprep.subr.mxu0 0.0
        %v6025 = vand.u32 %v4576, 4294901760
        %6026 = vmatpush2.xpose.msra.mxu0 %v6025
        %6027 = vmatprep.subr.mxu0 0.0
        %v6028 = vand.u32 %v4573, 4294901760
        %6029 = vmatpush2.xpose.msra.mxu0 %v6028
        %6030 = vmatprep.subr.mxu0 0.0
        %v6031 = vand.u32 %v4570, 4294901760
        %6032 = vmatpush2.xpose.msra.mxu0 %v6031
        %6033 = vmatprep.subr.mxu0 0.0
        %v6034 = vand.u32 %v4567, 4294901760
        %6035 = vmatpush2.xpose.msra.mxu0 %v6034
        %6036 = vmatprep.subr.mxu0 0.0
        %v6037 = vand.u32 %v4564, 4294901760
        %6038 = vmatpush2.xpose.msra.mxu0 %v6037
        %6039 = vmatprep.mubr.f32.mxu0 0.0
        %v6040 = vand.u32 %v4417, 4294901760
        %v6041 = vsub.f32 %v4417, %v6040
        %v6042 = vand.u32 %v6041, 4294901760
        %6043 = vmatmul.mubr.f32.gmra.mxu0 %v6042
        %v6044 = vpop.f32.mrf.mxu0
        %v6045 = vadd.f32 %v5939, %v6044
        %v6046 = vpop.f32.mrf.mxu0
        %v6047 = vadd.f32 %v5941, %v6046
        %6048 = vdwg.mxu0
        %6049 = vmatprep.subr.mxu0 0.0
        %v6050 = vand.u32 %v4561, 4294901760
        %v6051 = vsub.f32 %v4561, %v6050
        %v6052 = vand.u32 %v6051, 4294901760
        %6053 = vmatpush1.xpose.msra.mxu0 %v6052
        %6054 = vmatprep.subr.mxu0 0.0
        %v6055 = vand.u32 %v4558, 4294901760
        %v6056 = vsub.f32 %v4558, %v6055
        %v6057 = vand.u32 %v6056, 4294901760
        %6058 = vmatpush1.xpose.msra.mxu0 %v6057
        %6059 = vmatprep.subr.mxu0 0.0
        %v6060 = vand.u32 %v4555, 4294901760
        %v6061 = vsub.f32 %v4555, %v6060
        %v6062 = vand.u32 %v6061, 4294901760
        %6063 = vmatpush1.xpose.msra.mxu0 %v6062
        %6064 = vmatprep.subr.mxu0 0.0
        %v6065 = vand.u32 %v4552, 4294901760
        %v6066 = vsub.f32 %v4552, %v6065
        %v6067 = vand.u32 %v6066, 4294901760
        %6068 = vmatpush1.xpose.msra.mxu0 %v6067
        %6069 = vmatprep.subr.mxu0 0.0
        %v6070 = vand.u32 %v4549, 4294901760
        %v6071 = vsub.f32 %v4549, %v6070
        %v6072 = vand.u32 %v6071, 4294901760
        %6073 = vmatpush1.xpose.msra.mxu0 %v6072
        %6074 = vmatprep.subr.mxu0 0.0
        %v6075 = vand.u32 %v4546, 4294901760
        %v6076 = vsub.f32 %v4546, %v6075
        %v6077 = vand.u32 %v6076, 4294901760
        %6078 = vmatpush1.xpose.msra.mxu0 %v6077
        %6079 = vmatprep.subr.mxu0 0.0
        %v6080 = vand.u32 %v4543, 4294901760
        %v6081 = vsub.f32 %v4543, %v6080
        %v6082 = vand.u32 %v6081, 4294901760
        %6083 = vmatpush1.xpose.msra.mxu0 %v6082
        %6084 = vmatprep.subr.mxu0 0.0
        %v6085 = vand.u32 %v4540, 4294901760
        %v6086 = vsub.f32 %v4540, %v6085
        %v6087 = vand.u32 %v6086, 4294901760
        %6088 = vmatpush1.xpose.msra.mxu0 %v6087
        %6089 = vmatprep.subr.mxu0 0.0
        %v6090 = vand.u32 %v4537, 4294901760
        %v6091 = vsub.f32 %v4537, %v6090
        %v6092 = vand.u32 %v6091, 4294901760
        %6093 = vmatpush1.xpose.msra.mxu0 %v6092
        %6094 = vmatprep.subr.mxu0 0.0
        %v6095 = vand.u32 %v4534, 4294901760
        %v6096 = vsub.f32 %v4534, %v6095
        %v6097 = vand.u32 %v6096, 4294901760
        %6098 = vmatpush1.xpose.msra.mxu0 %v6097
        %6099 = vmatprep.subr.mxu0 0.0
        %v6100 = vand.u32 %v4531, 4294901760
        %v6101 = vsub.f32 %v4531, %v6100
        %v6102 = vand.u32 %v6101, 4294901760
        %6103 = vmatpush1.xpose.msra.mxu0 %v6102
        %6104 = vmatprep.subr.mxu0 0.0
        %v6105 = vand.u32 %v4528, 4294901760
        %v6106 = vsub.f32 %v4528, %v6105
        %v6107 = vand.u32 %v6106, 4294901760
        %6108 = vmatpush1.xpose.msra.mxu0 %v6107
        %6109 = vmatprep.subr.mxu0 0.0
        %v6110 = vand.u32 %v4525, 4294901760
        %v6111 = vsub.f32 %v4525, %v6110
        %v6112 = vand.u32 %v6111, 4294901760
        %6113 = vmatpush1.xpose.msra.mxu0 %v6112
        %6114 = vmatprep.subr.mxu0 0.0
        %v6115 = vand.u32 %v4522, 4294901760
        %v6116 = vsub.f32 %v4522, %v6115
        %v6117 = vand.u32 %v6116, 4294901760
        %6118 = vmatpush1.xpose.msra.mxu0 %v6117
        %6119 = vmatprep.subr.mxu0 0.0
        %v6120 = vand.u32 %v4519, 4294901760
        %v6121 = vsub.f32 %v4519, %v6120
        %v6122 = vand.u32 %v6121, 4294901760
        %6123 = vmatpush1.xpose.msra.mxu0 %v6122
        %6124 = vmatprep.subr.mxu0 0.0
        %v6125 = vand.u32 %v4516, 4294901760
        %v6126 = vsub.f32 %v4516, %v6125
        %v6127 = vand.u32 %v6126, 4294901760
        %6128 = vmatpush1.xpose.msra.mxu0 %v6127
        %6129 = vmatprep.subr.mxu0 0.0
        %v6130 = vand.u32 %v4609, 4294901760
        %v6131 = vsub.f32 %v4609, %v6130
        %v6132 = vand.u32 %v6131, 4294901760
        %6133 = vmatpush2.xpose.msra.mxu0 %v6132
        %6134 = vmatprep.subr.mxu0 0.0
        %v6135 = vand.u32 %v4606, 4294901760
        %v6136 = vsub.f32 %v4606, %v6135
        %v6137 = vand.u32 %v6136, 4294901760
        %6138 = vmatpush2.xpose.msra.mxu0 %v6137
        %6139 = vmatprep.subr.mxu0 0.0
        %v6140 = vand.u32 %v4603, 4294901760
        %v6141 = vsub.f32 %v4603, %v6140
        %v6142 = vand.u32 %v6141, 4294901760
        %6143 = vmatpush2.xpose.msra.mxu0 %v6142
        %6144 = vmatprep.subr.mxu0 0.0
        %v6145 = vand.u32 %v4600, 4294901760
        %v6146 = vsub.f32 %v4600, %v6145
        %v6147 = vand.u32 %v6146, 4294901760
        %6148 = vmatpush2.xpose.msra.mxu0 %v6147
        %6149 = vmatprep.subr.mxu0 0.0
        %v6150 = vand.u32 %v4597, 4294901760
        %v6151 = vsub.f32 %v4597, %v6150
        %v6152 = vand.u32 %v6151, 4294901760
        %6153 = vmatpush2.xpose.msra.mxu0 %v6152
        %6154 = vmatprep.subr.mxu0 0.0
        %v6155 = vand.u32 %v4594, 4294901760
        %v6156 = vsub.f32 %v4594, %v6155
        %v6157 = vand.u32 %v6156, 4294901760
        %6158 = vmatpush2.xpose.msra.mxu0 %v6157
        %6159 = vmatprep.subr.mxu0 0.0
        %v6160 = vand.u32 %v4591, 4294901760
        %v6161 = vsub.f32 %v4591, %v6160
        %v6162 = vand.u32 %v6161, 4294901760
        %6163 = vmatpush2.xpose.msra.mxu0 %v6162
        %6164 = vmatprep.subr.mxu0 0.0
        %v6165 = vand.u32 %v4588, 4294901760
        %v6166 = vsub.f32 %v4588, %v6165
        %v6167 = vand.u32 %v6166, 4294901760
        %6168 = vmatpush2.xpose.msra.mxu0 %v6167
        %6169 = vmatprep.subr.mxu0 0.0
        %v6170 = vand.u32 %v4585, 4294901760
        %v6171 = vsub.f32 %v4585, %v6170
        %v6172 = vand.u32 %v6171, 4294901760
        %6173 = vmatpush2.xpose.msra.mxu0 %v6172
        %6174 = vmatprep.subr.mxu0 0.0
        %v6175 = vand.u32 %v4582, 4294901760
        %v6176 = vsub.f32 %v4582, %v6175
        %v6177 = vand.u32 %v6176, 4294901760
        %6178 = vmatpush2.xpose.msra.mxu0 %v6177
        %6179 = vmatprep.subr.mxu0 0.0
        %v6180 = vand.u32 %v4579, 4294901760
        %v6181 = vsub.f32 %v4579, %v6180
        %v6182 = vand.u32 %v6181, 4294901760
        %6183 = vmatpush2.xpose.msra.mxu0 %v6182
        %6184 = vmatprep.subr.mxu0 0.0
        %v6185 = vand.u32 %v4576, 4294901760
        %v6186 = vsub.f32 %v4576, %v6185
        %v6187 = vand.u32 %v6186, 4294901760
        %6188 = vmatpush2.xpose.msra.mxu0 %v6187
        %6189 = vmatprep.subr.mxu0 0.0
        %v6190 = vand.u32 %v4573, 4294901760
        %v6191 = vsub.f32 %v4573, %v6190
        %v6192 = vand.u32 %v6191, 4294901760
        %6193 = vmatpush2.xpose.msra.mxu0 %v6192
        %6194 = vmatprep.subr.mxu0 0.0
        %v6195 = vand.u32 %v4570, 4294901760
        %v6196 = vsub.f32 %v4570, %v6195
        %v6197 = vand.u32 %v6196, 4294901760
        %6198 = vmatpush2.xpose.msra.mxu0 %v6197
        %6199 = vmatprep.subr.mxu0 0.0
        %v6200 = vand.u32 %v4567, 4294901760
        %v6201 = vsub.f32 %v4567, %v6200
        %v6202 = vand.u32 %v6201, 4294901760
        %6203 = vmatpush2.xpose.msra.mxu0 %v6202
        %6204 = vmatprep.subr.mxu0 0.0
        %v6205 = vand.u32 %v4564, 4294901760
        %v6206 = vsub.f32 %v4564, %v6205
        %v6207 = vand.u32 %v6206, 4294901760
        %6208 = vmatpush2.xpose.msra.mxu0 %v6207
        %6209 = vmatprep.mubr.f32.mxu0 0.0
        %v6210 = vand.u32 %v4417, 4294901760
        %6211 = vmatmul.mubr.f32.gmra.mxu0 %v6210
        %v6212 = vpop.f32.mrf.mxu0
        %v6213 = vadd.f32 %v6045, %v6212
        %v6214 = vpop.f32.mrf.mxu0
        %v6215 = vadd.f32 %v6047, %v6214
        %6216 = vdwg.mxu0
        %6217 = vmatprep.subr.mxu0 0.0
        %v6218 = vand.u32 %v4561, 4294901760
        %6219 = vmatpush1.xpose.msra.mxu0 %v6218
        %6220 = vmatprep.subr.mxu0 0.0
        %v6221 = vand.u32 %v4558, 4294901760
        %6222 = vmatpush1.xpose.msra.mxu0 %v6221
        %6223 = vmatprep.subr.mxu0 0.0
        %v6224 = vand.u32 %v4555, 4294901760
        %6225 = vmatpush1.xpose.msra.mxu0 %v6224
        %6226 = vmatprep.subr.mxu0 0.0
        %v6227 = vand.u32 %v4552, 4294901760
        %6228 = vmatpush1.xpose.msra.mxu0 %v6227
        %6229 = vmatprep.subr.mxu0 0.0
        %v6230 = vand.u32 %v4549, 4294901760
        %6231 = vmatpush1.xpose.msra.mxu0 %v6230
        %6232 = vmatprep.subr.mxu0 0.0
        %v6233 = vand.u32 %v4546, 4294901760
        %6234 = vmatpush1.xpose.msra.mxu0 %v6233
        %6235 = vmatprep.subr.mxu0 0.0
        %v6236 = vand.u32 %v4543, 4294901760
        %6237 = vmatpush1.xpose.msra.mxu0 %v6236
        %6238 = vmatprep.subr.mxu0 0.0
        %v6239 = vand.u32 %v4540, 4294901760
        %6240 = vmatpush1.xpose.msra.mxu0 %v6239
        %6241 = vmatprep.subr.mxu0 0.0
        %v6242 = vand.u32 %v4537, 4294901760
        %6243 = vmatpush1.xpose.msra.mxu0 %v6242
        %6244 = vmatprep.subr.mxu0 0.0
        %v6245 = vand.u32 %v4534, 4294901760
        %6246 = vmatpush1.xpose.msra.mxu0 %v6245
        %6247 = vmatprep.subr.mxu0 0.0
        %v6248 = vand.u32 %v4531, 4294901760
        %6249 = vmatpush1.xpose.msra.mxu0 %v6248
        %6250 = vmatprep.subr.mxu0 0.0
        %v6251 = vand.u32 %v4528, 4294901760
        %6252 = vmatpush1.xpose.msra.mxu0 %v6251
        %6253 = vmatprep.subr.mxu0 0.0
        %v6254 = vand.u32 %v4525, 4294901760
        %6255 = vmatpush1.xpose.msra.mxu0 %v6254
        %6256 = vmatprep.subr.mxu0 0.0
        %v6257 = vand.u32 %v4522, 4294901760
        %6258 = vmatpush1.xpose.msra.mxu0 %v6257
        %6259 = vmatprep.subr.mxu0 0.0
        %v6260 = vand.u32 %v4519, 4294901760
        %6261 = vmatpush1.xpose.msra.mxu0 %v6260
        %6262 = vmatprep.subr.mxu0 0.0
        %v6263 = vand.u32 %v4516, 4294901760
        %6264 = vmatpush1.xpose.msra.mxu0 %v6263
        %6265 = vmatprep.subr.mxu0 0.0
        %v6266 = vand.u32 %v4609, 4294901760
        %6267 = vmatpush2.xpose.msra.mxu0 %v6266
        %6268 = vmatprep.subr.mxu0 0.0
        %v6269 = vand.u32 %v4606, 4294901760
        %6270 = vmatpush2.xpose.msra.mxu0 %v6269
        %6271 = vmatprep.subr.mxu0 0.0
        %v6272 = vand.u32 %v4603, 4294901760
        %6273 = vmatpush2.xpose.msra.mxu0 %v6272
        %6274 = vmatprep.subr.mxu0 0.0
        %v6275 = vand.u32 %v4600, 4294901760
        %6276 = vmatpush2.xpose.msra.mxu0 %v6275
        %6277 = vmatprep.subr.mxu0 0.0
        %v6278 = vand.u32 %v4597, 4294901760
        %6279 = vmatpush2.xpose.msra.mxu0 %v6278
        %6280 = vmatprep.subr.mxu0 0.0
        %v6281 = vand.u32 %v4594, 4294901760
        %6282 = vmatpush2.xpose.msra.mxu0 %v6281
        %6283 = vmatprep.subr.mxu0 0.0
        %v6284 = vand.u32 %v4591, 4294901760
        %6285 = vmatpush2.xpose.msra.mxu0 %v6284
        %6286 = vmatprep.subr.mxu0 0.0
        %v6287 = vand.u32 %v4588, 4294901760
        %6288 = vmatpush2.xpose.msra.mxu0 %v6287
        %6289 = vmatprep.subr.mxu0 0.0
        %v6290 = vand.u32 %v4585, 4294901760
        %6291 = vmatpush2.xpose.msra.mxu0 %v6290
        %6292 = vmatprep.subr.mxu0 0.0
        %v6293 = vand.u32 %v4582, 4294901760
        %6294 = vmatpush2.xpose.msra.mxu0 %v6293
        %6295 = vmatprep.subr.mxu0 0.0
        %v6296 = vand.u32 %v4579, 4294901760
        %6297 = vmatpush2.xpose.msra.mxu0 %v6296
        %6298 = vmatprep.subr.mxu0 0.0
        %v6299 = vand.u32 %v4576, 4294901760
        %6300 = vmatpush2.xpose.msra.mxu0 %v6299
        %6301 = vmatprep.subr.mxu0 0.0
        %v6302 = vand.u32 %v4573, 4294901760
        %6303 = vmatpush2.xpose.msra.mxu0 %v6302
        %6304 = vmatprep.subr.mxu0 0.0
        %v6305 = vand.u32 %v4570, 4294901760
        %6306 = vmatpush2.xpose.msra.mxu0 %v6305
        %6307 = vmatprep.subr.mxu0 0.0
        %v6308 = vand.u32 %v4567, 4294901760
        %6309 = vmatpush2.xpose.msra.mxu0 %v6308
        %6310 = vmatprep.subr.mxu0 0.0
        %v6311 = vand.u32 %v4564, 4294901760
        %6312 = vmatpush2.xpose.msra.mxu0 %v6311
        %6313 = vmatprep.mubr.f32.mxu0 0.0
        %v6314 = vand.u32 %v4417, 4294901760
        %6315 = vmatmul.mubr.f32.gmra.mxu0 %v6314
        %v6316 = vpop.f32.mrf.mxu0
        %v6317 = vadd.f32 %v6213, %v6316
        %v6318 = vpop.f32.mrf.mxu0
        %v6319 = vadd.f32 %v6215, %v6318
        %6320 = vdwg.mxu0
        %v6325 = vcombine.low %v5462, %v5464
        %v6326 = vcombine.low %v6317, %v6319
        %v6328 = vunpack.c.l.s4 1966171168
        %v6329 = vunpack.c.0.s8 %v6328
        %v6330 = vlaneseq
        %v6331 = vshrl.u32 %v6330, 7
        %v6332 = vsub.s32 %v6329, %v6331
        %v6333 = vrot.slane %v6325, %v6332
        %v6335 = vunpack.c.l.s4 1966171168
        %v6336 = vunpack.c.0.s8 %v6335
        %v6337 = vlaneseq
        %v6338 = vshrl.u32 %v6337, 7
        %v6339 = vsub.s32 %v6336, %v6338
        %v6340 = vrot.slane %v6326, %v6339
        %v6341 = vcombine.low %v6333, %v6340
        %v6343 = vunpack.c.l.s4 1966171168
        %v6344 = vunpack.c.0.s8 %v6343
        %v6345 = vlaneseq
        %v6346 = vshrl.u32 %v6345, 7
        %v6347 = vsub.s32 %v6344, %v6346
        %v6348 = vrot.slane %v6341, %v6347
        %v6350 = vlaneseq
        %vm6351 = vcmp.ge.s32.totalorder %v6350, 0
        %vm6352 = vcmp.lt.s32.totalorder %v6350, 512
        %vm6353 = vmand %vm6351, %vm6352
        %6354 = vst.msk [vmem:[%s273] sm:$0xf] %vm6353, %v6348
        %s6355 = sand.u32 %s182, 1
        %s6356 = scalar_lea.sflag [#allocation4], %s6355
        %s6357 = sand.u32 %s182, 1
        %s6358 = smul.addr %s6357, 4
        %s6359 = scalar_lea.vmem [#allocation3], %s6358
        // Predicated region
        $region49: #{tpu_custom_call.1} parent=47 // pred_check
          %p6360 = pneg %p192
        $region50: #{tpu_custom_call.1} parent=47 // pred_check_branch
          %6362 = sbr.rel (%p6360) target = $region52
        $region51: #{tpu_custom_call.1} parent=47 // pred_region
          %s6364 = ssub.s32 64, 64
          %6365 = vsyncadd %s6356, %s6364
          %s6366 = smul.addr %s22, 4
          %s6367 = smul.addr %s6366, 16
          %s6368 = scalar_lea.hbm %s7, %s6367
          %s6370 = sshll.u32 %s6359, 4
          %s6371 = int_to_ptr.vmem [resolvable:$true] %s6370
          %6373 = dma.vmem_to_hbm [thread:$0]  %s6371, 64, %s6368, %s6356
        $region52: #{tpu_custom_call.1} parent=47 // pred_fallthru
          _
      $region48: #{tpu_custom_call.1} parent=5 // pred_fallthru
        _
      %p6374 = scmp.le.s32.totalorder 2, %s17
      // Predicated region
      $region53: #{tpu_custom_call.1} parent=5 // pred_check
        %p6375 = pneg %p6374
      $region54: #{tpu_custom_call.1} parent=5 // pred_check_branch
        %6377 = sbr.rel (%p6375) target = $region56
      $region55: #{tpu_custom_call.1} parent=5 // pred_region
        %s6378 = ssub.s32 %s17, 2
        // Predicated region
        $region57: #{tpu_custom_call.1} parent=55 // pred_check
          %p6379 = pneg %p198
        $region58: #{tpu_custom_call.1} parent=55 // pred_check_branch
          %6381 = sbr.rel (%p6379) target = $region60
        $region59: #{tpu_custom_call.1} parent=55 // pred_region
          %s6382 = sand.u32 %s183, 1
          %s6383 = scalar_lea.sflag [#allocation4], %s6382
          %s6384 = sand.u32 %s183, 1
          %s6385 = smul.addr %s6384, 4
          %s6386 = scalar_lea.vmem [#allocation3], %s6385
          %6387 = dma.done %s6383, 64
        $region60: #{tpu_custom_call.1} parent=55 // pred_fallthru
          _
      $region56: #{tpu_custom_call.1} parent=5 // pred_fallthru
        _
    $region6: #{tpu_custom_call.1} parent=1 // loop_footer
      %s21 = sadd.s32 1, %s17
    $region7: #{tpu_custom_call.1} parent=1 // loop_footer_branch
      %16 = sbr.rel target = $region3
    $region8: #{tpu_custom_call.1} parent=1 // loop_exit
      _
    %6388 = vsyncpa [#allocation4], 1
    %s6389 = scalar_lea.sflag [#allocation4], 1
    %6390 = vsyncpa %s6389, 1

</llo_original>
